<compile_context>
chip_gen: v5e
topology: v5e:2x2
jax: 0.10.0
libtpu: 0.0.40
codegen_flags: <defaults>
</compile_context>

<pallas_src>
import functools
import math

import jax
import jax.numpy as jnp
from jax.experimental import pallas as pl
from jax.experimental.pallas import tpu as pltpu

_VMEM_LIMIT_BYTES = 48 * 1024 * 1024      # below v7x 64 MiB physical, above all scoped defaults


# ----------------------------------------------------------------------------
# helpers
# ----------------------------------------------------------------------------

def _round_up(x, m):
    return ((x + m - 1) // m) * m


def _pick_tile(dim, align, candidates):
    """Largest candidate tile that divides round_up(dim, align)."""
    padded = _round_up(dim, align)
    for c in candidates:
        if c <= padded and padded % c == 0:
            return c, padded
    return padded, padded


def _pad2d(a, rows, cols):
    r, c = a.shape
    if (r, c) == (rows, cols):
        return a
    return jnp.pad(a, ((0, rows - r), (0, cols - c)))


def _apply_act(y, activation):
    if activation == "relu":
        return jnp.maximum(y, 0.0)
    if activation == "gelu":
        # TODO(synk): tanh-approximate GELU (EUP-friendly); HF BERT uses exact erf GELU.
        return 0.5 * y * (1.0 + jnp.tanh(0.7978845608028654 * (y + 0.044715 * y * y * y)))
    return y


# ----------------------------------------------------------------------------
# Tiled linear:  y = act(x @ w + b)     (bf16 operands, f32 accumulation, bf16 out)
# ----------------------------------------------------------------------------

def _linear_kernel_fullk(x_ref, w_ref, b_ref, o_ref, *, activation):
    y = jnp.dot(x_ref[...], w_ref[...], preferred_element_type=jnp.float32) + b_ref[...]
    o_ref[...] = _apply_act(y, activation).astype(o_ref.dtype)


def _linear_kernel_kred(x_ref, w_ref, b_ref, o_ref, acc_ref, *, activation):
    @pl.when(pl.program_id(2) == 0)
    def _init():
        acc_ref[...] = jnp.zeros_like(acc_ref)

    acc_ref[...] += jnp.dot(x_ref[...], w_ref[...], preferred_element_type=jnp.float32)

    @pl.when(pl.program_id(2) == pl.num_programs(2) - 1)
    def _finalize():
        y = acc_ref[...] + b_ref[...]
        o_ref[...] = _apply_act(y, activation).astype(o_ref.dtype)


_TM_CAND = (512, 256, 128, 64, 32, 16, 8)
_TN_CAND = (768, 512, 384, 256, 128)
_TK_CAND = (4096, 3072, 2304, 2048, 1536, 1024, 768, 512, 384, 256, 128)  # full-K preferred


def pallas_linear(x, w, b, activation="none", out_dtype=jnp.bfloat16):
    """x: (M, K), w: (K, N), b: (N,)."""
    M, K = x.shape
    K2, N = w.shape
    assert K == K2
    tm, Mp = _pick_tile(M, 8, _TM_CAND)
    tn, Np = _pick_tile(N, 128, _TN_CAND)
    tk, Kp = _pick_tile(K, 128, _TK_CAND)

    xp = _pad2d(x.astype(jnp.bfloat16), Mp, Kp)      # zero-padded K contributes 0
    wp = _pad2d(w.astype(jnp.bfloat16), Kp, Np)
    bp = _pad2d(b.reshape(1, N).astype(jnp.float32), 1, Np)

    if Kp // tk == 1:
        # full-K path: no reduction axis, no pl.when, no accumulator scratch
        out = pl.pallas_call(
            functools.partial(_linear_kernel_fullk, activation=activation),
            out_shape=jax.ShapeDtypeStruct((Mp, Np), out_dtype),
            grid=(Mp // tm, Np // tn),
            in_specs=[pl.BlockSpec((tm, Kp), lambda i, j: (i, 0)),
                      pl.BlockSpec((Kp, tn), lambda i, j: (0, j)),
                      pl.BlockSpec((1, tn), lambda i, j: (0, j))],
            out_specs=pl.BlockSpec((tm, tn), lambda i, j: (i, j)),
            compiler_params=pltpu.CompilerParams(
                dimension_semantics=("parallel", "parallel"),
                vmem_limit_bytes=_VMEM_LIMIT_BYTES),
        )(xp, wp, bp)
    else:
        out = pl.pallas_call(
            functools.partial(_linear_kernel_kred, activation=activation),
            out_shape=jax.ShapeDtypeStruct((Mp, Np), out_dtype),
            grid=(Mp // tm, Np // tn, Kp // tk),
            in_specs=[pl.BlockSpec((tm, tk), lambda i, j, k: (i, k)),
                      pl.BlockSpec((tk, tn), lambda i, j, k: (k, j)),
                      pl.BlockSpec((1, tn), lambda i, j, k: (0, j))],
            out_specs=pl.BlockSpec((tm, tn), lambda i, j, k: (i, j)),
            scratch_shapes=[pltpu.VMEM((tm, tn), jnp.float32)],
            compiler_params=pltpu.CompilerParams(
                dimension_semantics=("parallel", "parallel", "arbitrary"),
                vmem_limit_bytes=_VMEM_LIMIT_BYTES),
        )(xp, wp, bp)
    if (Mp, Np) != (M, N):
        out = out[:M, :N]
    return out


# ----------------------------------------------------------------------------
# Fused linear + residual add + LayerNorm:  LN(res + x @ w + b)
# (single K block and single N block per grid step; LN stats masked to the real E)
# ----------------------------------------------------------------------------

def _linear_res_ln_kernel(x_ref, w_ref, b_ref, r_ref, g_ref, be_ref, o_ref, *, n_valid, eps):
    y = jnp.dot(x_ref[...], w_ref[...], preferred_element_type=jnp.float32)
    y = y + b_ref[...] + r_ref[...].astype(jnp.float32)
    n_pad = y.shape[-1]
    if n_valid == n_pad:
        mu = jnp.mean(y, axis=-1, keepdims=True)
        d = y - mu
        var = jnp.mean(d * d, axis=-1, keepdims=True)
    else:  # stats over the first n_valid (real) lanes only; padded lanes are zero anyway
        mask = jax.lax.broadcasted_iota(jnp.int32, y.shape, 1) < n_valid
        inv_n = 1.0 / n_valid
        mu = jnp.sum(jnp.where(mask, y, 0.0), axis=-1, keepdims=True) * inv_n
        d = jnp.where(mask, y - mu, 0.0)
        var = jnp.sum(d * d, axis=-1, keepdims=True) * inv_n
    o_ref[...] = ((y - mu) * jax.lax.rsqrt(var + eps) * g_ref[...] + be_ref[...]
                  ).astype(o_ref.dtype)


def pallas_linear_res_ln(x, w, b, res, gamma, beta, eps=1e-12, out_dtype=jnp.bfloat16):
    """LayerNorm(res + x @ w + b) in one kernel (saves an HBM round trip per encoder layer)."""
    M, K = x.shape
    K2, N = w.shape
    assert K == K2 and res.shape == (M, N)
    Kp, Np = _round_up(K, 128), _round_up(N, 128)
    if Kp > 8192 or Np > 2048:
        # TODO(synk): K/N-tiled variant if a config ever needs it; fall back to unfused.
        y = pallas_linear(x, w, b)
        return pallas_add_layernorm(res, y, gamma, beta, eps)
    tm, Mp = _pick_tile(M, 8, (256, 128, 64, 32, 16, 8))

    xp = _pad2d(x.astype(jnp.bfloat16), Mp, Kp)
    wp = _pad2d(w.astype(jnp.bfloat16), Kp, Np)
    bp = _pad2d(b.reshape(1, N).astype(jnp.float32), 1, Np)
    rp = _pad2d(res.astype(jnp.bfloat16), Mp, Np)
    gp = _pad2d(gamma.reshape(1, N).astype(jnp.float32), 1, Np)
    betap = _pad2d(beta.reshape(1, N).astype(jnp.float32), 1, Np)

    out = pl.pallas_call(
        functools.partial(_linear_res_ln_kernel, n_valid=N, eps=eps),
        out_shape=jax.ShapeDtypeStruct((Mp, Np), out_dtype),
        grid=(Mp // tm,),
        in_specs=[pl.BlockSpec((tm, Kp), lambda i: (i, 0)),
                  pl.BlockSpec((Kp, Np), lambda i: (0, 0)),
                  pl.BlockSpec((1, Np), lambda i: (0, 0)),
                  pl.BlockSpec((tm, Np), lambda i: (i, 0)),
                  pl.BlockSpec((1, Np), lambda i: (0, 0)),
                  pl.BlockSpec((1, Np), lambda i: (0, 0))],
        out_specs=pl.BlockSpec((tm, Np), lambda i: (i, 0)),
        compiler_params=pltpu.CompilerParams(
            dimension_semantics=("parallel",),
            vmem_limit_bytes=_VMEM_LIMIT_BYTES),
    )(xp, wp, bp, rp, gp, betap)
    if (Mp, Np) != (M, N):
        out = out[:M, :N]
    return out


# ----------------------------------------------------------------------------
# Multi-head self-attention core (fused QKV input, in-kernel head split/merge)
# ----------------------------------------------------------------------------

def _mha_kernel(qkv_ref, o_ref, *, num_heads, head_dim):
    E = num_heads * head_dim
    outs = []
    # TODO(synk): pack head pairs into 128-lane slabs to fill the 256-wide MXU on v6e/v7x.
    for h in range(num_heads):                              # static unroll over heads
        lo = h * head_dim
        q = qkv_ref[0, :, lo:lo + head_dim]                 # (S, D) bf16, scale pre-folded
        k = qkv_ref[0, :, E + lo:E + lo + head_dim]
        v = qkv_ref[0, :, 2 * E + lo:2 * E + lo + head_dim]
        s = jax.lax.dot_general(q, k, (((1,), (1,)), ((), ())),
                                preferred_element_type=jnp.float32)
        s = s - jnp.max(s, axis=-1, keepdims=True)          # softmax stats in f32
        p = jnp.exp(s)
        l = jnp.sum(p, axis=-1, keepdims=True)
        o = jnp.dot(p.astype(qkv_ref.dtype), v, preferred_element_type=jnp.float32)
        outs.append(o * pl.reciprocal(l, approx=True))
    # single lane-dense store of all heads (instead of num_heads masked 64-lane stores)
    o_ref[0] = jnp.concatenate(outs, axis=-1).astype(o_ref.dtype)


def pallas_mha(qkv, num_heads):
    """qkv: (B, S, 3E) packed [q|k|v] with softmax scale pre-folded into q; returns (B, S, E)."""
    B, S, E3 = qkv.shape
    E = E3 // 3
    D = E // num_heads
    # TODO(synk): full (S,3E) block + SxS scores per head in VMEM; flash-style KV tiling needed
    #             for long sequences (esp. v7x 64 MiB VMEM).
    return pl.pallas_call(
        functools.partial(_mha_kernel, num_heads=num_heads, head_dim=D),
        out_shape=jax.ShapeDtypeStruct((B, S, E), jnp.bfloat16),
        grid=(B,),
        in_specs=[pl.BlockSpec((1, S, E3), lambda b: (b, 0, 0))],
        out_specs=pl.BlockSpec((1, S, E), lambda b: (b, 0, 0)),
        compiler_params=pltpu.CompilerParams(
            dimension_semantics=("parallel",),
            vmem_limit_bytes=_VMEM_LIMIT_BYTES),
    )(qkv.astype(jnp.bfloat16))


def _fold_q_scale(w_qkv, b_qkv, embed_dim, num_heads):
    """Fold 1/sqrt(head_dim) into the Q columns of the fused QKV projection (free at runtime)."""
    scale = 1.0 / math.sqrt(embed_dim // num_heads)
    return (w_qkv.at[:, :embed_dim].multiply(scale),
            b_qkv.at[:embed_dim].multiply(scale))


# ----------------------------------------------------------------------------
# LayerNorm (and residual-add fused LayerNorm, used only as a fallback)
# ----------------------------------------------------------------------------

def _ln_kernel(x_ref, g_ref, b_ref, o_ref, *, eps):
    x = x_ref[...].astype(jnp.float32)
    mu = jnp.mean(x, axis=-1, keepdims=True)
    var = jnp.mean(jnp.square(x - mu), axis=-1, keepdims=True)
    o_ref[...] = ((x - mu) * jax.lax.rsqrt(var + eps) * g_ref[...] + b_ref[...]
                  ).astype(o_ref.dtype)


def _add_ln_kernel(x_ref, y_ref, g_ref, b_ref, o_ref, *, eps):
    x = x_ref[...].astype(jnp.float32) + y_ref[...].astype(jnp.float32)
    mu = jnp.mean(x, axis=-1, keepdims=True)
    var = jnp.mean(jnp.square(x - mu), axis=-1, keepdims=True)
    o_ref[...] = ((x - mu) * jax.lax.rsqrt(var + eps) * g_ref[...] + b_ref[...]
                  ).astype(o_ref.dtype)


def _ln_core(kernel_fn, xs, gamma, beta, eps):
    M, E = xs[0].shape
    tm, Mp = _pick_tile(M, 8, (512, 256, 128, 64, 32, 16, 8))
    if Mp != M:
        xs = [jnp.pad(a, ((0, Mp - M), (0, 0))) for a in xs]
    n = len(xs)
    out = pl.pallas_call(
        functools.partial(kernel_fn, eps=eps),
        out_shape=jax.ShapeDtypeStruct((Mp, E), jnp.bfloat16),
        grid=(Mp // tm,),
        in_specs=[pl.BlockSpec((tm, E), lambda i: (i, 0)) for _ in range(n)]
                 + [pl.BlockSpec((1, E), lambda i: (0, 0)),
                    pl.BlockSpec((1, E), lambda i: (0, 0))],
        out_specs=pl.BlockSpec((tm, E), lambda i: (i, 0)),
        compiler_params=pltpu.CompilerParams(dimension_semantics=("parallel",)),
    )(*xs, gamma.reshape(1, E).astype(jnp.float32),
      beta.reshape(1, E).astype(jnp.float32))
    return out[:M] if Mp != M else out


def pallas_layernorm(x, gamma, beta, eps=1e-12):
    return _ln_core(_ln_kernel, [x], gamma, beta, eps)


def pallas_add_layernorm(x, y, gamma, beta, eps=1e-12):
    """LayerNorm(x + y) fused (fallback path for very large K/N in pallas_linear_res_ln)."""
    return _ln_core(_add_ln_kernel, [x, y], gamma, beta, eps)


# ----------------------------------------------------------------------------
# Conv2d (valid padding, dilation=1), NHWC, fused patch-gather + single big-K matmul per row.
# ----------------------------------------------------------------------------

def _conv_kernel(xp_ref, w_ref, b_ref, o_ref, *, stride, kh, kw, ho, wo, activation):
    bias = b_ref[...].astype(jnp.float32)                       # (1, Cout)

    def row(i, carry):
        wins = []
        for ih in range(kh):                                    # KHxKW stays unrolled
            ph, ro = ih % stride, ih // stride
            for iw in range(kw):
                pw, co = iw % stride, iw // stride
                wins.append(xp_ref[0, ph, pw, ro + i, pl.ds(co, wo), :])   # (wo, Cin)
        # concat into (wo, KH*KW*Cin) so the MXU contraction is KH*KW*Cin, not Cin
        patch = wins[0] if len(wins) == 1 else jnp.concatenate(wins, axis=-1)
        y = jnp.dot(patch, w_ref[...], preferred_element_type=jnp.float32) + bias
        if activation == "relu":
            y = jnp.maximum(y, 0.0)
        o_ref[0, i] = y.astype(o_ref.dtype)
        return carry

    jax.lax.fori_loop(0, ho, row, 0)


def pallas_conv2d_nhwc(x, w, b, stride, activation="none"):
    """x: (B, H, W, Cin);  w: (Cout, Cin, KH, KW) (torch layout);  valid padding, dilation 1."""
    B, H, W, Cin = x.shape
    Cout, _, KH, KW = w.shape
    s = stride
    Ho = (H - KH) // s + 1
    Wo = (W - KW) // s + 1
    Hq, Wq = -(-H // s), -(-W // s)
    # phase decomposition: xp[b, ph, pw, i, j, c] = x[b, i*s+ph, j*s+pw, c]
    # TODO(synk): this is an extra HBM round trip per conv; have the producing kernel emit this
    #             layout (or use strided pl.ds gathers from plain NHWC) to remove it.
    xpad = jnp.pad(x, ((0, 0), (0, Hq * s - H), (0, Wq * s - W), (0, 0)))
    xp = (xpad.reshape(B, Hq, s, Wq, s, Cin)
              .transpose(0, 2, 4, 1, 3, 5)
              .astype(jnp.bfloat16))                                      # (B, s, s, Hq, Wq, Cin)
    wk = (jnp.transpose(w, (2, 3, 1, 0))
             .reshape(KH * KW * Cin, Cout)
             .astype(jnp.bfloat16))                                       # (KH*KW*Cin, Cout)
    b2 = b.reshape(1, Cout).astype(jnp.float32)
    # TODO(synk): Cout < 128 gives masked (non lane-dense) stores; pad Cout at real channel counts.
    # TODO(synk): add an output-row grid axis (spatial tiling) for v7x's 64 MiB VMEM / megacore.
    return pl.pallas_call(
        functools.partial(_conv_kernel, stride=s, kh=KH, kw=KW, ho=Ho, wo=Wo,
                          activation=activation),
        out_shape=jax.ShapeDtypeStruct((B, Ho, Wo, Cout), jnp.bfloat16),
        grid=(B,),
        in_specs=[pl.BlockSpec((1, s, s, Hq, Wq, Cin), lambda bi: (bi, 0, 0, 0, 0, 0)),
                  pl.BlockSpec((KH * KW * Cin, Cout), lambda bi: (0, 0)),
                  pl.BlockSpec((1, Cout), lambda bi: (0, 0))],
        out_specs=pl.BlockSpec((1, Ho, Wo, Cout), lambda bi: (bi, 0, 0, 0)),
        compiler_params=pltpu.CompilerParams(
            dimension_semantics=("parallel",),
            vmem_limit_bytes=_VMEM_LIMIT_BYTES),
    )(xp, wk, b2)


def weight_norm_effective(v, g):
    """torch weight_norm (dim=0): w = g * v / ||v||  (norm over (Cin, KH, KW))."""
    norm = jnp.sqrt(jnp.sum(v * v, axis=(1, 2, 3), keepdims=True))
    return g.reshape(-1, 1, 1, 1) * v / norm


# ----------------------------------------------------------------------------
# Broadcasted residual add + ReLU (broadcast happens INSIDE the kernel)
# ----------------------------------------------------------------------------

def _add_relu_kernel(a_ref, b_ref, o_ref):
    shape = o_ref.shape
    a = jnp.broadcast_to(a_ref[...].astype(jnp.float32), shape)
    b = jnp.broadcast_to(b_ref[...].astype(jnp.float32), shape)
    o_ref[...] = jnp.maximum(a + b, 0.0).astype(o_ref.dtype)


def pallas_add_relu(a, b):
    out_shape = jnp.broadcast_shapes(a.shape, b.shape)       # PyTorch-style broadcasting
    B = out_shape[0]
    nd = len(out_shape)
    # guard: operands with a broadcast (size-1) leading dim must always map to block 0
    a_map = (lambda i: (i,) + (0,) * (nd - 1)) if a.shape[0] == B \
        else (lambda i: (0,) * nd)
    b_map = (lambda i: (i,) + (0,) * (nd - 1)) if b.shape[0] == B \
        else (lambda i: (0,) * nd)
    # TODO(synk): spatially tile these blocks at real feature-map sizes (v7x 64 MiB VMEM).
    return pl.pallas_call(
        _add_relu_kernel,
        out_shape=jax.ShapeDtypeStruct(out_shape, jnp.bfloat16),
        grid=(B,),
        in_specs=[pl.BlockSpec((1,) + a.shape[1:], a_map),
                  pl.BlockSpec((1,) + b.shape[1:], b_map)],
        out_specs=pl.BlockSpec((1,) + out_shape[1:], lambda i: (i,) + (0,) * (nd - 1)),
        compiler_params=pltpu.CompilerParams(dimension_semantics=("parallel",)),
    )(a, b)


# ----------------------------------------------------------------------------
# Module forwards (mirroring the PyTorch modules, eval mode)
# ----------------------------------------------------------------------------

def genre_block_forward(p, x, stride):
    """GenreClassifierBlockBertMod.forward (dropout = identity). x is NHWC."""
    w1 = weight_norm_effective(p["conv1_v"], p["conv1_g"])
    w2 = weight_norm_effective(p["conv2_v"], p["conv2_g"])
    out = pallas_conv2d_nhwc(x, w1, p["conv1_b"], stride, activation="relu")
    out = pallas_conv2d_nhwc(out, w2, p["conv2_b"], stride, activation="relu")
    if p["down_w"] is not None:
        res = pallas_conv2d_nhwc(x, p["down_w"], p["down_b"], stride)
    else:
        res = x
    return pallas_add_relu(out, res)          # broadcasted `out + res`, relu


def torch_mha_forward(p, x, num_heads):
    """nn.MultiheadAttention(batch_first=True) self-attention, eval mode, fused in_proj."""
    B, S, E = x.shape
    w_in, b_in = _fold_q_scale(p["in_proj_w"], p["in_proj_b"], E, num_heads)
    qkv = pallas_linear(x.reshape(B * S, E), w_in, b_in)
    attn = pallas_mha(qkv.reshape(B, S, 3 * E), num_heads)
    out = pallas_linear(attn.reshape(B * S, E), p["out_proj_w"], p["out_proj_b"])
    return out.reshape(B, S, E)


def bert_layer_forward(p, h, num_heads):
    B, S, E = h.shape
    h2 = h.reshape(B * S, E)
    w_qkv, b_qkv = _fold_q_scale(p["w_qkv"], p["b_qkv"], E, num_heads)
    qkv = pallas_linear(h2, w_qkv, b_qkv)                          # fused QKV projection
    attn = pallas_mha(qkv.reshape(B, S, 3 * E), num_heads)
    # out-proj + residual + LayerNorm fused into one kernel
    h2 = pallas_linear_res_ln(attn.reshape(B * S, E), p["wo"], p["bo"], h2,
                              p["ln1_g"], p["ln1_b"])
    ffn = pallas_linear(h2, p["w1"], p["b1"], activation="gelu")
    # FFN w2 + residual + LayerNorm fused into one kernel
    h2 = pallas_linear_res_ln(ffn, p["w2"], p["b2"], h2, p["ln2_g"], p["ln2_b"])
    return h2.reshape(B, S, E)


def bert_forward(p, input_ids):
    """Synthetic mini-BERT encoder; returns last_hidden_state (B, S, E)."""
    B, S = input_ids.shape
    E = p["word_emb"].shape[1]
    h = (p["word_emb"][input_ids]
         + p["pos_emb"][None, :S, :]
         + p["type_emb"][0][None, None, :])                  # token_type_ids == 0
    h = pallas_layernorm(h.reshape(B * S, E), p["emb_ln_g"], p["emb_ln_b"]).reshape(B, S, E)
    for layer in p["layers"]:
        h = bert_layer_forward(layer, h, p["num_heads"])
    return h


def attention_genre_classifier_forward(p, x):
    """AttentionGenreClassifierBertMod.forward (use_attention=True, eval mode)."""
    B, S, E = x.shape
    x = torch_mha_forward(p["attention"], x, p["num_heads"])     # (B, S, E)
    # permute(0,2,1).unsqueeze(1) -> NCHW (B,1,E,S); stored internally as NHWC (B,E,S,1)
    x = x.transpose(0, 2, 1)[..., None]
    for blk in p["blocks"]:
        x = genre_block_forward(blk, x, p["stride"])
    # NHWC -> NCHW before flatten so element order matches torch.flatten(x, 1)
    x = x.transpose(0, 3, 1, 2).reshape(B, -1)
    x = pallas_linear(x, p["fc1_w"], p["fc1_b"], activation="relu")   # fc1 -> dropout(id) -> relu
    x = pallas_linear(x, p["fc2_w"], p["fc2_b"], out_dtype=jnp.float32)   # fc2 -> dropout(id)
    return x


def bert_with_attention_classifier_forward(params, inputs):
    # attention_mask is all ones -> no-op masking in the synthetic encoder
    last_hidden_state = bert_forward(params["bert"], inputs["input_ids"])
    return attention_genre_classifier_forward(params["net"], last_hidden_state)


# ----------------------------------------------------------------------------
# Deterministic parameter construction
# ----------------------------------------------------------------------------

def _broadcast_dim(a, b):
    if a == b or b == 1:
        return a
    if a == 1:
        return b
    raise ValueError(f"residual add shape mismatch ({a} vs {b})")


def init_params(key, cfg):
    E, S, V = cfg["hidden"], cfg["max_length"], cfg["vocab_size"]
    F, L = cfg["bert_ffn"], cfg["bert_layers"]
    ks = iter(jax.random.split(key, 256))

    def nrm(shape, std=0.02):
        return std * jax.random.normal(next(ks), shape, jnp.float32)

    bert = {"num_heads": cfg["bert_heads"],
            "word_emb": nrm((V, E)), "pos_emb": nrm((S, E)), "type_emb": nrm((2, E)),
            "emb_ln_g": jnp.ones((E,), jnp.float32), "emb_ln_b": jnp.zeros((E,), jnp.float32),
            "layers": []}
    for _ in range(L):
        bert["layers"].append({
            "w_qkv": nrm((E, 3 * E)), "b_qkv": jnp.zeros((3 * E,), jnp.float32),
            "wo": nrm((E, E)), "bo": jnp.zeros((E,), jnp.float32),
            "ln1_g": jnp.ones((E,), jnp.float32), "ln1_b": jnp.zeros((E,), jnp.float32),
            "w1": nrm((E, F)), "b1": jnp.zeros((F,), jnp.float32),
            "w2": nrm((F, E)), "b2": jnp.zeros((E,), jnp.float32),
            "ln2_g": jnp.ones((E,), jnp.float32), "ln2_b": jnp.zeros((E,), jnp.float32)})

    channels, k = cfg["channels"], cfg["kernel_size"]
    stride = k - 1                           # stride = kernel_size - 1 (int kernel_size)
    net = {"num_heads": channels[0], "stride": stride,
           "attention": {"in_proj_w": nrm((E, 3 * E)),
                         "in_proj_b": jnp.zeros((3 * E,), jnp.float32),
                         "out_proj_w": nrm((E, E)),
                         "out_proj_b": jnp.zeros((E,), jnp.float32)},
           "blocks": []}

    def cout(n, kk, s):
        return (n - kk) // s + 1

    h, w = E, S          # conv input spatial dims after permute+unsqueeze: (B, 1, E, S)
    in_c = 1
    for out_c in channels:
        blk = {"conv1_v": 0.01 * jax.random.normal(next(ks), (out_c, in_c, k, k), jnp.float32),
               "conv2_v": 0.01 * jax.random.normal(next(ks), (out_c, out_c, k, k), jnp.float32),
               "conv1_b": jnp.zeros((out_c,), jnp.float32),
               "conv2_b": jnp.zeros((out_c,), jnp.float32)}
        # weight_norm init: g = ||v||  (effective weight == v, i.e. ~N(0, 0.01))
        blk["conv1_g"] = jnp.sqrt(jnp.sum(blk["conv1_v"] ** 2, axis=(1, 2, 3)))
        blk["conv2_g"] = jnp.sqrt(jnp.sum(blk["conv2_v"] ** 2, axis=(1, 2, 3)))
        if in_c != out_c:
            blk["down_w"] = 0.01 * jax.random.normal(next(ks), (out_c, in_c, 1, 1), jnp.float32)
            blk["down_b"] = jnp.zeros((out_c,), jnp.float32)
        else:
            blk["down_w"] = None
            blk["down_b"] = None
        net["blocks"].append(blk)
        # LazyLinear input-size arithmetic (mirrors runtime shapes incl. broadcasting)
        h_main = cout(cout(h, k, stride), k, stride)
        w_main = cout(cout(w, k, stride), k, stride)
        h_res = cout(h, 1, stride) if in_c != out_c else h
        w_res = cout(w, 1, stride) if in_c != out_c else w
        h, w = _broadcast_dim(h_main, h_res), _broadcast_dim(w_main, w_res)
        in_c = out_c

    flat = channels[-1] * h * w
    net["fc1_w"] = nrm((flat, 512), 0.05)
    net["fc1_b"] = jnp.zeros((512,), jnp.float32)
    net["fc2_w"] = nrm((512, cfg["num_classes"]), 0.05)
    net["fc2_b"] = jnp.zeros((cfg["num_classes"],), jnp.float32)
    return {"bert": bert, "net": net}


# ----------------------------------------------------------------------------
# Main
# ----------------------------------------------------------------------------

if __name__ == "__main__":
    cfg = dict(vocab_size=32, max_length=8, hidden=8,        # embed_dim scaled down from 768
               bert_heads=2, bert_layers=2, bert_ffn=32,
               num_classes=5, channels=[4],                   # scaled down from [32,64,128,64,32]
               kernel_size=3)
    B = 2

    key = jax.random.PRNGKey(0)
    params = init_params(key, cfg)

    input_ids = jax.random.randint(jax.random.fold_in(key, 7), (B, cfg["max_length"]),
                                   0, cfg["vocab_size"], dtype=jnp.int32)
    attention_mask = jnp.ones((B, cfg["max_length"]), jnp.int32)

    fwd = jax.jit(lambda ids: bert_with_attention_classifier_forward(
        params, {"input_ids": ids, "attention_mask": attention_mask}))

    out = fwd(input_ids)
    out = jax.block_until_ready(out)
    assert out.shape == (B, cfg["num_classes"]), out.shape
    assert jnp.all(jnp.isfinite(out))
    print("KERNEL_OK")
</pallas_src>

<mosaic_0001>
module attributes {stable_mosaic.version = 11 : i64} {
  func.func @_ln_kernel(%arg0: i32, %arg1: memref<16x8xf32, #tpu.memory_space<vmem>>, %arg2: memref<1x8xf32, #tpu.memory_space<vmem>>, %arg3: memref<1x8xf32, #tpu.memory_space<vmem>>, %arg4: memref<16x8xbf16, #tpu.memory_space<vmem>>) attributes {dimension_semantics = [#tpu.dimension_semantics<parallel>], iteration_bounds = array<i64: 1>, scalar_prefetch = 0 : i64, scratch_operands = 0 : i64, tpu.core_type = #tpu.core_type<tc>, window_params = [{transform_indices = @transform_0, window_bounds = array<i64: 16, 8>}, {pipeline_mode = #tpu.pipeline_mode<synchronous>, transform_indices = @transform_1, window_bounds = array<i64: 1, 8>}, {pipeline_mode = #tpu.pipeline_mode<synchronous>, transform_indices = @transform_2, window_bounds = array<i64: 1, 8>}, {transform_indices = @transform_3, window_bounds = array<i64: 16, 8>}]} {
    %c0 = arith.constant 0 : index
    %c0_0 = arith.constant 0 : index
    %0 = vector.load %arg1[%c0, %c0_0] : memref<16x8xf32, #tpu.memory_space<vmem>>, vector<16x8xf32>
    %cst = arith.constant dense<0.000000e+00> : vector<16xf32>
    %1 = vector.multi_reduction <add>, %0, %cst [1] : vector<16x8xf32> to vector<16xf32>
    %2 = vector.shape_cast %1 : vector<16xf32> to vector<16x1xf32>
    %cst_1 = arith.constant 8.000000e+00 : f32
    %3 = vector.broadcast %cst_1 : f32 to vector<16x1xf32>
    %4 = arith.divf %2, %3 : vector<16x1xf32>
    %5 = vector.broadcast %4 : vector<16x1xf32> to vector<16x8xf32>
    %6 = arith.subf %0, %5 : vector<16x8xf32>
    %7 = arith.mulf %6, %6 : vector<16x8xf32>
    %cst_2 = arith.constant dense<0.000000e+00> : vector<16xf32>
    %8 = vector.multi_reduction <add>, %7, %cst_2 [1] : vector<16x8xf32> to vector<16xf32>
    %9 = vector.shape_cast %8 : vector<16xf32> to vector<16x1xf32>
    %cst_3 = arith.constant 8.000000e+00 : f32
    %10 = vector.broadcast %cst_3 : f32 to vector<16x1xf32>
    %11 = arith.divf %9, %10 : vector<16x1xf32>
    %12 = vector.broadcast %4 : vector<16x1xf32> to vector<16x8xf32>
    %13 = arith.subf %0, %12 : vector<16x8xf32>
    %cst_4 = arith.constant 9.99999996E-13 : f32
    %14 = vector.broadcast %cst_4 : f32 to vector<16x1xf32>
    %15 = arith.addf %11, %14 : vector<16x1xf32>
    %16 = math.rsqrt %15 : vector<16x1xf32>
    %17 = vector.broadcast %16 : vector<16x1xf32> to vector<16x8xf32>
    %18 = arith.mulf %13, %17 : vector<16x8xf32>
    %c0_5 = arith.constant 0 : index
    %c0_6 = arith.constant 0 : index
    %19 = vector.load %arg2[%c0_5, %c0_6] : memref<1x8xf32, #tpu.memory_space<vmem>>, vector<1x8xf32>
    %20 = vector.broadcast %19 : vector<1x8xf32> to vector<16x8xf32>
    %21 = arith.mulf %18, %20 : vector<16x8xf32>
    %c0_7 = arith.constant 0 : index
    %c0_8 = arith.constant 0 : index
    %22 = vector.load %arg3[%c0_7, %c0_8] : memref<1x8xf32, #tpu.memory_space<vmem>>, vector<1x8xf32>
    %23 = vector.broadcast %22 : vector<1x8xf32> to vector<16x8xf32>
    %24 = arith.addf %21, %23 : vector<16x8xf32>
    %25 = arith.truncf %24 : vector<16x8xf32> to vector<16x8xbf16>
    %c0_9 = arith.constant 0 : index
    %c0_10 = arith.constant 0 : index
    %26 = vector.load %arg4[%c0_9, %c0_10] : memref<16x8xbf16, #tpu.memory_space<vmem>>, vector<16x8xbf16>
    tpu.vector_store %arg4[%c0_9, %c0_10], %25 {strides = array<i32>} : memref<16x8xbf16, #tpu.memory_space<vmem>>, vector<16x8xbf16>,
    return
  }
  func.func @transform_0(%arg0: i32) -> (i32, i32) {
    %c0_i32 = arith.constant 0 : i32
    %c0_i32_0 = arith.constant 0 : i32
    return %arg0, %c0_i32 : i32, i32
  }
  func.func @transform_1(%arg0: i32) -> (i32, i32) {
    %c0_i32 = arith.constant 0 : i32
    %c0_i32_0 = arith.constant 0 : i32
    %c0_i32_1 = arith.constant 0 : i32
    return %c0_i32, %c0_i32_0 : i32, i32
  }
  func.func @transform_2(%arg0: i32) -> (i32, i32) {
    %c0_i32 = arith.constant 0 : i32
    %c0_i32_0 = arith.constant 0 : i32
    %c0_i32_1 = arith.constant 0 : i32
    return %c0_i32, %c0_i32_0 : i32, i32
  }
  func.func @transform_3(%arg0: i32) -> (i32, i32) {
    %c0_i32 = arith.constant 0 : i32
    %c0_i32_0 = arith.constant 0 : i32
    return %arg0, %c0_i32 : i32, i32
  }
}

module attributes {stable_mosaic.version = 11 : i64} {
  func.func @_linear_kernel_fullk(%arg0: i32, %arg1: i32, %arg2: memref<16x128xbf16, #tpu.memory_space<vmem>>, %arg3: memref<128x128xbf16, #tpu.memory_space<vmem>>, %arg4: memref<1x128xf32, #tpu.memory_space<vmem>>, %arg5: memref<16x128xbf16, #tpu.memory_space<vmem>>) attributes {dimension_semantics = [#tpu.dimension_semantics<parallel>, #tpu.dimension_semantics<parallel>], iteration_bounds = array<i64: 1, 1>, scalar_prefetch = 0 : i64, scratch_operands = 0 : i64, tpu.core_type = #tpu.core_type<tc>, window_params = [{transform_indices = @transform_0, window_bounds = array<i64: 16, 128>}, {transform_indices = @transform_1, window_bounds = array<i64: 128, 128>}, {transform_indices = @transform_2, window_bounds = array<i64: 1, 128>}, {transform_indices = @transform_3, window_bounds = array<i64: 16, 128>}]} {
    %c0 = arith.constant 0 : index
    %c0_0 = arith.constant 0 : index
    %0 = vector.load %arg2[%c0, %c0_0] : memref<16x128xbf16, #tpu.memory_space<vmem>>, vector<16x128xbf16>
    %c0_1 = arith.constant 0 : index
    %c0_2 = arith.constant 0 : index
    %1 = vector.load %arg3[%c0_1, %c0_2] : memref<128x128xbf16, #tpu.memory_space<vmem>>, vector<128x128xbf16>
    %cst = arith.constant dense<0.000000e+00> : vector<16x128xf32>
    %2 = tpu.matmul %0, %1, %cst {dimension_numbers = #tpu.dot_dimension_numbers<[1], [0], [0], [1], [0, 0, 1, 1], [], []>} : vector<16x128xbf16>, vector<128x128xbf16>, vector<16x128xf32> -> vector<16x128xf32>
    %c0_3 = arith.constant 0 : index
    %c0_4 = arith.constant 0 : index
    %3 = vector.load %arg4[%c0_3, %c0_4] : memref<1x128xf32, #tpu.memory_space<vmem>>, vector<1x128xf32>
    %4 = vector.broadcast %3 : vector<1x128xf32> to vector<16x128xf32>
    %5 = arith.addf %2, %4 : vector<16x128xf32>
    %6 = arith.truncf %5 : vector<16x128xf32> to vector<16x128xbf16>
    %c0_5 = arith.constant 0 : index
    %c0_6 = arith.constant 0 : index
    %7 = vector.load %arg5[%c0_5, %c0_6] : memref<16x128xbf16, #tpu.memory_space<vmem>>, vector<16x128xbf16>
    tpu.vector_store %arg5[%c0_5, %c0_6], %6 {strides = array<i32>} : memref<16x128xbf16, #tpu.memory_space<vmem>>, vector<16x128xbf16>,
    return
  }
  func.func @transform_0(%arg0: i32, %arg1: i32) -> (i32, i32) {
    %c0_i32 = arith.constant 0 : i32
    %c0_i32_0 = arith.constant 0 : i32
    return %arg0, %c0_i32 : i32, i32
  }
  func.func @transform_1(%arg0: i32, %arg1: i32) -> (i32, i32) {
    %c0_i32 = arith.constant 0 : i32
    %c0_i32_0 = arith.constant 0 : i32
    return %c0_i32, %arg1 : i32, i32
  }
  func.func @transform_2(%arg0: i32, %arg1: i32) -> (i32, i32) {
    %c0_i32 = arith.constant 0 : i32
    %c0_i32_0 = arith.constant 0 : i32
    return %c0_i32, %arg1 : i32, i32
  }
  func.func @transform_3(%arg0: i32, %arg1: i32) -> (i32, i32) {
    %c0_i32 = arith.constant 0 : i32
    return %arg0, %arg1 : i32, i32
  }
}

module attributes {stable_mosaic.version = 11 : i64} {
  func.func @_mha_kernel(%arg0: i32, %arg1: memref<1x8x24xbf16, #tpu.memory_space<vmem>>, %arg2: memref<1x8x8xbf16, #tpu.memory_space<vmem>>) attributes {dimension_semantics = [#tpu.dimension_semantics<parallel>], iteration_bounds = array<i64: 2>, scalar_prefetch = 0 : i64, scratch_operands = 0 : i64, tpu.core_type = #tpu.core_type<tc>, window_params = [{transform_indices = @transform_0, window_bounds = array<i64: 1, 8, 24>}, {transform_indices = @transform_1, window_bounds = array<i64: 1, 8, 8>}]} {
    %c0 = arith.constant 0 : index
    %c0_0 = arith.constant 0 : index
    %c0_1 = arith.constant 0 : index
    %0 = vector.load %arg1[%c0, %c0_0, %c0_1] : memref<1x8x24xbf16, #tpu.memory_space<vmem>>, vector<1x8x4xbf16>
    %1 = vector.shape_cast %0 : vector<1x8x4xbf16> to vector<8x4xbf16>
    %c0_2 = arith.constant 0 : index
    %c0_3 = arith.constant 0 : index
    %c8 = arith.constant 8 : index
    %2 = vector.load %arg1[%c0_2, %c0_3, %c8] : memref<1x8x24xbf16, #tpu.memory_space<vmem>>, vector<1x8x4xbf16>
    %3 = vector.shape_cast %2 : vector<1x8x4xbf16> to vector<8x4xbf16>
    %c0_4 = arith.constant 0 : index
    %c0_5 = arith.constant 0 : index
    %c16 = arith.constant 16 : index
    %4 = vector.load %arg1[%c0_4, %c0_5, %c16] : memref<1x8x24xbf16, #tpu.memory_space<vmem>>, vector<1x8x4xbf16>
    %5 = vector.shape_cast %4 : vector<1x8x4xbf16> to vector<8x4xbf16>
    %cst = arith.constant dense<0.000000e+00> : vector<8x8xf32>
    %6 = tpu.matmul %1, %3, %cst {dimension_numbers = #tpu.dot_dimension_numbers<[1], [1], [0], [0], [0, 0, 1, 0], [], []>} : vector<8x4xbf16>, vector<8x4xbf16>, vector<8x8xf32> -> vector<8x8xf32>
    %cst_6 = arith.constant dense<0xFF800000> : vector<8xf32>
    %7 = vector.multi_reduction <maximumf>, %6, %cst_6 [1] : vector<8x8xf32> to vector<8xf32>
    %8 = vector.shape_cast %7 : vector<8xf32> to vector<8x1xf32>
    %9 = vector.broadcast %8 : vector<8x1xf32> to vector<8x8xf32>
    %10 = arith.subf %6, %9 : vector<8x8xf32>
    %11 = math.exp %10 : vector<8x8xf32>
    %cst_7 = arith.constant dense<0.000000e+00> : vector<8xf32>
    %12 = vector.multi_reduction <add>, %11, %cst_7 [1] : vector<8x8xf32> to vector<8xf32>
    %13 = vector.shape_cast %12 : vector<8xf32> to vector<8x1xf32>
    %14 = arith.truncf %11 : vector<8x8xf32> to vector<8x8xbf16>
    %cst_8 = arith.constant dense<0.000000e+00> : vector<8x4xf32>
    %15 = tpu.matmul %14, %5, %cst_8 {dimension_numbers = #tpu.dot_dimension_numbers<[1], [0], [0], [1], [0, 0, 1, 1], [], []>} : vector<8x8xbf16>, vector<8x4xbf16>, vector<8x4xf32> -> vector<8x4xf32>
    %16 = tpu.reciprocal %13 {approx = true} : vector<8x1xf32> -> vector<8x1xf32>
    %17 = vector.broadcast %16 : vector<8x1xf32> to vector<8x4xf32>
    %18 = arith.mulf %15, %17 : vector<8x4xf32>
    %c0_9 = arith.constant 0 : index
    %c0_10 = arith.constant 0 : index
    %c4 = arith.constant 4 : index
    %19 = vector.load %arg1[%c0_9, %c0_10, %c4] : memref<1x8x24xbf16, #tpu.memory_space<vmem>>, vector<1x8x4xbf16>
    %20 = vector.shape_cast %19 : vector<1x8x4xbf16> to vector<8x4xbf16>
    %c0_11 = arith.constant 0 : index
    %c0_12 = arith.constant 0 : index
    %c12 = arith.constant 12 : index
    %21 = vector.load %arg1[%c0_11, %c0_12, %c12] : memref<1x8x24xbf16, #tpu.memory_space<vmem>>, vector<1x8x4xbf16>
    %22 = vector.shape_cast %21 : vector<1x8x4xbf16> to vector<8x4xbf16>
    %c0_13 = arith.constant 0 : index
    %c0_14 = arith.constant 0 : index
    %c20 = arith.constant 20 : index
    %23 = vector.load %arg1[%c0_13, %c0_14, %c20] : memref<1x8x24xbf16, #tpu.memory_space<vmem>>, vector<1x8x4xbf16>
    %24 = vector.shape_cast %23 : vector<1x8x4xbf16> to vector<8x4xbf16>
    %cst_15 = arith.constant dense<0.000000e+00> : vector<8x8xf32>
    %25 = tpu.matmul %20, %22, %cst_15 {dimension_numbers = #tpu.dot_dimension_numbers<[1], [1], [0], [0], [0, 0, 1, 0], [], []>} : vector<8x4xbf16>, vector<8x4xbf16>, vector<8x8xf32> -> vector<8x8xf32>
    %cst_16 = arith.constant dense<0xFF800000> : vector<8xf32>
    %26 = vector.multi_reduction <maximumf>, %25, %cst_16 [1] : vector<8x8xf32> to vector<8xf32>
    %27 = vector.shape_cast %26 : vector<8xf32> to vector<8x1xf32>
    %28 = vector.broadcast %27 : vector<8x1xf32> to vector<8x8xf32>
    %29 = arith.subf %25, %28 : vector<8x8xf32>
    %30 = math.exp %29 : vector<8x8xf32>
    %cst_17 = arith.constant dense<0.000000e+00> : vector<8xf32>
    %31 = vector.multi_reduction <add>, %30, %cst_17 [1] : vector<8x8xf32> to vector<8xf32>
    %32 = vector.shape_cast %31 : vector<8xf32> to vector<8x1xf32>
    %33 = arith.truncf %30 : vector<8x8xf32> to vector<8x8xbf16>
    %cst_18 = arith.constant dense<0.000000e+00> : vector<8x4xf32>
    %34 = tpu.matmul %33, %24, %cst_18 {dimension_numbers = #tpu.dot_dimension_numbers<[1], [0], [0], [1], [0, 0, 1, 1], [], []>} : vector<8x8xbf16>, vector<8x4xbf16>, vector<8x4xf32> -> vector<8x4xf32>
    %35 = tpu.reciprocal %32 {approx = true} : vector<8x1xf32> -> vector<8x1xf32>
    %36 = vector.broadcast %35 : vector<8x1xf32> to vector<8x4xf32>
    %37 = arith.mulf %34, %36 : vector<8x4xf32>
    %38 = tpu.concatenate %18, %37 in 1 : vector<8x4xf32>, vector<8x4xf32> -> vector<8x8xf32>
    %39 = arith.truncf %38 : vector<8x8xf32> to vector<8x8xbf16>
    %c0_19 = arith.constant 0 : index
    %c0_20 = arith.constant 0 : index
    %c0_21 = arith.constant 0 : index
    %40 = vector.load %arg2[%c0_19, %c0_20, %c0_21] : memref<1x8x8xbf16, #tpu.memory_space<vmem>>, vector<1x8x8xbf16>
    %41 = vector.shape_cast %40 : vector<1x8x8xbf16> to vector<8x8xbf16>
    %42 = vector.shape_cast %39 : vector<8x8xbf16> to vector<1x8x8xbf16>
    tpu.vector_store %arg2[%c0_19, %c0_20, %c0_21], %42 {strides = array<i32>} : memref<1x8x8xbf16, #tpu.memory_space<vmem>>, vector<1x8x8xbf16>,
    return
  }
  func.func @transform_0(%arg0: i32) -> (i32, i32, i32) {
    %c0_i32 = arith.constant 0 : i32
    %c0_i32_0 = arith.constant 0 : i32
    %c0_i32_1 = arith.constant 0 : i32
    return %arg0, %c0_i32, %c0_i32_0 : i32, i32, i32
  }
  func.func @transform_1(%arg0: i32) -> (i32, i32, i32) {
    %c0_i32 = arith.constant 0 : i32
    %c0_i32_0 = arith.constant 0 : i32
    %c0_i32_1 = arith.constant 0 : i32
    return %arg0, %c0_i32, %c0_i32_0 : i32, i32, i32
  }
}

module attributes {stable_mosaic.version = 11 : i64} {
  func.func @_linear_res_ln_kernel(%arg0: i32, %arg1: memref<16x128xbf16, #tpu.memory_space<vmem>>, %arg2: memref<128x128xbf16, #tpu.memory_space<vmem>>, %arg3: memref<1x128xf32, #tpu.memory_space<vmem>>, %arg4: memref<16x128xbf16, #tpu.memory_space<vmem>>, %arg5: memref<1x128xf32, #tpu.memory_space<vmem>>, %arg6: memref<1x128xf32, #tpu.memory_space<vmem>>, %arg7: memref<16x128xbf16, #tpu.memory_space<vmem>>) attributes {dimension_semantics = [#tpu.dimension_semantics<parallel>], iteration_bounds = array<i64: 1>, scalar_prefetch = 0 : i64, scratch_operands = 0 : i64, tpu.core_type = #tpu.core_type<tc>, window_params = [{transform_indices = @transform_0, window_bounds = array<i64: 16, 128>}, {pipeline_mode = #tpu.pipeline_mode<synchronous>, transform_indices = @transform_1, window_bounds = array<i64: 128, 128>}, {pipeline_mode = #tpu.pipeline_mode<synchronous>, transform_indices = @transform_2, window_bounds = array<i64: 1, 128>}, {transform_indices = @transform_3, window_bounds = array<i64: 16, 128>}, {pipeline_mode = #tpu.pipeline_mode<synchronous>, transform_indices = @transform_4, window_bounds = array<i64: 1, 128>}, {pipeline_mode = #tpu.pipeline_mode<synchronous>, transform_indices = @transform_5, window_bounds = array<i64: 1, 128>}, {transform_indices = @transform_6, window_bounds = array<i64: 16, 128>}]} {
    %c0 = arith.constant 0 : index
    %c0_0 = arith.constant 0 : index
    %0 = vector.load %arg1[%c0, %c0_0] : memref<16x128xbf16, #tpu.memory_space<vmem>>, vector<16x128xbf16>
    %c0_1 = arith.constant 0 : index
    %c0_2 = arith.constant 0 : index
    %1 = vector.load %arg2[%c0_1, %c0_2] : memref<128x128xbf16, #tpu.memory_space<vmem>>, vector<128x128xbf16>
    %cst = arith.constant dense<0.000000e+00> : vector<16x128xf32>
    %2 = tpu.matmul %0, %1, %cst {dimension_numbers = #tpu.dot_dimension_numbers<[1], [0], [0], [1], [0, 0, 1, 1], [], []>} : vector<16x128xbf16>, vector<128x128xbf16>, vector<16x128xf32> -> vector<16x128xf32>
    %c0_3 = arith.constant 0 : index
    %c0_4 = arith.constant 0 : index
    %3 = vector.load %arg3[%c0_3, %c0_4] : memref<1x128xf32, #tpu.memory_space<vmem>>, vector<1x128xf32>
    %4 = vector.broadcast %3 : vector<1x128xf32> to vector<16x128xf32>
    %5 = arith.addf %2, %4 : vector<16x128xf32>
    %c0_5 = arith.constant 0 : index
    %c0_6 = arith.constant 0 : index
    %6 = vector.load %arg4[%c0_5, %c0_6] : memref<16x128xbf16, #tpu.memory_space<vmem>>, vector<16x128xbf16>
    %7 = arith.extf %6 : vector<16x128xbf16> to vector<16x128xf32>
    %8 = arith.addf %5, %7 : vector<16x128xf32>
    %9 = tpu.iota {dimensions = array<i32: 1>} : vector<16x128xi32>
    %c8_i32 = arith.constant 8 : i32
    %10 = vector.broadcast %c8_i32 : i32 to vector<16x128xi32>
    %11 = arith.cmpi slt, %9, %10 : vector<16x128xi32>
    %cst_7 = arith.constant 0.000000e+00 : f32
    %12 = vector.broadcast %cst_7 : f32 to vector<16x128xf32>
    %13 = arith.select %11, %8, %12 : vector<16x128xi1>, vector<16x128xf32>
    %cst_8 = arith.constant dense<0.000000e+00> : vector<16xf32>
    %14 = vector.multi_reduction <add>, %13, %cst_8 [1] : vector<16x128xf32> to vector<16xf32>
    %15 = vector.shape_cast %14 : vector<16xf32> to vector<16x1xf32>
    %cst_9 = arith.constant 1.250000e-01 : f32
    %16 = vector.broadcast %cst_9 : f32 to vector<16x1xf32>
    %17 = arith.mulf %15, %16 : vector<16x1xf32>
    %18 = vector.broadcast %17 : vector<16x1xf32> to vector<16x128xf32>
    %19 = arith.subf %8, %18 : vector<16x128xf32>
    %cst_10 = arith.constant 0.000000e+00 : f32
    %20 = vector.broadcast %cst_10 : f32 to vector<16x128xf32>
    %21 = arith.select %11, %19, %20 : vector<16x128xi1>, vector<16x128xf32>
    %22 = arith.mulf %21, %21 : vector<16x128xf32>
    %cst_11 = arith.constant dense<0.000000e+00> : vector<16xf32>
    %23 = vector.multi_reduction <add>, %22, %cst_11 [1] : vector<16x128xf32> to vector<16xf32>
    %24 = vector.shape_cast %23 : vector<16xf32> to vector<16x1xf32>
    %cst_12 = arith.constant 1.250000e-01 : f32
    %25 = vector.broadcast %cst_12 : f32 to vector<16x1xf32>
    %26 = arith.mulf %24, %25 : vector<16x1xf32>
    %27 = vector.broadcast %17 : vector<16x1xf32> to vector<16x128xf32>
    %28 = arith.subf %8, %27 : vector<16x128xf32>
    %cst_13 = arith.constant 9.99999996E-13 : f32
    %29 = vector.broadcast %cst_13 : f32 to vector<16x1xf32>
    %30 = arith.addf %26, %29 : vector<16x1xf32>
    %31 = math.rsqrt %30 : vector<16x1xf32>
    %32 = vector.broadcast %31 : vector<16x1xf32> to vector<16x128xf32>
    %33 = arith.mulf %28, %32 : vector<16x128xf32>
    %c0_14 = arith.constant 0 : index
    %c0_15 = arith.constant 0 : index
    %34 = vector.load %arg5[%c0_14, %c0_15] : memref<1x128xf32, #tpu.memory_space<vmem>>, vector<1x128xf32>
    %35 = vector.broadcast %34 : vector<1x128xf32> to vector<16x128xf32>
    %36 = arith.mulf %33, %35 : vector<16x128xf32>
    %c0_16 = arith.constant 0 : index
    %c0_17 = arith.constant 0 : index
    %37 = vector.load %arg6[%c0_16, %c0_17] : memref<1x128xf32, #tpu.memory_space<vmem>>, vector<1x128xf32>
    %38 = vector.broadcast %37 : vector<1x128xf32> to vector<16x128xf32>
    %39 = arith.addf %36, %38 : vector<16x128xf32>
    %40 = arith.truncf %39 : vector<16x128xf32> to vector<16x128xbf16>
    %c0_18 = arith.constant 0 : index
    %c0_19 = arith.constant 0 : index
    %41 = vector.load %arg7[%c0_18, %c0_19] : memref<16x128xbf16, #tpu.memory_space<vmem>>, vector<16x128xbf16>
    tpu.vector_store %arg7[%c0_18, %c0_19], %40 {strides = array<i32>} : memref<16x128xbf16, #tpu.memory_space<vmem>>, vector<16x128xbf16>,
    return
  }
  func.func @transform_0(%arg0: i32) -> (i32, i32) {
    %c0_i32 = arith.constant 0 : i32
    %c0_i32_0 = arith.constant 0 : i32
    return %arg0, %c0_i32 : i32, i32
  }
  func.func @transform_1(%arg0: i32) -> (i32, i32) {
    %c0_i32 = arith.constant 0 : i32
    %c0_i32_0 = arith.constant 0 : i32
    %c0_i32_1 = arith.constant 0 : i32
    return %c0_i32, %c0_i32_0 : i32, i32
  }
  func.func @transform_2(%arg0: i32) -> (i32, i32) {
    %c0_i32 = arith.constant 0 : i32
    %c0_i32_0 = arith.constant 0 : i32
    %c0_i32_1 = arith.constant 0 : i32
    return %c0_i32, %c0_i32_0 : i32, i32
  }
  func.func @transform_3(%arg0: i32) -> (i32, i32) {
    %c0_i32 = arith.constant 0 : i32
    %c0_i32_0 = arith.constant 0 : i32
    return %arg0, %c0_i32 : i32, i32
  }
  func.func @transform_4(%arg0: i32) -> (i32, i32) {
    %c0_i32 = arith.constant 0 : i32
    %c0_i32_0 = arith.constant 0 : i32
    %c0_i32_1 = arith.constant 0 : i32
    return %c0_i32, %c0_i32_0 : i32, i32
  }
  func.func @transform_5(%arg0: i32) -> (i32, i32) {
    %c0_i32 = arith.constant 0 : i32
    %c0_i32_0 = arith.constant 0 : i32
    %c0_i32_1 = arith.constant 0 : i32
    return %c0_i32, %c0_i32_0 : i32, i32
  }
  func.func @transform_6(%arg0: i32) -> (i32, i32) {
    %c0_i32 = arith.constant 0 : i32
    %c0_i32_0 = arith.constant 0 : i32
    return %arg0, %c0_i32 : i32, i32
  }
}

module attributes {stable_mosaic.version = 11 : i64} {
  func.func @_linear_kernel_fullk(%arg0: i32, %arg1: i32, %arg2: memref<16x128xbf16, #tpu.memory_space<vmem>>, %arg3: memref<128x128xbf16, #tpu.memory_space<vmem>>, %arg4: memref<1x128xf32, #tpu.memory_space<vmem>>, %arg5: memref<16x128xbf16, #tpu.memory_space<vmem>>) attributes {dimension_semantics = [#tpu.dimension_semantics<parallel>, #tpu.dimension_semantics<parallel>], iteration_bounds = array<i64: 1, 1>, scalar_prefetch = 0 : i64, scratch_operands = 0 : i64, tpu.core_type = #tpu.core_type<tc>, window_params = [{transform_indices = @transform_0, window_bounds = array<i64: 16, 128>}, {transform_indices = @transform_1, window_bounds = array<i64: 128, 128>}, {transform_indices = @transform_2, window_bounds = array<i64: 1, 128>}, {transform_indices = @transform_3, window_bounds = array<i64: 16, 128>}]} {
    %c0 = arith.constant 0 : index
    %c0_0 = arith.constant 0 : index
    %0 = vector.load %arg2[%c0, %c0_0] : memref<16x128xbf16, #tpu.memory_space<vmem>>, vector<16x128xbf16>
    %c0_1 = arith.constant 0 : index
    %c0_2 = arith.constant 0 : index
    %1 = vector.load %arg3[%c0_1, %c0_2] : memref<128x128xbf16, #tpu.memory_space<vmem>>, vector<128x128xbf16>
    %cst = arith.constant dense<0.000000e+00> : vector<16x128xf32>
    %2 = tpu.matmul %0, %1, %cst {dimension_numbers = #tpu.dot_dimension_numbers<[1], [0], [0], [1], [0, 0, 1, 1], [], []>} : vector<16x128xbf16>, vector<128x128xbf16>, vector<16x128xf32> -> vector<16x128xf32>
    %c0_3 = arith.constant 0 : index
    %c0_4 = arith.constant 0 : index
    %3 = vector.load %arg4[%c0_3, %c0_4] : memref<1x128xf32, #tpu.memory_space<vmem>>, vector<1x128xf32>
    %4 = vector.broadcast %3 : vector<1x128xf32> to vector<16x128xf32>
    %5 = arith.addf %2, %4 : vector<16x128xf32>
    %cst_5 = arith.constant 5.000000e-01 : f32
    %6 = vector.broadcast %cst_5 : f32 to vector<16x128xf32>
    %7 = arith.mulf %6, %5 : vector<16x128xf32>
    %cst_6 = arith.constant 4.471500e-02 : f32
    %8 = vector.broadcast %cst_6 : f32 to vector<16x128xf32>
    %9 = arith.mulf %8, %5 : vector<16x128xf32>
    %10 = arith.mulf %9, %5 : vector<16x128xf32>
    %11 = arith.mulf %10, %5 : vector<16x128xf32>
    %12 = arith.addf %5, %11 : vector<16x128xf32>
    %cst_7 = arith.constant 0.797884583 : f32
    %13 = vector.broadcast %cst_7 : f32 to vector<16x128xf32>
    %14 = arith.mulf %13, %12 : vector<16x128xf32>
    %15 = math.tanh %14 : vector<16x128xf32>
    %cst_8 = arith.constant 1.000000e+00 : f32
    %16 = vector.broadcast %cst_8 : f32 to vector<16x128xf32>
    %17 = arith.addf %16, %15 : vector<16x128xf32>
    %18 = arith.mulf %7, %17 : vector<16x128xf32>
    %19 = arith.truncf %18 : vector<16x128xf32> to vector<16x128xbf16>
    %c0_9 = arith.constant 0 : index
    %c0_10 = arith.constant 0 : index
    %20 = vector.load %arg5[%c0_9, %c0_10] : memref<16x128xbf16, #tpu.memory_space<vmem>>, vector<16x128xbf16>
    tpu.vector_store %arg5[%c0_9, %c0_10], %19 {strides = array<i32>} : memref<16x128xbf16, #tpu.memory_space<vmem>>, vector<16x128xbf16>,
    return
  }
  func.func @transform_0(%arg0: i32, %arg1: i32) -> (i32, i32) {
    %c0_i32 = arith.constant 0 : i32
    %c0_i32_0 = arith.constant 0 : i32
    return %arg0, %c0_i32 : i32, i32
  }
  func.func @transform_1(%arg0: i32, %arg1: i32) -> (i32, i32) {
    %c0_i32 = arith.constant 0 : i32
    %c0_i32_0 = arith.constant 0 : i32
    return %c0_i32, %arg1 : i32, i32
  }
  func.func @transform_2(%arg0: i32, %arg1: i32) -> (i32, i32) {
    %c0_i32 = arith.constant 0 : i32
    %c0_i32_0 = arith.constant 0 : i32
    return %c0_i32, %arg1 : i32, i32
  }
  func.func @transform_3(%arg0: i32, %arg1: i32) -> (i32, i32) {
    %c0_i32 = arith.constant 0 : i32
    return %arg0, %arg1 : i32, i32
  }
}

module attributes {stable_mosaic.version = 11 : i64} {
  func.func @_mha_kernel(%arg0: i32, %arg1: memref<1x8x24xbf16, #tpu.memory_space<vmem>>, %arg2: memref<1x8x8xbf16, #tpu.memory_space<vmem>>) attributes {dimension_semantics = [#tpu.dimension_semantics<parallel>], iteration_bounds = array<i64: 2>, scalar_prefetch = 0 : i64, scratch_operands = 0 : i64, tpu.core_type = #tpu.core_type<tc>, window_params = [{transform_indices = @transform_0, window_bounds = array<i64: 1, 8, 24>}, {transform_indices = @transform_1, window_bounds = array<i64: 1, 8, 8>}]} {
    %c0 = arith.constant 0 : index
    %c0_0 = arith.constant 0 : index
    %c0_1 = arith.constant 0 : index
    %0 = vector.load %arg1[%c0, %c0_0, %c0_1] : memref<1x8x24xbf16, #tpu.memory_space<vmem>>, vector<1x8x2xbf16>
    %1 = vector.shape_cast %0 : vector<1x8x2xbf16> to vector<8x2xbf16>
    %c0_2 = arith.constant 0 : index
    %c0_3 = arith.constant 0 : index
    %c8 = arith.constant 8 : index
    %2 = vector.load %arg1[%c0_2, %c0_3, %c8] : memref<1x8x24xbf16, #tpu.memory_space<vmem>>, vector<1x8x2xbf16>
    %3 = vector.shape_cast %2 : vector<1x8x2xbf16> to vector<8x2xbf16>
    %c0_4 = arith.constant 0 : index
    %c0_5 = arith.constant 0 : index
    %c16 = arith.constant 16 : index
    %4 = vector.load %arg1[%c0_4, %c0_5, %c16] : memref<1x8x24xbf16, #tpu.memory_space<vmem>>, vector<1x8x2xbf16>
    %5 = vector.shape_cast %4 : vector<1x8x2xbf16> to vector<8x2xbf16>
    %cst = arith.constant dense<0.000000e+00> : vector<8x8xf32>
    %6 = tpu.matmul %1, %3, %cst {dimension_numbers = #tpu.dot_dimension_numbers<[1], [1], [0], [0], [0, 0, 1, 0], [], []>} : vector<8x2xbf16>, vector<8x2xbf16>, vector<8x8xf32> -> vector<8x8xf32>
    %cst_6 = arith.constant dense<0xFF800000> : vector<8xf32>
    %7 = vector.multi_reduction <maximumf>, %6, %cst_6 [1] : vector<8x8xf32> to vector<8xf32>
    %8 = vector.shape_cast %7 : vector<8xf32> to vector<8x1xf32>
    %9 = vector.broadcast %8 : vector<8x1xf32> to vector<8x8xf32>
    %10 = arith.subf %6, %9 : vector<8x8xf32>
    %11 = math.exp %10 : vector<8x8xf32>
    %cst_7 = arith.constant dense<0.000000e+00> : vector<8xf32>
    %12 = vector.multi_reduction <add>, %11, %cst_7 [1] : vector<8x8xf32> to vector<8xf32>
    %13 = vector.shape_cast %12 : vector<8xf32> to vector<8x1xf32>
    %14 = arith.truncf %11 : vector<8x8xf32> to vector<8x8xbf16>
    %cst_8 = arith.constant dense<0.000000e+00> : vector<8x2xf32>
    %15 = tpu.matmul %14, %5, %cst_8 {dimension_numbers = #tpu.dot_dimension_numbers<[1], [0], [0], [1], [0, 0, 1, 1], [], []>} : vector<8x8xbf16>, vector<8x2xbf16>, vector<8x2xf32> -> vector<8x2xf32>
    %16 = tpu.reciprocal %13 {approx = true} : vector<8x1xf32> -> vector<8x1xf32>
    %17 = vector.broadcast %16 : vector<8x1xf32> to vector<8x2xf32>
    %18 = arith.mulf %15, %17 : vector<8x2xf32>
    %c0_9 = arith.constant 0 : index
    %c0_10 = arith.constant 0 : index
    %c2 = arith.constant 2 : index
    %19 = vector.load %arg1[%c0_9, %c0_10, %c2] : memref<1x8x24xbf16, #tpu.memory_space<vmem>>, vector<1x8x2xbf16>
    %20 = vector.shape_cast %19 : vector<1x8x2xbf16> to vector<8x2xbf16>
    %c0_11 = arith.constant 0 : index
    %c0_12 = arith.constant 0 : index
    %c10 = arith.constant 10 : index
    %21 = vector.load %arg1[%c0_11, %c0_12, %c10] : memref<1x8x24xbf16, #tpu.memory_space<vmem>>, vector<1x8x2xbf16>
    %22 = vector.shape_cast %21 : vector<1x8x2xbf16> to vector<8x2xbf16>
    %c0_13 = arith.constant 0 : index
    %c0_14 = arith.constant 0 : index
    %c18 = arith.constant 18 : index
    %23 = vector.load %arg1[%c0_13, %c0_14, %c18] : memref<1x8x24xbf16, #tpu.memory_space<vmem>>, vector<1x8x2xbf16>
    %24 = vector.shape_cast %23 : vector<1x8x2xbf16> to vector<8x2xbf16>
    %cst_15 = arith.constant dense<0.000000e+00> : vector<8x8xf32>
    %25 = tpu.matmul %20, %22, %cst_15 {dimension_numbers = #tpu.dot_dimension_numbers<[1], [1], [0], [0], [0, 0, 1, 0], [], []>} : vector<8x2xbf16>, vector<8x2xbf16>, vector<8x8xf32> -> vector<8x8xf32>
    %cst_16 = arith.constant dense<0xFF800000> : vector<8xf32>
    %26 = vector.multi_reduction <maximumf>, %25, %cst_16 [1] : vector<8x8xf32> to vector<8xf32>
    %27 = vector.shape_cast %26 : vector<8xf32> to vector<8x1xf32>
    %28 = vector.broadcast %27 : vector<8x1xf32> to vector<8x8xf32>
    %29 = arith.subf %25, %28 : vector<8x8xf32>
    %30 = math.exp %29 : vector<8x8xf32>
    %cst_17 = arith.constant dense<0.000000e+00> : vector<8xf32>
    %31 = vector.multi_reduction <add>, %30, %cst_17 [1] : vector<8x8xf32> to vector<8xf32>
    %32 = vector.shape_cast %31 : vector<8xf32> to vector<8x1xf32>
    %33 = arith.truncf %30 : vector<8x8xf32> to vector<8x8xbf16>
    %cst_18 = arith.constant dense<0.000000e+00> : vector<8x2xf32>
    %34 = tpu.matmul %33, %24, %cst_18 {dimension_numbers = #tpu.dot_dimension_numbers<[1], [0], [0], [1], [0, 0, 1, 1], [], []>} : vector<8x8xbf16>, vector<8x2xbf16>, vector<8x2xf32> -> vector<8x2xf32>
    %35 = tpu.reciprocal %32 {approx = true} : vector<8x1xf32> -> vector<8x1xf32>
    %36 = vector.broadcast %35 : vector<8x1xf32> to vector<8x2xf32>
    %37 = arith.mulf %34, %36 : vector<8x2xf32>
    %c0_19 = arith.constant 0 : index
    %c0_20 = arith.constant 0 : index
    %c4 = arith.constant 4 : index
    %38 = vector.load %arg1[%c0_19, %c0_20, %c4] : memref<1x8x24xbf16, #tpu.memory_space<vmem>>, vector<1x8x2xbf16>
    %39 = vector.shape_cast %38 : vector<1x8x2xbf16> to vector<8x2xbf16>
    %c0_21 = arith.constant 0 : index
    %c0_22 = arith.constant 0 : index
    %c12 = arith.constant 12 : index
    %40 = vector.load %arg1[%c0_21, %c0_22, %c12] : memref<1x8x24xbf16, #tpu.memory_space<vmem>>, vector<1x8x2xbf16>
    %41 = vector.shape_cast %40 : vector<1x8x2xbf16> to vector<8x2xbf16>
    %c0_23 = arith.constant 0 : index
    %c0_24 = arith.constant 0 : index
    %c20 = arith.constant 20 : index
    %42 = vector.load %arg1[%c0_23, %c0_24, %c20] : memref<1x8x24xbf16, #tpu.memory_space<vmem>>, vector<1x8x2xbf16>
    %43 = vector.shape_cast %42 : vector<1x8x2xbf16> to vector<8x2xbf16>
    %cst_25 = arith.constant dense<0.000000e+00> : vector<8x8xf32>
    %44 = tpu.matmul %39, %41, %cst_25 {dimension_numbers = #tpu.dot_dimension_numbers<[1], [1], [0], [0], [0, 0, 1, 0], [], []>} : vector<8x2xbf16>, vector<8x2xbf16>, vector<8x8xf32> -> vector<8x8xf32>
    %cst_26 = arith.constant dense<0xFF800000> : vector<8xf32>
    %45 = vector.multi_reduction <maximumf>, %44, %cst_26 [1] : vector<8x8xf32> to vector<8xf32>
    %46 = vector.shape_cast %45 : vector<8xf32> to vector<8x1xf32>
    %47 = vector.broadcast %46 : vector<8x1xf32> to vector<8x8xf32>
    %48 = arith.subf %44, %47 : vector<8x8xf32>
    %49 = math.exp %48 : vector<8x8xf32>
    %cst_27 = arith.constant dense<0.000000e+00> : vector<8xf32>
    %50 = vector.multi_reduction <add>, %49, %cst_27 [1] : vector<8x8xf32> to vector<8xf32>
    %51 = vector.shape_cast %50 : vector<8xf32> to vector<8x1xf32>
    %52 = arith.truncf %49 : vector<8x8xf32> to vector<8x8xbf16>
    %cst_28 = arith.constant dense<0.000000e+00> : vector<8x2xf32>
    %53 = tpu.matmul %52, %43, %cst_28 {dimension_numbers = #tpu.dot_dimension_numbers<[1], [0], [0], [1], [0, 0, 1, 1], [], []>} : vector<8x8xbf16>, vector<8x2xbf16>, vector<8x2xf32> -> vector<8x2xf32>
    %54 = tpu.reciprocal %51 {approx = true} : vector<8x1xf32> -> vector<8x1xf32>
    %55 = vector.broadcast %54 : vector<8x1xf32> to vector<8x2xf32>
    %56 = arith.mulf %53, %55 : vector<8x2xf32>
    %c0_29 = arith.constant 0 : index
    %c0_30 = arith.constant 0 : index
    %c6 = arith.constant 6 : index
    %57 = vector.load %arg1[%c0_29, %c0_30, %c6] : memref<1x8x24xbf16, #tpu.memory_space<vmem>>, vector<1x8x2xbf16>
    %58 = vector.shape_cast %57 : vector<1x8x2xbf16> to vector<8x2xbf16>
    %c0_31 = arith.constant 0 : index
    %c0_32 = arith.constant 0 : index
    %c14 = arith.constant 14 : index
    %59 = vector.load %arg1[%c0_31, %c0_32, %c14] : memref<1x8x24xbf16, #tpu.memory_space<vmem>>, vector<1x8x2xbf16>
    %60 = vector.shape_cast %59 : vector<1x8x2xbf16> to vector<8x2xbf16>
    %c0_33 = arith.constant 0 : index
    %c0_34 = arith.constant 0 : index
    %c22 = arith.constant 22 : index
    %61 = vector.load %arg1[%c0_33, %c0_34, %c22] : memref<1x8x24xbf16, #tpu.memory_space<vmem>>, vector<1x8x2xbf16>
    %62 = vector.shape_cast %61 : vector<1x8x2xbf16> to vector<8x2xbf16>
    %cst_35 = arith.constant dense<0.000000e+00> : vector<8x8xf32>
    %63 = tpu.matmul %58, %60, %cst_35 {dimension_numbers = #tpu.dot_dimension_numbers<[1], [1], [0], [0], [0, 0, 1, 0], [], []>} : vector<8x2xbf16>, vector<8x2xbf16>, vector<8x8xf32> -> vector<8x8xf32>
    %cst_36 = arith.constant dense<0xFF800000> : vector<8xf32>
    %64 = vector.multi_reduction <maximumf>, %63, %cst_36 [1] : vector<8x8xf32> to vector<8xf32>
    %65 = vector.shape_cast %64 : vector<8xf32> to vector<8x1xf32>
    %66 = vector.broadcast %65 : vector<8x1xf32> to vector<8x8xf32>
    %67 = arith.subf %63, %66 : vector<8x8xf32>
    %68 = math.exp %67 : vector<8x8xf32>
    %cst_37 = arith.constant dense<0.000000e+00> : vector<8xf32>
    %69 = vector.multi_reduction <add>, %68, %cst_37 [1] : vector<8x8xf32> to vector<8xf32>
    %70 = vector.shape_cast %69 : vector<8xf32> to vector<8x1xf32>
    %71 = arith.truncf %68 : vector<8x8xf32> to vector<8x8xbf16>
    %cst_38 = arith.constant dense<0.000000e+00> : vector<8x2xf32>
    %72 = tpu.matmul %71, %62, %cst_38 {dimension_numbers = #tpu.dot_dimension_numbers<[1], [0], [0], [1], [0, 0, 1, 1], [], []>} : vector<8x8xbf16>, vector<8x2xbf16>, vector<8x2xf32> -> vector<8x2xf32>
    %73 = tpu.reciprocal %70 {approx = true} : vector<8x1xf32> -> vector<8x1xf32>
    %74 = vector.broadcast %73 : vector<8x1xf32> to vector<8x2xf32>
    %75 = arith.mulf %72, %74 : vector<8x2xf32>
    %76 = tpu.concatenate %18, %37, %56, %75 in 1 : vector<8x2xf32>, vector<8x2xf32>, vector<8x2xf32>, vector<8x2xf32> -> vector<8x8xf32>
    %77 = arith.truncf %76 : vector<8x8xf32> to vector<8x8xbf16>
    %c0_39 = arith.constant 0 : index
    %c0_40 = arith.constant 0 : index
    %c0_41 = arith.constant 0 : index
    %78 = vector.load %arg2[%c0_39, %c0_40, %c0_41] : memref<1x8x8xbf16, #tpu.memory_space<vmem>>, vector<1x8x8xbf16>
    %79 = vector.shape_cast %78 : vector<1x8x8xbf16> to vector<8x8xbf16>
    %80 = vector.shape_cast %77 : vector<8x8xbf16> to vector<1x8x8xbf16>
    tpu.vector_store %arg2[%c0_39, %c0_40, %c0_41], %80 {strides = array<i32>} : memref<1x8x8xbf16, #tpu.memory_space<vmem>>, vector<1x8x8xbf16>,
    return
  }
  func.func @transform_0(%arg0: i32) -> (i32, i32, i32) {
    %c0_i32 = arith.constant 0 : i32
    %c0_i32_0 = arith.constant 0 : i32
    %c0_i32_1 = arith.constant 0 : i32
    return %arg0, %c0_i32, %c0_i32_0 : i32, i32, i32
  }
  func.func @transform_1(%arg0: i32) -> (i32, i32, i32) {
    %c0_i32 = arith.constant 0 : i32
    %c0_i32_0 = arith.constant 0 : i32
    %c0_i32_1 = arith.constant 0 : i32
    return %arg0, %c0_i32, %c0_i32_0 : i32, i32, i32
  }
}

module attributes {stable_mosaic.version = 11 : i64} {
  func.func @_conv_kernel(%arg0: i32, %arg1: memref<1x2x2x4x4x1xbf16, #tpu.memory_space<vmem>>, %arg2: memref<9x4xbf16, #tpu.memory_space<vmem>>, %arg3: memref<1x4xf32, #tpu.memory_space<vmem>>, %arg4: memref<1x3x3x4xbf16, #tpu.memory_space<vmem>>) attributes {dimension_semantics = [#tpu.dimension_semantics<parallel>], iteration_bounds = array<i64: 2>, scalar_prefetch = 0 : i64, scratch_operands = 0 : i64, tpu.core_type = #tpu.core_type<tc>, window_params = [{transform_indices = @transform_0, window_bounds = array<i64: 1, 2, 2, 4, 4, 1>}, {pipeline_mode = #tpu.pipeline_mode<synchronous>, transform_indices = @transform_1, window_bounds = array<i64: 9, 4>}, {pipeline_mode = #tpu.pipeline_mode<synchronous>, transform_indices = @transform_2, window_bounds = array<i64: 1, 4>}, {transform_indices = @transform_3, window_bounds = array<i64: 1, 3, 3, 4>}]} {
    %c0 = arith.constant 0 : index
    %c0_0 = arith.constant 0 : index
    %0 = vector.load %arg3[%c0, %c0_0] : memref<1x4xf32, #tpu.memory_space<vmem>>, vector<1x4xf32>
    %c0_i32 = arith.constant 0 : i32
    %c3_i32 = arith.constant 3 : i32
    %1 = arith.addi %c0_i32, %c3_i32 : i32
    %c1_i32 = arith.constant 1 : i32
    scf.for %arg5 = %c0_i32 to %1 step %c1_i32  : i32 {
      %c0_i32_2 = arith.constant 0 : i32
      %2 = arith.addi %c0_i32_2, %arg5 : i32
      %c0_3 = arith.constant 0 : index
      %c0_4 = arith.constant 0 : index
      %c0_5 = arith.constant 0 : index
      %3 = arith.index_cast %2 : i32 to index
      %c0_6 = arith.constant 0 : index
      %c0_7 = arith.constant 0 : index
      %4 = vector.load %arg1[%c0_3, %c0_4, %c0_5, %3, %c0_6, %c0_7] : memref<1x2x2x4x4x1xbf16, #tpu.memory_space<vmem>>, vector<1x1x1x1x3x1xbf16>
      %5 = vector.shape_cast %4 : vector<1x1x1x1x3x1xbf16> to vector<3x1xbf16>
      %c0_i32_8 = arith.constant 0 : i32
      %6 = arith.addi %c0_i32_8, %arg5 : i32
      %c0_9 = arith.constant 0 : index
      %c0_10 = arith.constant 0 : index
      %c1 = arith.constant 1 : index
      %7 = arith.index_cast %6 : i32 to index
      %c0_11 = arith.constant 0 : index
      %c0_12 = arith.constant 0 : index
      %8 = vector.load %arg1[%c0_9, %c0_10, %c1, %7, %c0_11, %c0_12] : memref<1x2x2x4x4x1xbf16, #tpu.memory_space<vmem>>, vector<1x1x1x1x3x1xbf16>
      %9 = vector.shape_cast %8 : vector<1x1x1x1x3x1xbf16> to vector<3x1xbf16>
      %c0_i32_13 = arith.constant 0 : i32
      %10 = arith.addi %c0_i32_13, %arg5 : i32
      %c0_14 = arith.constant 0 : index
      %c0_15 = arith.constant 0 : index
      %c0_16 = arith.constant 0 : index
      %11 = arith.index_cast %10 : i32 to index
      %c1_17 = arith.constant 1 : index
      %c0_18 = arith.constant 0 : index
      %12 = vector.load %arg1[%c0_14, %c0_15, %c0_16, %11, %c1_17, %c0_18] : memref<1x2x2x4x4x1xbf16, #tpu.memory_space<vmem>>, vector<1x1x1x1x3x1xbf16>
      %13 = vector.shape_cast %12 : vector<1x1x1x1x3x1xbf16> to vector<3x1xbf16>
      %c0_i32_19 = arith.constant 0 : i32
      %14 = arith.addi %c0_i32_19, %arg5 : i32
      %c0_20 = arith.constant 0 : index
      %c1_21 = arith.constant 1 : index
      %c0_22 = arith.constant 0 : index
      %15 = arith.index_cast %14 : i32 to index
      %c0_23 = arith.constant 0 : index
      %c0_24 = arith.constant 0 : index
      %16 = vector.load %arg1[%c0_20, %c1_21, %c0_22, %15, %c0_23, %c0_24] : memref<1x2x2x4x4x1xbf16, #tpu.memory_space<vmem>>, vector<1x1x1x1x3x1xbf16>
      %17 = vector.shape_cast %16 : vector<1x1x1x1x3x1xbf16> to vector<3x1xbf16>
      %c0_i32_25 = arith.constant 0 : i32
      %18 = arith.addi %c0_i32_25, %arg5 : i32
      %c0_26 = arith.constant 0 : index
      %c1_27 = arith.constant 1 : index
      %c1_28 = arith.constant 1 : index
      %19 = arith.index_cast %18 : i32 to index
      %c0_29 = arith.constant 0 : index
      %c0_30 = arith.constant 0 : index
      %20 = vector.load %arg1[%c0_26, %c1_27, %c1_28, %19, %c0_29, %c0_30] : memref<1x2x2x4x4x1xbf16, #tpu.memory_space<vmem>>, vector<1x1x1x1x3x1xbf16>
      %21 = vector.shape_cast %20 : vector<1x1x1x1x3x1xbf16> to vector<3x1xbf16>
      %c0_i32_31 = arith.constant 0 : i32
      %22 = arith.addi %c0_i32_31, %arg5 : i32
      %c0_32 = arith.constant 0 : index
      %c1_33 = arith.constant 1 : index
      %c0_34 = arith.constant 0 : index
      %23 = arith.index_cast %22 : i32 to index
      %c1_35 = arith.constant 1 : index
      %c0_36 = arith.constant 0 : index
      %24 = vector.load %arg1[%c0_32, %c1_33, %c0_34, %23, %c1_35, %c0_36] : memref<1x2x2x4x4x1xbf16, #tpu.memory_space<vmem>>, vector<1x1x1x1x3x1xbf16>
      %25 = vector.shape_cast %24 : vector<1x1x1x1x3x1xbf16> to vector<3x1xbf16>
      %c1_i32_37 = arith.constant 1 : i32
      %26 = arith.addi %c1_i32_37, %arg5 : i32
      %c0_38 = arith.constant 0 : index
      %c0_39 = arith.constant 0 : index
      %c0_40 = arith.constant 0 : index
      %27 = arith.index_cast %26 : i32 to index
      %c0_41 = arith.constant 0 : index
      %c0_42 = arith.constant 0 : index
      %28 = vector.load %arg1[%c0_38, %c0_39, %c0_40, %27, %c0_41, %c0_42] : memref<1x2x2x4x4x1xbf16, #tpu.memory_space<vmem>>, vector<1x1x1x1x3x1xbf16>
      %29 = vector.shape_cast %28 : vector<1x1x1x1x3x1xbf16> to vector<3x1xbf16>
      %c1_i32_43 = arith.constant 1 : i32
      %30 = arith.addi %c1_i32_43, %arg5 : i32
      %c0_44 = arith.constant 0 : index
      %c0_45 = arith.constant 0 : index
      %c1_46 = arith.constant 1 : index
      %31 = arith.index_cast %30 : i32 to index
      %c0_47 = arith.constant 0 : index
      %c0_48 = arith.constant 0 : index
      %32 = vector.load %arg1[%c0_44, %c0_45, %c1_46, %31, %c0_47, %c0_48] : memref<1x2x2x4x4x1xbf16, #tpu.memory_space<vmem>>, vector<1x1x1x1x3x1xbf16>
      %33 = vector.shape_cast %32 : vector<1x1x1x1x3x1xbf16> to vector<3x1xbf16>
      %c1_i32_49 = arith.constant 1 : i32
      %34 = arith.addi %c1_i32_49, %arg5 : i32
      %c0_50 = arith.constant 0 : index
      %c0_51 = arith.constant 0 : index
      %c0_52 = arith.constant 0 : index
      %35 = arith.index_cast %34 : i32 to index
      %c1_53 = arith.constant 1 : index
      %c0_54 = arith.constant 0 : index
      %36 = vector.load %arg1[%c0_50, %c0_51, %c0_52, %35, %c1_53, %c0_54] : memref<1x2x2x4x4x1xbf16, #tpu.memory_space<vmem>>, vector<1x1x1x1x3x1xbf16>
      %37 = vector.shape_cast %36 : vector<1x1x1x1x3x1xbf16> to vector<3x1xbf16>
      %38 = tpu.concatenate %5, %9, %13, %17, %21, %25, %29, %33, %37 in 1 : vector<3x1xbf16>, vector<3x1xbf16>, vector<3x1xbf16>, vector<3x1xbf16>, vector<3x1xbf16>, vector<3x1xbf16>, vector<3x1xbf16>, vector<3x1xbf16>, vector<3x1xbf16> -> vector<3x9xbf16>
      %c0_55 = arith.constant 0 : index
      %c0_56 = arith.constant 0 : index
      %39 = vector.load %arg2[%c0_55, %c0_56] : memref<9x4xbf16, #tpu.memory_space<vmem>>, vector<9x4xbf16>
      %cst = arith.constant dense<0.000000e+00> : vector<3x4xf32>
      %40 = tpu.matmul %38, %39, %cst {dimension_numbers = #tpu.dot_dimension_numbers<[1], [0], [0], [1], [0, 0, 1, 1], [], []>} : vector<3x9xbf16>, vector<9x4xbf16>, vector<3x4xf32> -> vector<3x4xf32>
      %41 = vector.broadcast %0 : vector<1x4xf32> to vector<3x4xf32>
      %42 = arith.addf %40, %41 : vector<3x4xf32>
      %cst_57 = arith.constant 0.000000e+00 : f32
      %43 = vector.broadcast %cst_57 : f32 to vector<3x4xf32>
      %44 = arith.maximumf %42, %43 : vector<3x4xf32>
      %45 = arith.truncf %44 : vector<3x4xf32> to vector<3x4xbf16>
      %c0_58 = arith.constant 0 : index
      %46 = arith.index_cast %arg5 : i32 to index
      %c0_59 = arith.constant 0 : index
      %c0_60 = arith.constant 0 : index
      %47 = vector.load %arg4[%c0_58, %46, %c0_59, %c0_60] : memref<1x3x3x4xbf16, #tpu.memory_space<vmem>>, vector<1x1x3x4xbf16>
      %48 = vector.shape_cast %47 : vector<1x1x3x4xbf16> to vector<3x4xbf16>
      %49 = vector.shape_cast %45 : vector<3x4xbf16> to vector<1x1x3x4xbf16>
      tpu.vector_store %arg4[%c0_58, %46, %c0_59, %c0_60], %49 {strides = array<i32>} : memref<1x3x3x4xbf16, #tpu.memory_space<vmem>>, vector<1x1x3x4xbf16>,
    }
    %c3_i32_1 = arith.constant 3 : i32
    return
  }
  func.func @transform_0(%arg0: i32) -> (i32, i32, i32, i32, i32, i32) {
    %c0_i32 = arith.constant 0 : i32
    %c0_i32_0 = arith.constant 0 : i32
    %c0_i32_1 = arith.constant 0 : i32
    %c0_i32_2 = arith.constant 0 : i32
    %c0_i32_3 = arith.constant 0 : i32
    %c0_i32_4 = arith.constant 0 : i32
    return %arg0, %c0_i32, %c0_i32_0, %c0_i32_1, %c0_i32_2, %c0_i32_3 : i32, i32, i32, i32, i32, i32
  }
  func.func @transform_1(%arg0: i32) -> (i32, i32) {
    %c0_i32 = arith.constant 0 : i32
    %c0_i32_0 = arith.constant 0 : i32
    %c0_i32_1 = arith.constant 0 : i32
    return %c0_i32, %c0_i32_0 : i32, i32
  }
  func.func @transform_2(%arg0: i32) -> (i32, i32) {
    %c0_i32 = arith.constant 0 : i32
    %c0_i32_0 = arith.constant 0 : i32
    %c0_i32_1 = arith.constant 0 : i32
    return %c0_i32, %c0_i32_0 : i32, i32
  }
  func.func @transform_3(%arg0: i32) -> (i32, i32, i32, i32) {
    %c0_i32 = arith.constant 0 : i32
    %c0_i32_0 = arith.constant 0 : i32
    %c0_i32_1 = arith.constant 0 : i32
    %c0_i32_2 = arith.constant 0 : i32
    return %arg0, %c0_i32, %c0_i32_0, %c0_i32_1 : i32, i32, i32, i32
  }
}

module attributes {stable_mosaic.version = 11 : i64} {
  func.func @_conv_kernel(%arg0: i32, %arg1: memref<1x2x2x4x4x1xbf16, #tpu.memory_space<vmem>>, %arg2: memref<1x4xbf16, #tpu.memory_space<vmem>>, %arg3: memref<1x4xf32, #tpu.memory_space<vmem>>, %arg4: memref<1x4x4x4xbf16, #tpu.memory_space<vmem>>) attributes {dimension_semantics = [#tpu.dimension_semantics<parallel>], iteration_bounds = array<i64: 2>, scalar_prefetch = 0 : i64, scratch_operands = 0 : i64, tpu.core_type = #tpu.core_type<tc>, window_params = [{transform_indices = @transform_0, window_bounds = array<i64: 1, 2, 2, 4, 4, 1>}, {pipeline_mode = #tpu.pipeline_mode<synchronous>, transform_indices = @transform_1, window_bounds = array<i64: 1, 4>}, {pipeline_mode = #tpu.pipeline_mode<synchronous>, transform_indices = @transform_2, window_bounds = array<i64: 1, 4>}, {transform_indices = @transform_3, window_bounds = array<i64: 1, 4, 4, 4>}]} {
    %c0 = arith.constant 0 : index
    %c0_0 = arith.constant 0 : index
    %0 = vector.load %arg3[%c0, %c0_0] : memref<1x4xf32, #tpu.memory_space<vmem>>, vector<1x4xf32>
    %c0_i32 = arith.constant 0 : i32
    %c4_i32 = arith.constant 4 : i32
    %1 = arith.addi %c0_i32, %c4_i32 : i32
    %c1_i32 = arith.constant 1 : i32
    scf.for %arg5 = %c0_i32 to %1 step %c1_i32  : i32 {
      %c0_i32_2 = arith.constant 0 : i32
      %2 = arith.addi %c0_i32_2, %arg5 : i32
      %c0_3 = arith.constant 0 : index
      %c0_4 = arith.constant 0 : index
      %c0_5 = arith.constant 0 : index
      %3 = arith.index_cast %2 : i32 to index
      %c0_6 = arith.constant 0 : index
      %c0_7 = arith.constant 0 : index
      %4 = vector.load %arg1[%c0_3, %c0_4, %c0_5, %3, %c0_6, %c0_7] : memref<1x2x2x4x4x1xbf16, #tpu.memory_space<vmem>>, vector<1x1x1x1x4x1xbf16>
      %5 = vector.shape_cast %4 : vector<1x1x1x1x4x1xbf16> to vector<4x1xbf16>
      %c0_8 = arith.constant 0 : index
      %c0_9 = arith.constant 0 : index
      %6 = vector.load %arg2[%c0_8, %c0_9] : memref<1x4xbf16, #tpu.memory_space<vmem>>, vector<1x4xbf16>
      %cst = arith.constant dense<0.000000e+00> : vector<4x4xf32>
      %7 = tpu.matmul %5, %6, %cst {dimension_numbers = #tpu.dot_dimension_numbers<[1], [0], [0], [1], [0, 0, 1, 1], [], []>} : vector<4x1xbf16>, vector<1x4xbf16>, vector<4x4xf32> -> vector<4x4xf32>
      %8 = vector.broadcast %0 : vector<1x4xf32> to vector<4x4xf32>
      %9 = arith.addf %7, %8 : vector<4x4xf32>
      %10 = arith.truncf %9 : vector<4x4xf32> to vector<4x4xbf16>
      %c0_10 = arith.constant 0 : index
      %11 = arith.index_cast %arg5 : i32 to index
      %c0_11 = arith.constant 0 : index
      %c0_12 = arith.constant 0 : index
      %12 = vector.load %arg4[%c0_10, %11, %c0_11, %c0_12] : memref<1x4x4x4xbf16, #tpu.memory_space<vmem>>, vector<1x1x4x4xbf16>
      %13 = vector.shape_cast %12 : vector<1x1x4x4xbf16> to vector<4x4xbf16>
      %14 = vector.shape_cast %10 : vector<4x4xbf16> to vector<1x1x4x4xbf16>
      tpu.vector_store %arg4[%c0_10, %11, %c0_11, %c0_12], %14 {strides = array<i32>} : memref<1x4x4x4xbf16, #tpu.memory_space<vmem>>, vector<1x1x4x4xbf16>,
    }
    %c4_i32_1 = arith.constant 4 : i32
    return
  }
  func.func @transform_0(%arg0: i32) -> (i32, i32, i32, i32, i32, i32) {
    %c0_i32 = arith.constant 0 : i32
    %c0_i32_0 = arith.constant 0 : i32
    %c0_i32_1 = arith.constant 0 : i32
    %c0_i32_2 = arith.constant 0 : i32
    %c0_i32_3 = arith.constant 0 : i32
    %c0_i32_4 = arith.constant 0 : i32
    return %arg0, %c0_i32, %c0_i32_0, %c0_i32_1, %c0_i32_2, %c0_i32_3 : i32, i32, i32, i32, i32, i32
  }
  func.func @transform_1(%arg0: i32) -> (i32, i32) {
    %c0_i32 = arith.constant 0 : i32
    %c0_i32_0 = arith.constant 0 : i32
    %c0_i32_1 = arith.constant 0 : i32
    return %c0_i32, %c0_i32_0 : i32, i32
  }
  func.func @transform_2(%arg0: i32) -> (i32, i32) {
    %c0_i32 = arith.constant 0 : i32
    %c0_i32_0 = arith.constant 0 : i32
    %c0_i32_1 = arith.constant 0 : i32
    return %c0_i32, %c0_i32_0 : i32, i32
  }
  func.func @transform_3(%arg0: i32) -> (i32, i32, i32, i32) {
    %c0_i32 = arith.constant 0 : i32
    %c0_i32_0 = arith.constant 0 : i32
    %c0_i32_1 = arith.constant 0 : i32
    %c0_i32_2 = arith.constant 0 : i32
    return %arg0, %c0_i32, %c0_i32_0, %c0_i32_1 : i32, i32, i32, i32
  }
}

module attributes {stable_mosaic.version = 11 : i64} {
  func.func @_add_relu_kernel(%arg0: i32, %arg1: memref<1x1x1x4xbf16, #tpu.memory_space<vmem>>, %arg2: memref<1x4x4x4xbf16, #tpu.memory_space<vmem>>, %arg3: memref<1x4x4x4xbf16, #tpu.memory_space<vmem>>) attributes {dimension_semantics = [#tpu.dimension_semantics<parallel>], iteration_bounds = array<i64: 2>, scalar_prefetch = 0 : i64, scratch_operands = 0 : i64, tpu.core_type = #tpu.core_type<tc>, window_params = [{transform_indices = @transform_0, window_bounds = array<i64: 1, 1, 1, 4>}, {transform_indices = @transform_1, window_bounds = array<i64: 1, 4, 4, 4>}, {transform_indices = @transform_2, window_bounds = array<i64: 1, 4, 4, 4>}]} {
    %c0 = arith.constant 0 : index
    %c0_0 = arith.constant 0 : index
    %c0_1 = arith.constant 0 : index
    %c0_2 = arith.constant 0 : index
    %0 = vector.load %arg1[%c0, %c0_0, %c0_1, %c0_2] : memref<1x1x1x4xbf16, #tpu.memory_space<vmem>>, vector<1x1x1x4xbf16>
    %1 = arith.extf %0 : vector<1x1x1x4xbf16> to vector<1x1x1x4xf32>
    %2 = vector.shape_cast %1 : vector<1x1x1x4xf32> to vector<1x1x1x4xf32>
    %3 = vector.broadcast %2 : vector<1x1x1x4xf32> to vector<1x4x4x4xf32>
    %c0_3 = arith.constant 0 : index
    %c0_4 = arith.constant 0 : index
    %c0_5 = arith.constant 0 : index
    %c0_6 = arith.constant 0 : index
    %4 = vector.load %arg2[%c0_3, %c0_4, %c0_5, %c0_6] : memref<1x4x4x4xbf16, #tpu.memory_space<vmem>>, vector<1x4x4x4xbf16>
    %5 = arith.extf %4 : vector<1x4x4x4xbf16> to vector<1x4x4x4xf32>
    %6 = arith.addf %3, %5 : vector<1x4x4x4xf32>
    %cst = arith.constant 0.000000e+00 : f32
    %7 = vector.broadcast %cst : f32 to vector<1x4x4x4xf32>
    %8 = arith.maximumf %6, %7 : vector<1x4x4x4xf32>
    %9 = arith.truncf %8 : vector<1x4x4x4xf32> to vector<1x4x4x4xbf16>
    %c0_7 = arith.constant 0 : index
    %c0_8 = arith.constant 0 : index
    %c0_9 = arith.constant 0 : index
    %c0_10 = arith.constant 0 : index
    %10 = vector.load %arg3[%c0_7, %c0_8, %c0_9, %c0_10] : memref<1x4x4x4xbf16, #tpu.memory_space<vmem>>, vector<1x4x4x4xbf16>
    tpu.vector_store %arg3[%c0_7, %c0_8, %c0_9, %c0_10], %9 {strides = array<i32>} : memref<1x4x4x4xbf16, #tpu.memory_space<vmem>>, vector<1x4x4x4xbf16>,
    return
  }
  func.func @transform_0(%arg0: i32) -> (i32, i32, i32, i32) {
    %c0_i32 = arith.constant 0 : i32
    %c0_i32_0 = arith.constant 0 : i32
    %c0_i32_1 = arith.constant 0 : i32
    %c0_i32_2 = arith.constant 0 : i32
    return %arg0, %c0_i32, %c0_i32_0, %c0_i32_1 : i32, i32, i32, i32
  }
  func.func @transform_1(%arg0: i32) -> (i32, i32, i32, i32) {
    %c0_i32 = arith.constant 0 : i32
    %c0_i32_0 = arith.constant 0 : i32
    %c0_i32_1 = arith.constant 0 : i32
    %c0_i32_2 = arith.constant 0 : i32
    return %arg0, %c0_i32, %c0_i32_0, %c0_i32_1 : i32, i32, i32, i32
  }
  func.func @transform_2(%arg0: i32) -> (i32, i32, i32, i32) {
    %c0_i32 = arith.constant 0 : i32
    %c0_i32_0 = arith.constant 0 : i32
    %c0_i32_1 = arith.constant 0 : i32
    %c0_i32_2 = arith.constant 0 : i32
    return %arg0, %c0_i32, %c0_i32_0, %c0_i32_1 : i32, i32, i32, i32
  }
}

module attributes {stable_mosaic.version = 11 : i64} {
  func.func @_conv_kernel(%arg0: i32, %arg1: memref<1x2x2x2x2x4xbf16, #tpu.memory_space<vmem>>, %arg2: memref<36x4xbf16, #tpu.memory_space<vmem>>, %arg3: memref<1x4xf32, #tpu.memory_space<vmem>>, %arg4: memref<1x1x1x4xbf16, #tpu.memory_space<vmem>>) attributes {dimension_semantics = [#tpu.dimension_semantics<parallel>], iteration_bounds = array<i64: 2>, scalar_prefetch = 0 : i64, scratch_operands = 0 : i64, tpu.core_type = #tpu.core_type<tc>, window_params = [{transform_indices = @transform_0, window_bounds = array<i64: 1, 2, 2, 2, 2, 4>}, {pipeline_mode = #tpu.pipeline_mode<synchronous>, transform_indices = @transform_1, window_bounds = array<i64: 36, 4>}, {pipeline_mode = #tpu.pipeline_mode<synchronous>, transform_indices = @transform_2, window_bounds = array<i64: 1, 4>}, {transform_indices = @transform_3, window_bounds = array<i64: 1, 1, 1, 4>}]} {
    %c0 = arith.constant 0 : index
    %c0_0 = arith.constant 0 : index
    %0 = vector.load %arg3[%c0, %c0_0] : memref<1x4xf32, #tpu.memory_space<vmem>>, vector<1x4xf32>
    %c0_i32 = arith.constant 0 : i32
    %c0_i32_1 = arith.constant 0 : i32
    %1 = arith.addi %c0_i32_1, %c0_i32 : i32
    %c0_2 = arith.constant 0 : index
    %c0_3 = arith.constant 0 : index
    %c0_4 = arith.constant 0 : index
    %2 = arith.index_cast %1 : i32 to index
    %c0_5 = arith.constant 0 : index
    %c0_6 = arith.constant 0 : index
    %3 = vector.load %arg1[%c0_2, %c0_3, %c0_4, %2, %c0_5, %c0_6] : memref<1x2x2x2x2x4xbf16, #tpu.memory_space<vmem>>, vector<1x1x1x1x1x4xbf16>
    %4 = vector.shape_cast %3 : vector<1x1x1x1x1x4xbf16> to vector<1x4xbf16>
    %c0_i32_7 = arith.constant 0 : i32
    %5 = arith.addi %c0_i32_7, %c0_i32 : i32
    %c0_8 = arith.constant 0 : index
    %c0_9 = arith.constant 0 : index
    %c1 = arith.constant 1 : index
    %6 = arith.index_cast %5 : i32 to index
    %c0_10 = arith.constant 0 : index
    %c0_11 = arith.constant 0 : index
    %7 = vector.load %arg1[%c0_8, %c0_9, %c1, %6, %c0_10, %c0_11] : memref<1x2x2x2x2x4xbf16, #tpu.memory_space<vmem>>, vector<1x1x1x1x1x4xbf16>
    %8 = vector.shape_cast %7 : vector<1x1x1x1x1x4xbf16> to vector<1x4xbf16>
    %c0_i32_12 = arith.constant 0 : i32
    %9 = arith.addi %c0_i32_12, %c0_i32 : i32
    %c0_13 = arith.constant 0 : index
    %c0_14 = arith.constant 0 : index
    %c0_15 = arith.constant 0 : index
    %10 = arith.index_cast %9 : i32 to index
    %c1_16 = arith.constant 1 : index
    %c0_17 = arith.constant 0 : index
    %11 = vector.load %arg1[%c0_13, %c0_14, %c0_15, %10, %c1_16, %c0_17] : memref<1x2x2x2x2x4xbf16, #tpu.memory_space<vmem>>, vector<1x1x1x1x1x4xbf16>
    %12 = vector.shape_cast %11 : vector<1x1x1x1x1x4xbf16> to vector<1x4xbf16>
    %c0_i32_18 = arith.constant 0 : i32
    %13 = arith.addi %c0_i32_18, %c0_i32 : i32
    %c0_19 = arith.constant 0 : index
    %c1_20 = arith.constant 1 : index
    %c0_21 = arith.constant 0 : index
    %14 = arith.index_cast %13 : i32 to index
    %c0_22 = arith.constant 0 : index
    %c0_23 = arith.constant 0 : index
    %15 = vector.load %arg1[%c0_19, %c1_20, %c0_21, %14, %c0_22, %c0_23] : memref<1x2x2x2x2x4xbf16, #tpu.memory_space<vmem>>, vector<1x1x1x1x1x4xbf16>
    %16 = vector.shape_cast %15 : vector<1x1x1x1x1x4xbf16> to vector<1x4xbf16>
    %c0_i32_24 = arith.constant 0 : i32
    %17 = arith.addi %c0_i32_24, %c0_i32 : i32
    %c0_25 = arith.constant 0 : index
    %c1_26 = arith.constant 1 : index
    %c1_27 = arith.constant 1 : index
    %18 = arith.index_cast %17 : i32 to index
    %c0_28 = arith.constant 0 : index
    %c0_29 = arith.constant 0 : index
    %19 = vector.load %arg1[%c0_25, %c1_26, %c1_27, %18, %c0_28, %c0_29] : memref<1x2x2x2x2x4xbf16, #tpu.memory_space<vmem>>, vector<1x1x1x1x1x4xbf16>
    %20 = vector.shape_cast %19 : vector<1x1x1x1x1x4xbf16> to vector<1x4xbf16>
    %c0_i32_30 = arith.constant 0 : i32
    %21 = arith.addi %c0_i32_30, %c0_i32 : i32
    %c0_31 = arith.constant 0 : index
    %c1_32 = arith.constant 1 : index
    %c0_33 = arith.constant 0 : index
    %22 = arith.index_cast %21 : i32 to index
    %c1_34 = arith.constant 1 : index
    %c0_35 = arith.constant 0 : index
    %23 = vector.load %arg1[%c0_31, %c1_32, %c0_33, %22, %c1_34, %c0_35] : memref<1x2x2x2x2x4xbf16, #tpu.memory_space<vmem>>, vector<1x1x1x1x1x4xbf16>
    %24 = vector.shape_cast %23 : vector<1x1x1x1x1x4xbf16> to vector<1x4xbf16>
    %c1_i32 = arith.constant 1 : i32
    %25 = arith.addi %c1_i32, %c0_i32 : i32
    %c0_36 = arith.constant 0 : index
    %c0_37 = arith.constant 0 : index
    %c0_38 = arith.constant 0 : index
    %26 = arith.index_cast %25 : i32 to index
    %c0_39 = arith.constant 0 : index
    %c0_40 = arith.constant 0 : index
    %27 = vector.load %arg1[%c0_36, %c0_37, %c0_38, %26, %c0_39, %c0_40] : memref<1x2x2x2x2x4xbf16, #tpu.memory_space<vmem>>, vector<1x1x1x1x1x4xbf16>
    %28 = vector.shape_cast %27 : vector<1x1x1x1x1x4xbf16> to vector<1x4xbf16>
    %c1_i32_41 = arith.constant 1 : i32
    %29 = arith.addi %c1_i32_41, %c0_i32 : i32
    %c0_42 = arith.constant 0 : index
    %c0_43 = arith.constant 0 : index
    %c1_44 = arith.constant 1 : index
    %30 = arith.index_cast %29 : i32 to index
    %c0_45 = arith.constant 0 : index
    %c0_46 = arith.constant 0 : index
    %31 = vector.load %arg1[%c0_42, %c0_43, %c1_44, %30, %c0_45, %c0_46] : memref<1x2x2x2x2x4xbf16, #tpu.memory_space<vmem>>, vector<1x1x1x1x1x4xbf16>
    %32 = vector.shape_cast %31 : vector<1x1x1x1x1x4xbf16> to vector<1x4xbf16>
    %c1_i32_47 = arith.constant 1 : i32
    %33 = arith.addi %c1_i32_47, %c0_i32 : i32
    %c0_48 = arith.constant 0 : index
    %c0_49 = arith.constant 0 : index
    %c0_50 = arith.constant 0 : index
    %34 = arith.index_cast %33 : i32 to index
    %c1_51 = arith.constant 1 : index
    %c0_52 = arith.constant 0 : index
    %35 = vector.load %arg1[%c0_48, %c0_49, %c0_50, %34, %c1_51, %c0_52] : memref<1x2x2x2x2x4xbf16, #tpu.memory_space<vmem>>, vector<1x1x1x1x1x4xbf16>
    %36 = vector.shape_cast %35 : vector<1x1x1x1x1x4xbf16> to vector<1x4xbf16>
    %37 = tpu.concatenate %4, %8, %12, %16, %20, %24, %28, %32, %36 in 1 : vector<1x4xbf16>, vector<1x4xbf16>, vector<1x4xbf16>, vector<1x4xbf16>, vector<1x4xbf16>, vector<1x4xbf16>, vector<1x4xbf16>, vector<1x4xbf16>, vector<1x4xbf16> -> vector<1x36xbf16>
    %c0_53 = arith.constant 0 : index
    %c0_54 = arith.constant 0 : index
    %38 = vector.load %arg2[%c0_53, %c0_54] : memref<36x4xbf16, #tpu.memory_space<vmem>>, vector<36x4xbf16>
    %cst = arith.constant dense<0.000000e+00> : vector<1x4xf32>
    %39 = tpu.matmul %37, %38, %cst {dimension_numbers = #tpu.dot_dimension_numbers<[1], [0], [0], [1], [0, 0, 1, 1], [], []>} : vector<1x36xbf16>, vector<36x4xbf16>, vector<1x4xf32> -> vector<1x4xf32>
    %40 = arith.addf %39, %0 : vector<1x4xf32>
    %cst_55 = arith.constant 0.000000e+00 : f32
    %41 = vector.broadcast %cst_55 : f32 to vector<1x4xf32>
    %42 = arith.maximumf %40, %41 : vector<1x4xf32>
    %43 = arith.truncf %42 : vector<1x4xf32> to vector<1x4xbf16>
    %c0_56 = arith.constant 0 : index
    %44 = arith.index_cast %c0_i32 : i32 to index
    %c0_57 = arith.constant 0 : index
    %c0_58 = arith.constant 0 : index
    %45 = vector.load %arg4[%c0_56, %44, %c0_57, %c0_58] : memref<1x1x1x4xbf16, #tpu.memory_space<vmem>>, vector<1x1x1x4xbf16>
    %46 = vector.shape_cast %45 : vector<1x1x1x4xbf16> to vector<1x4xbf16>
    %47 = vector.shape_cast %43 : vector<1x4xbf16> to vector<1x1x1x4xbf16>
    tpu.vector_store %arg4[%c0_56, %44, %c0_57, %c0_58], %47 {strides = array<i32>} : memref<1x1x1x4xbf16, #tpu.memory_space<vmem>>, vector<1x1x1x4xbf16>,
    %c1_i32_59 = arith.constant 1 : i32
    return
  }
  func.func @transform_0(%arg0: i32) -> (i32, i32, i32, i32, i32, i32) {
    %c0_i32 = arith.constant 0 : i32
    %c0_i32_0 = arith.constant 0 : i32
    %c0_i32_1 = arith.constant 0 : i32
    %c0_i32_2 = arith.constant 0 : i32
    %c0_i32_3 = arith.constant 0 : i32
    %c0_i32_4 = arith.constant 0 : i32
    return %arg0, %c0_i32, %c0_i32_0, %c0_i32_1, %c0_i32_2, %c0_i32_3 : i32, i32, i32, i32, i32, i32
  }
  func.func @transform_1(%arg0: i32) -> (i32, i32) {
    %c0_i32 = arith.constant 0 : i32
    %c0_i32_0 = arith.constant 0 : i32
    %c0_i32_1 = arith.constant 0 : i32
    return %c0_i32, %c0_i32_0 : i32, i32
  }
  func.func @transform_2(%arg0: i32) -> (i32, i32) {
    %c0_i32 = arith.constant 0 : i32
    %c0_i32_0 = arith.constant 0 : i32
    %c0_i32_1 = arith.constant 0 : i32
    return %c0_i32, %c0_i32_0 : i32, i32
  }
  func.func @transform_3(%arg0: i32) -> (i32, i32, i32, i32) {
    %c0_i32 = arith.constant 0 : i32
    %c0_i32_0 = arith.constant 0 : i32
    %c0_i32_1 = arith.constant 0 : i32
    %c0_i32_2 = arith.constant 0 : i32
    return %arg0, %c0_i32, %c0_i32_0, %c0_i32_1 : i32, i32, i32, i32
  }
}

module attributes {stable_mosaic.version = 11 : i64} {
  func.func @_linear_kernel_fullk(%arg0: i32, %arg1: i32, %arg2: memref<8x128xbf16, #tpu.memory_space<vmem>>, %arg3: memref<128x512xbf16, #tpu.memory_space<vmem>>, %arg4: memref<1x512xf32, #tpu.memory_space<vmem>>, %arg5: memref<8x512xbf16, #tpu.memory_space<vmem>>) attributes {dimension_semantics = [#tpu.dimension_semantics<parallel>, #tpu.dimension_semantics<parallel>], iteration_bounds = array<i64: 1, 1>, scalar_prefetch = 0 : i64, scratch_operands = 0 : i64, tpu.core_type = #tpu.core_type<tc>, window_params = [{transform_indices = @transform_0, window_bounds = array<i64: 8, 128>}, {transform_indices = @transform_1, window_bounds = array<i64: 128, 512>}, {transform_indices = @transform_2, window_bounds = array<i64: 1, 512>}, {transform_indices = @transform_3, window_bounds = array<i64: 8, 512>}]} {
    %c0 = arith.constant 0 : index
    %c0_0 = arith.constant 0 : index
    %0 = vector.load %arg2[%c0, %c0_0] : memref<8x128xbf16, #tpu.memory_space<vmem>>, vector<8x128xbf16>
    %c0_1 = arith.constant 0 : index
    %c0_2 = arith.constant 0 : index
    %1 = vector.load %arg3[%c0_1, %c0_2] : memref<128x512xbf16, #tpu.memory_space<vmem>>, vector<128x512xbf16>
    %cst = arith.constant dense<0.000000e+00> : vector<8x512xf32>
    %2 = tpu.matmul %0, %1, %cst {dimension_numbers = #tpu.dot_dimension_numbers<[1], [0], [0], [1], [0, 0, 1, 1], [], []>} : vector<8x128xbf16>, vector<128x512xbf16>, vector<8x512xf32> -> vector<8x512xf32>
    %c0_3 = arith.constant 0 : index
    %c0_4 = arith.constant 0 : index
    %3 = vector.load %arg4[%c0_3, %c0_4] : memref<1x512xf32, #tpu.memory_space<vmem>>, vector<1x512xf32>
    %4 = vector.broadcast %3 : vector<1x512xf32> to vector<8x512xf32>
    %5 = arith.addf %2, %4 : vector<8x512xf32>
    %cst_5 = arith.constant 0.000000e+00 : f32
    %6 = vector.broadcast %cst_5 : f32 to vector<8x512xf32>
    %7 = arith.maximumf %5, %6 : vector<8x512xf32>
    %8 = arith.truncf %7 : vector<8x512xf32> to vector<8x512xbf16>
    %c0_6 = arith.constant 0 : index
    %c0_7 = arith.constant 0 : index
    %9 = vector.load %arg5[%c0_6, %c0_7] : memref<8x512xbf16, #tpu.memory_space<vmem>>, vector<8x512xbf16>
    tpu.vector_store %arg5[%c0_6, %c0_7], %8 {strides = array<i32>} : memref<8x512xbf16, #tpu.memory_space<vmem>>, vector<8x512xbf16>,
    return
  }
  func.func @transform_0(%arg0: i32, %arg1: i32) -> (i32, i32) {
    %c0_i32 = arith.constant 0 : i32
    %c0_i32_0 = arith.constant 0 : i32
    return %arg0, %c0_i32 : i32, i32
  }
  func.func @transform_1(%arg0: i32, %arg1: i32) -> (i32, i32) {
    %c0_i32 = arith.constant 0 : i32
    %c0_i32_0 = arith.constant 0 : i32
    return %c0_i32, %arg1 : i32, i32
  }
  func.func @transform_2(%arg0: i32, %arg1: i32) -> (i32, i32) {
    %c0_i32 = arith.constant 0 : i32
    %c0_i32_0 = arith.constant 0 : i32
    return %c0_i32, %arg1 : i32, i32
  }
  func.func @transform_3(%arg0: i32, %arg1: i32) -> (i32, i32) {
    %c0_i32 = arith.constant 0 : i32
    return %arg0, %arg1 : i32, i32
  }
}

module attributes {stable_mosaic.version = 11 : i64} {
  func.func @_linear_kernel_fullk(%arg0: i32, %arg1: i32, %arg2: memref<8x512xbf16, #tpu.memory_space<vmem>>, %arg3: memref<512x128xbf16, #tpu.memory_space<vmem>>, %arg4: memref<1x128xf32, #tpu.memory_space<vmem>>, %arg5: memref<8x128xf32, #tpu.memory_space<vmem>>) attributes {dimension_semantics = [#tpu.dimension_semantics<parallel>, #tpu.dimension_semantics<parallel>], iteration_bounds = array<i64: 1, 1>, scalar_prefetch = 0 : i64, scratch_operands = 0 : i64, tpu.core_type = #tpu.core_type<tc>, window_params = [{transform_indices = @transform_0, window_bounds = array<i64: 8, 512>}, {transform_indices = @transform_1, window_bounds = array<i64: 512, 128>}, {transform_indices = @transform_2, window_bounds = array<i64: 1, 128>}, {transform_indices = @transform_3, window_bounds = array<i64: 8, 128>}]} {
    %c0 = arith.constant 0 : index
    %c0_0 = arith.constant 0 : index
    %0 = vector.load %arg2[%c0, %c0_0] : memref<8x512xbf16, #tpu.memory_space<vmem>>, vector<8x512xbf16>
    %c0_1 = arith.constant 0 : index
    %c0_2 = arith.constant 0 : index
    %1 = vector.load %arg3[%c0_1, %c0_2] : memref<512x128xbf16, #tpu.memory_space<vmem>>, vector<512x128xbf16>
    %cst = arith.constant dense<0.000000e+00> : vector<8x128xf32>
    %2 = tpu.matmul %0, %1, %cst {dimension_numbers = #tpu.dot_dimension_numbers<[1], [0], [0], [1], [0, 0, 1, 1], [], []>} : vector<8x512xbf16>, vector<512x128xbf16>, vector<8x128xf32> -> vector<8x128xf32>
    %c0_3 = arith.constant 0 : index
    %c0_4 = arith.constant 0 : index
    %3 = vector.load %arg4[%c0_3, %c0_4] : memref<1x128xf32, #tpu.memory_space<vmem>>, vector<1x128xf32>
    %4 = vector.broadcast %3 : vector<1x128xf32> to vector<8x128xf32>
    %5 = arith.addf %2, %4 : vector<8x128xf32>
    %c0_5 = arith.constant 0 : index
    %c0_6 = arith.constant 0 : index
    %6 = vector.load %arg5[%c0_5, %c0_6] : memref<8x128xf32, #tpu.memory_space<vmem>>, vector<8x128xf32>
    tpu.vector_store %arg5[%c0_5, %c0_6], %5 {strides = array<i32>} : memref<8x128xf32, #tpu.memory_space<vmem>>, vector<8x128xf32>,
    return
  }
  func.func @transform_0(%arg0: i32, %arg1: i32) -> (i32, i32) {
    %c0_i32 = arith.constant 0 : i32
    %c0_i32_0 = arith.constant 0 : i32
    return %arg0, %c0_i32 : i32, i32
  }
  func.func @transform_1(%arg0: i32, %arg1: i32) -> (i32, i32) {
    %c0_i32 = arith.constant 0 : i32
    %c0_i32_0 = arith.constant 0 : i32
    return %c0_i32, %arg1 : i32, i32
  }
  func.func @transform_2(%arg0: i32, %arg1: i32) -> (i32, i32) {
    %c0_i32 = arith.constant 0 : i32
    %c0_i32_0 = arith.constant 0 : i32
    return %c0_i32, %arg1 : i32, i32
  }
  func.func @transform_3(%arg0: i32, %arg1: i32) -> (i32, i32) {
    %c0_i32 = arith.constant 0 : i32
    return %arg0, %arg1 : i32, i32
  }
}

</mosaic_0001>

<llo_original>
// kernel: _lambda_.20
$region0: #{_lambda_.20}
  #allocation0 [shape = 'u32[]', space=smem, size = 0x4, offset = 0x4, fixed_abs, tag = 'smem constant byte address 0x4 - core index']
  #allocation1 [shape = 'u32[72,128]{1,0:T(1,128)}', space=vmem, size = 0x9000, scoped, tag = 'internal scratch']
  %s0 = inlined_call_operand.vmem [shape: f32[16,8], index: 0, kind: input, shape index: {}]
  %s1 = inlined_call_operand.vmem [shape: f32[1,8], index: 1, kind: input, shape index: {}]
  %s2 = inlined_call_operand.vmem [shape: f32[1,8], index: 2, kind: input, shape index: {}]
  %s3 = inlined_call_operand.vmem [shape: bf16[16,8], index: 3, kind: output, shape index: {}]
  %s4 = sld [smem:[#allocation0]]
  $region22: #{_lambda_.20} parent=0
    _
  %s6 = ssub.s32 1, %s4
  %s7 = scalar_select 0, %s6, %s4
  // Predicated region
  $region2: #{_lambda_.20} parent=0 // pred_check
    _
  $region3: #{_lambda_.20} parent=0 // pred_check_branch
    %9 = sbr.rel (0) target = $region5
  $region4: #{_lambda_.20} parent=0 // pred_region
    _
  $region5: #{_lambda_.20} parent=0 // pred_fallthru
    _
  // Predicated region
  $region6: #{_lambda_.20} parent=0 // pred_check
    _
  $region7: #{_lambda_.20} parent=0 // pred_check_branch
    %11 = sbr.rel (0) target = $region9
  $region8: #{_lambda_.20} parent=0 // pred_region
    _
  $region9: #{_lambda_.20} parent=0 // pred_fallthru
    _
  // Predicated region
  $region10: #{_lambda_.20} parent=0 // pred_check
    _
  $region11: #{_lambda_.20} parent=0 // pred_check_branch
    %13 = sbr.rel (0) target = $region13
  $region12: #{_lambda_.20} parent=0 // pred_region
    _
  $region13: #{_lambda_.20} parent=0 // pred_fallthru
    _
  %v14 = vld [vmem:[%s0] sm:$0xff]
  %v15 = vld [vmem:[%s0 + $0x8] sm:$0xff]
  %vm16 = vcmask 64512
  %v17 = vsel %vm16, %v14, 0.0
  %18 = vadd.xlane.f32.xlu0 %v17
  %v19 = vpop.xlane.xlu0 %18
  %v20 = vsel %vm16, %v15, 0.0
  %21 = vadd.xlane.f32.xlu0 %v20
  %v22 = vpop.xlane.xlu0 %21
  %v23 = vrcp.pop 8.0
  %v24 = vmul.f32 8.0, %v23
  %v25 = vsub.f32 1.0, %v24
  %v26 = vmul.f32 %v23, %v25
  %v27 = vadd.f32 %v23, %v26
  %vm28 = vweird.f32 %v23
  %v29 = vsel %vm28, %v23, %v27
  %v30 = vmul.f32 %v19, %v29
  %v31 = vmul.f32 %v22, %v29
  %v32 = vsub.f32 %v14, %v30
  %v33 = vsub.f32 %v15, %v31
  %v34 = vmul.f32 %v32, %v32
  %v35 = vmul.f32 %v33, %v33
  %v36 = vsel %vm16, %v34, 0.0
  %37 = vadd.xlane.f32.xlu0 %v36
  %v38 = vpop.xlane.xlu0 %37
  %v39 = vsel %vm16, %v35, 0.0
  %40 = vadd.xlane.f32.xlu0 %v39
  %v41 = vpop.xlane.xlu0 %40
  %v42 = vmul.f32 %v38, %v29
  %v43 = vmul.f32 %v41, %v29
  %v44 = vadd.f32 %v42, 1e-12
  %v45 = vadd.f32 %v43, 1e-12
  %v46 = vrsqrt.pop %v44
  %v47 = vmul.f32 %v46, %v44
  %v48 = vmul.f32 %v47, %v46
  %v49 = vmul.f32 0.5, %v48
  %v50 = vsub.f32 1.5, %v49
  %v51 = vmul.f32 %v46, %v50
  %vm52 = vweird.f32 %v44
  %vm53 = vweird.f32 %v46
  %vm54 = vmor %vm52, %vm53
  %v55 = vsel %vm54, %v46, %v51
  %v56 = vrsqrt.pop %v45
  %v57 = vmul.f32 %v56, %v45
  %v58 = vmul.f32 %v57, %v56
  %v59 = vmul.f32 0.5, %v58
  %v60 = vsub.f32 1.5, %v59
  %v61 = vmul.f32 %v56, %v60
  %vm62 = vweird.f32 %v45
  %vm63 = vweird.f32 %v56
  %vm64 = vmor %vm62, %vm63
  %v65 = vsel %vm64, %v56, %v61
  %v66 = vmul.f32 %v32, %v55
  %v67 = vmul.f32 %v33, %v65
  %v68 = vld [vmem:[%s1] sm:$0x1]
  %v70 = vperm.slane %v68, 0
  %v72 = vmul.f32 %v66, %v70
  %v73 = vmul.f32 %v67, %v70
  %v74 = vld [vmem:[%s2] sm:$0x1]
  %v76 = vperm.slane %v74, 0
  %v78 = vadd.f32 %v72, %v76
  %v79 = vadd.f32 %v73, %v76
  %v80 = vpack.c.bf16 %v78, %v78
  %v81 = vpack.c.bf16 %v79, %v79
  %vm82 = vcmask 60416
  %83 = vst.msk [vmem:[%s3] sm:$0xf] %vm82, %v80
  %84 = vst.msk [vmem:[%s3 + $0x4] sm:$0xf] %vm82, %v81
  // Predicated region
  $region14: #{_lambda_.20} parent=0 // pred_check
    _
  $region15: #{_lambda_.20} parent=0 // pred_check_branch
    %86 = sbr.rel (0) target = $region17
  $region16: #{_lambda_.20} parent=0 // pred_region
    _
  $region17: #{_lambda_.20} parent=0 // pred_fallthru
    _
  // Predicated region
  $region18: #{_lambda_.20} parent=0 // pred_check
    _
  $region19: #{_lambda_.20} parent=0 // pred_check_branch
    %88 = sbr.rel (0) target = $region21
  $region20: #{_lambda_.20} parent=0 // pred_region
    _
  $region21: #{_lambda_.20} parent=0 // pred_fallthru
    _

// kernel: _lambda_.21
$region0: #{_lambda_.21}
  #allocation0 [shape = 'u32[]', space=smem, size = 0x4, offset = 0x4, fixed_abs, tag = 'smem constant byte address 0x4 - core index']
  #allocation1 [shape = 'u32[72,128]{1,0:T(1,128)}', space=vmem, size = 0x9000, scoped, tag = 'internal scratch']
  %s0 = inlined_call_operand.vmem [shape: bf16[16,128], index: 0, kind: input, shape index: {}]
  %s1 = inlined_call_operand.vmem [shape: bf16[128,128], index: 1, kind: input, shape index: {}]
  %s2 = inlined_call_operand.vmem [shape: f32[1,128], index: 2, kind: input, shape index: {}]
  %s3 = inlined_call_operand.vmem [shape: bf16[16,128], index: 3, kind: output, shape index: {}]
  %s4 = sld [smem:[#allocation0]]
  $region22: #{_lambda_.21} parent=0
    _
  %s6 = ssub.s32 1, %s4
  %s7 = scalar_select 0, %s6, %s4
  // Predicated region
  $region2: #{_lambda_.21} parent=0 // pred_check
    _
  $region3: #{_lambda_.21} parent=0 // pred_check_branch
    %9 = sbr.rel (0) target = $region5
  $region4: #{_lambda_.21} parent=0 // pred_region
    _
  $region5: #{_lambda_.21} parent=0 // pred_fallthru
    _
  // Predicated region
  $region6: #{_lambda_.21} parent=0 // pred_check
    _
  $region7: #{_lambda_.21} parent=0 // pred_check_branch
    %11 = sbr.rel (0) target = $region9
  $region8: #{_lambda_.21} parent=0 // pred_region
    _
  $region9: #{_lambda_.21} parent=0 // pred_fallthru
    _
  // Predicated region
  $region10: #{_lambda_.21} parent=0 // pred_check
    _
  $region11: #{_lambda_.21} parent=0 // pred_check_branch
    %13 = sbr.rel (0) target = $region13
  $region12: #{_lambda_.21} parent=0 // pred_region
    _
  $region13: #{_lambda_.21} parent=0 // pred_fallthru
    _
  %v14 = vld [vmem:[%s0] sm:$0xf]
  %v15 = vld [vmem:[%s0 + $0x4] sm:$0xf]
  %v16 = vld [vmem:[%s1] sm:$0xf]
  %v17 = vld [vmem:[%s1 + $0x4] sm:$0xf]
  %v18 = vld [vmem:[%s1 + $0x8] sm:$0xf]
  %v19 = vld [vmem:[%s1 + $0xc] sm:$0xf]
  %v20 = vld [vmem:[%s1 + $0x10] sm:$0xf]
  %v21 = vld [vmem:[%s1 + $0x14] sm:$0xf]
  %v22 = vld [vmem:[%s1 + $0x18] sm:$0xf]
  %v23 = vld [vmem:[%s1 + $0x1c] sm:$0xf]
  %v24 = vld [vmem:[%s1 + $0x20] sm:$0xf]
  %v25 = vld [vmem:[%s1 + $0x24] sm:$0xf]
  %v26 = vld [vmem:[%s1 + $0x28] sm:$0xf]
  %v27 = vld [vmem:[%s1 + $0x2c] sm:$0xf]
  %v28 = vld [vmem:[%s1 + $0x30] sm:$0xf]
  %v29 = vld [vmem:[%s1 + $0x34] sm:$0xf]
  %v30 = vld [vmem:[%s1 + $0x38] sm:$0xf]
  %v31 = vld [vmem:[%s1 + $0x3c] sm:$0xf]
  %v32 = vld [vmem:[%s2] sm:$0x1]
  %v34 = vperm.slane %v32, 0
  %v38 = vunpack.c.l.b16 %v14
  %v39 = vunpack.c.l.b16 %v15
  %v40 = vpack.c.b16 %v39, %v38
  %v58 = vunpack.c.l.b16 %v16
  %v59 = vunpack.c.l.b16 %v17
  %v60 = vunpack.c.l.b16 %v18
  %v61 = vunpack.c.l.b16 %v19
  %v62 = vunpack.c.l.b16 %v20
  %v63 = vunpack.c.l.b16 %v21
  %v64 = vunpack.c.l.b16 %v22
  %v65 = vunpack.c.l.b16 %v23
  %v66 = vunpack.c.l.b16 %v24
  %v67 = vunpack.c.l.b16 %v25
  %v68 = vunpack.c.l.b16 %v26
  %v69 = vunpack.c.l.b16 %v27
  %v70 = vunpack.c.l.b16 %v28
  %v71 = vunpack.c.l.b16 %v29
  %v72 = vunpack.c.l.b16 %v30
  %v73 = vunpack.c.l.b16 %v31
  %v74 = vpack.c.b16 %v59, %v58
  %v75 = vpack.c.b16 %v61, %v60
  %v76 = vpack.c.b16 %v63, %v62
  %v77 = vpack.c.b16 %v65, %v64
  %v78 = vpack.c.b16 %v67, %v66
  %v79 = vpack.c.b16 %v69, %v68
  %v80 = vpack.c.b16 %v71, %v70
  %v81 = vpack.c.b16 %v73, %v72
  %90 = vmatpush.bf16.msra.mxu0 %v81
  %91 = vmatpush.bf16.msra.mxu0 %v80
  %92 = vmatpush.bf16.msra.mxu0 %v79
  %93 = vmatpush.bf16.msra.mxu0 %v78
  %94 = vmatpush.bf16.msra.mxu0 %v77
  %95 = vmatpush.bf16.msra.mxu0 %v76
  %96 = vmatpush.bf16.msra.mxu0 %v75
  %97 = vmatpush.bf16.msra.mxu0 %v74
  %98 = vmatmul.bf16.gmra.mxu0 %v40
  %v99 = vpop.f32.mrf.mxu0
  %v100 = vadd.f32 %v34, %v99
  %v101 = vpop.f32.mrf.mxu0
  %v102 = vadd.f32 %v34, %v101
  %103 = vdwg.mxu0
  %v104 = vpack.c.bf16 %v100, %v100
  %v105 = vpack.c.bf16 %v102, %v102
  %106 = vst [vmem:[%s3] sm:$0xf] %v104
  %107 = vst [vmem:[%s3 + $0x4] sm:$0xf] %v105
  // Predicated region
  $region14: #{_lambda_.21} parent=0 // pred_check
    _
  $region15: #{_lambda_.21} parent=0 // pred_check_branch
    %109 = sbr.rel (0) target = $region17
  $region16: #{_lambda_.21} parent=0 // pred_region
    _
  $region17: #{_lambda_.21} parent=0 // pred_fallthru
    _
  // Predicated region
  $region18: #{_lambda_.21} parent=0 // pred_check
    _
  $region19: #{_lambda_.21} parent=0 // pred_check_branch
    %111 = sbr.rel (0) target = $region21
  $region20: #{_lambda_.21} parent=0 // pred_region
    _
  $region21: #{_lambda_.21} parent=0 // pred_fallthru
    _

// kernel: _lambda_.22
$region0: #{_lambda_.22}
  #allocation0 [shape = 'u32[]', space=smem, size = 0x4, offset = 0x4, fixed_abs, tag = 'smem constant byte address 0x4 - core index']
  #allocation1 [shape = 'u32[72,128]{1,0:T(1,128)}', space=vmem, size = 0x9000, scoped, tag = 'internal scratch']
  %s0 = inlined_call_operand.vmem [shape: bf16[2,8,24], index: 0, kind: input, shape index: {}]
  %s1 = inlined_call_operand.vmem [shape: bf16[2,8,8], index: 1, kind: output, shape index: {}]
  %s2 = sld [smem:[#allocation0]]
  $region37: #{_lambda_.22} parent=0
    _
  %s4 = ssub.s32 1, %s2
  %s5 = scalar_select 0, %s4, %s2
  loop: start=0, step=1, limit=4
  $region2: #{_lambda_.22} parent=0 // loop_pre_header
    _
  $region3: #{_lambda_.22} parent=0 // loop_header
    %s7 = sphi 0, %s11
    %p8 = scmp.ge.s32.totalorder %s7, 4
    %s17 = sphi 0, %s19
    %s20 = sphi 0, %s17
    %s21 = sphi 0, %s20
    %s37 = sphi 0, %s21
    %s43 = sphi 0, %s45
    %s46 = sphi 0, %s43
    %s47 = sphi 0, %s46
    %s63 = sphi 0, %s47
  $region4: #{_lambda_.22} parent=0 // loop_header_branch
    %10 = sbr.rel (%p8) target = $region8
  $region5: #{_lambda_.22} parent=0 // loop_body
    %s12 = ssub.s32 %s7, 1
    %s13 = ssub.s32 %s7, 2
    %s14 = sadd.s32 %s7, 1
    %s15 = ssub.s32 %s7, %s14
    %p16 = scmp.eq.s32.totalorder %s15, 0
    %s18 = sadd.s32 %s17, 1
    %s19 = scalar_select %p16, %s17, %s18
    %p22 = pneg %p16
    %p23 = scmp.eq.s32.totalorder %s7, 1
    %p24 = por %p22, %p23
    %p25 = scmp.ne.s32.totalorder %s17, %s20
    %p26 = scmp.eq.s32.totalorder %s7, 0
    %p27 = por %p25, %p26
    %p28 = scmp.ne.s32.totalorder %s17, %s20
    %p29 = scmp.eq.s32.totalorder %s12, 1
    %p30 = por %p28, %p29
    %p31 = scmp.ne.s32.totalorder %s20, %s21
    %p32 = scmp.eq.s32.totalorder %s12, 0
    %p33 = por %p31, %p32
    %p34 = scmp.ne.s32.totalorder %s20, %s21
    %p35 = scmp.eq.s32.totalorder %s13, 1
    %p36 = por %p34, %p35
    %p38 = scmp.ne.s32.totalorder %s21, %s37
    %p39 = scmp.eq.s32.totalorder %s13, 0
    %p40 = por %p38, %p39
    %s41 = ssub.s32 %s7, %s14
    %p42 = scmp.eq.s32.totalorder %s41, 0
    %s44 = sadd.s32 %s43, 1
    %s45 = scalar_select %p42, %s43, %s44
    %p48 = pneg %p42
    %p49 = scmp.eq.s32.totalorder %s7, 1
    %p50 = por %p48, %p49
    %p51 = scmp.ne.s32.totalorder %s43, %s46
    %p52 = scmp.eq.s32.totalorder %s7, 0
    %p53 = por %p51, %p52
    %p54 = scmp.ne.s32.totalorder %s43, %s46
    %p55 = scmp.eq.s32.totalorder %s12, 1
    %p56 = por %p54, %p55
    %p57 = scmp.ne.s32.totalorder %s46, %s47
    %p58 = scmp.eq.s32.totalorder %s12, 0
    %p59 = por %p57, %p58
    %p60 = scmp.ne.s32.totalorder %s46, %s47
    %p61 = scmp.eq.s32.totalorder %s13, 1
    %p62 = por %p60, %p61
    %p64 = scmp.ne.s32.totalorder %s47, %s63
    %p65 = scmp.eq.s32.totalorder %s13, 0
    %p66 = por %p64, %p65
    %p67 = scmp.le.s32.totalorder 1, %s7
    %p68 = scmp.lt.s32.totalorder %s7, 3
    %p69 = pnand %p67, %p68
    %p70 = pneg %p69
    // Predicated region
    $region9: #{_lambda_.22} parent=5 // pred_check
      _
    $region10: #{_lambda_.22} parent=5 // pred_check_branch
      %72 = sbr.rel (%p69) target = $region12
    $region11: #{_lambda_.22} parent=5 // pred_region
      %s73 = ssub.s32 %s7, 1
    $region12: #{_lambda_.22} parent=5 // pred_fallthru
      _
    %p74 = scmp.lt.s32.totalorder %s7, 2
    // Predicated region
    $region13: #{_lambda_.22} parent=5 // pred_check
      %p75 = pneg %p74
    $region14: #{_lambda_.22} parent=5 // pred_check_branch
      %77 = sbr.rel (%p75) target = $region16
    $region15: #{_lambda_.22} parent=5 // pred_region
      // Predicated region
      $region17: #{_lambda_.22} parent=15 // pred_check
        %p78 = pneg %p27
      $region18: #{_lambda_.22} parent=15 // pred_check_branch
        %80 = sbr.rel (%p78) target = $region20
      $region19: #{_lambda_.22} parent=15 // pred_region
        %p81 = scmp.lt.s32.totalorder %s7, 1
        %s82 = scalar_select %p81, %s7, 1
        %s83 = smul.addr %s82, 4
        %s84 = scalar_lea.vmem %s0, %s83
      $region20: #{_lambda_.22} parent=15 // pred_fallthru
        _
    $region16: #{_lambda_.22} parent=5 // pred_fallthru
      _
    %p85 = scmp.le.s32.totalorder 1, %s7
    %p86 = scmp.lt.s32.totalorder %s7, 3
    %p87 = pnand %p85, %p86
    %p88 = pneg %p87
    // Predicated region
    $region21: #{_lambda_.22} parent=5 // pred_check
      _
    $region22: #{_lambda_.22} parent=5 // pred_check_branch
      %90 = sbr.rel (%p87) target = $region24
    $region23: #{_lambda_.22} parent=5 // pred_region
      %s91 = ssub.s32 %s7, 1
      %p92 = scmp.lt.s32.totalorder %s12, 1
      %s93 = scalar_select %p92, %s12, 1
      %s94 = smul.addr %s93, 4
      %s95 = scalar_lea.vmem %s0, %s94
      %p96 = pneg %p33
      %p97 = pneg %p30
      %p98 = pneg %p59
      %p99 = pneg %p56
      %p100 = scmp.lt.s32.totalorder %s12, 1
      %s101 = scalar_select %p100, %s12, 1
      %s102 = smul.addr %s101, 4
      %s103 = scalar_lea.vmem %s1, %s102
      %p104 = scmp.lt.s32.totalorder %s12, 1
      %s105 = scalar_select %p104, %s12, 1
      %s106 = smul.addr %s105, 4
      %s107 = scalar_lea.vmem %s0, %s106
      %p108 = scmp.lt.s32.totalorder %s12, 1
      %s109 = scalar_select %p108, %s12, 1
      %s110 = smul.addr %s109, 4
      %s111 = scalar_lea.vmem %s1, %s110
      %v113 = vld [vmem:[%s107] sm:$0xf]
      %v115 = vunpack.c.l.b16 %v113
      %v116 = vpack.c.b16 %v115, %v115
      %117 = vrot.lane.b32.xlu0 %v116, 120
      %v118 = vpop.permute.xlu0 %117
      %vm119 = vcmask 31744
      %v121 = vsel %vm119, %v113, 0
      %v124 = vsel %vm119, %v118, 0
      %126 = vmatpush.bf16.xpose.msra.mxu0 0
      %127 = vmatpush.bf16.xpose.msra.mxu0 0
      %128 = vmatpush.bf16.xpose.msra.mxu0 0
      %129 = vmatpush.bf16.xpose.msra.mxu0 0
      %130 = vmatpush.bf16.xpose.msra.mxu0 0
      %131 = vmatpush.bf16.xpose.msra.mxu0 0
      %132 = vmatpush.bf16.xpose.msra.mxu0 0
      %133 = vmatpush.bf16.xpose.msra.mxu0 %v124
      %134 = vmatmul.bf16.gmra.mxu0 %v121
      %v135 = vpop.f32.mrf.mxu0
      %v136 = vadd.f32 0.0, %v135
      %v137 = vpop.f32.mrf.mxu0
      %138 = vdwg.mxu0
      %vm139 = vcmask 64512
      %v140 = vsel %vm139, %v136, -inf
      %141 = vmax.xlane.f32.xlu0 %v140
      %v142 = vpop.xlane.xlu0 %141
      %v143 = vsub.f32 %v136, %v142
      %v144 = vmul.f32 %v143, 1.442695
      %v145 = vpow.pop %v144
      %v146 = vsel %vm139, %v145, 0.0
      %147 = vadd.xlane.f32.xlu0 %v146
      %v148 = vpop.xlane.xlu0 %147
      %v149 = vpack.c.bf16 %v145, %v145
      %150 = vrot.lane.b32.xlu0 %v116, 112
      %v151 = vpop.permute.xlu0 %150
      %v153 = vsel %vm139, %v149, 0
      %vm155 = vcmask 1043456
      %v157 = vsel %vm155, %v151, 0
      %159 = vmatpush.bf16.msra.mxu0 0
      %160 = vmatpush.bf16.msra.mxu0 0
      %161 = vmatpush.bf16.msra.mxu0 0
      %162 = vmatpush.bf16.msra.mxu0 0
      %163 = vmatpush.bf16.msra.mxu0 0
      %164 = vmatpush.bf16.msra.mxu0 0
      %165 = vmatpush.bf16.msra.mxu0 0
      %166 = vmatpush.bf16.msra.mxu0 %v157
      %167 = vmatmul.bf16.gmra.mxu0 %v153
      %v168 = vpop.f32.mrf.mxu0
      %v169 = vadd.f32 0.0, %v168
      %v170 = vpop.f32.mrf.mxu0
      %171 = vdwg.mxu0
      %v172 = vrcp.pop %v148
      %v173 = vmul.f32 %v169, %v172
      %174 = vrot.lane.b32.xlu0 %v116, 124
      %v175 = vpop.permute.xlu0 %174
      %176 = vrot.lane.b32.xlu0 %v116, 116
      %v177 = vpop.permute.xlu0 %176
      %v179 = vsel %vm119, %v175, 0
      %v182 = vsel %vm119, %v177, 0
      %184 = vmatpush.bf16.xpose.msra.mxu0 0
      %185 = vmatpush.bf16.xpose.msra.mxu0 0
      %186 = vmatpush.bf16.xpose.msra.mxu0 0
      %187 = vmatpush.bf16.xpose.msra.mxu0 0
      %188 = vmatpush.bf16.xpose.msra.mxu0 0
      %189 = vmatpush.bf16.xpose.msra.mxu0 0
      %190 = vmatpush.bf16.xpose.msra.mxu0 0
      %191 = vmatpush.bf16.xpose.msra.mxu0 %v182
      %192 = vmatmul.bf16.gmra.mxu0 %v179
      %v193 = vpop.f32.mrf.mxu0
      %v194 = vadd.f32 0.0, %v193
      %v195 = vpop.f32.mrf.mxu0
      %196 = vdwg.mxu0
      %v197 = vsel %vm139, %v194, -inf
      %198 = vmax.xlane.f32.xlu0 %v197
      %v199 = vpop.xlane.xlu0 %198
      %v200 = vsub.f32 %v194, %v199
      %v201 = vmul.f32 %v200, 1.442695
      %v202 = vpow.pop %v201
      %v203 = vsel %vm139, %v202, 0.0
      %204 = vadd.xlane.f32.xlu0 %v203
      %v205 = vpop.xlane.xlu0 %204
      %v206 = vpack.c.bf16 %v202, %v202
      %207 = vrot.lane.b32.xlu0 %v116, 108
      %v208 = vpop.permute.xlu0 %207
      %v210 = vsel %vm139, %v206, 0
      %v213 = vsel %vm155, %v208, 0
      %215 = vmatpush.bf16.msra.mxu0 0
      %216 = vmatpush.bf16.msra.mxu0 0
      %217 = vmatpush.bf16.msra.mxu0 0
      %218 = vmatpush.bf16.msra.mxu0 0
      %219 = vmatpush.bf16.msra.mxu0 0
      %220 = vmatpush.bf16.msra.mxu0 0
      %221 = vmatpush.bf16.msra.mxu0 0
      %222 = vmatpush.bf16.msra.mxu0 %v213
      %223 = vmatmul.bf16.gmra.mxu0 %v210
      %v224 = vpop.f32.mrf.mxu0
      %v225 = vadd.f32 0.0, %v224
      %v226 = vpop.f32.mrf.mxu0
      %227 = vdwg.mxu0
      %v228 = vrcp.pop %v205
      %v229 = vmul.f32 %v225, %v228
      %231 = vrot.lane.b32.xlu0 %v229, 4
      %v232 = vpop.permute.xlu0 %231
      %v234 = vsel %vm119, %v173, %v232
      %v235 = vpack.c.bf16 %v234, %v234
      %vm236 = vcmask 60416
      %237 = vst.msk [vmem:[%s111] sm:$0xf] %vm236, %v235
      %p238 = scmp.lt.s32.totalorder %s12, 1
      %s239 = scalar_select %p238, %s12, 1
      %s240 = smul.addr %s239, 4
      %s241 = scalar_lea.vmem %s1, %s240
      // Predicated region
      $region25: #{_lambda_.22} parent=23 // pred_check
        %p242 = pneg %p56
      $region26: #{_lambda_.22} parent=23 // pred_check_branch
        %244 = sbr.rel (%p242) target = $region28
      $region27: #{_lambda_.22} parent=23 // pred_region
        _
      $region28: #{_lambda_.22} parent=23 // pred_fallthru
        _
    $region24: #{_lambda_.22} parent=5 // pred_fallthru
      _
    %p245 = scmp.le.s32.totalorder 2, %s7
    // Predicated region
    $region29: #{_lambda_.22} parent=5 // pred_check
      %p246 = pneg %p245
    $region30: #{_lambda_.22} parent=5 // pred_check_branch
      %248 = sbr.rel (%p246) target = $region32
    $region31: #{_lambda_.22} parent=5 // pred_region
      %s249 = ssub.s32 %s7, 2
      // Predicated region
      $region33: #{_lambda_.22} parent=31 // pred_check
        %p250 = pneg %p62
      $region34: #{_lambda_.22} parent=31 // pred_check_branch
        %252 = sbr.rel (%p250) target = $region36
      $region35: #{_lambda_.22} parent=31 // pred_region
        %p253 = scmp.lt.s32.totalorder %s13, 1
        %s254 = scalar_select %p253, %s13, 1
        %s255 = smul.addr %s254, 4
        %s256 = scalar_lea.vmem %s1, %s255
      $region36: #{_lambda_.22} parent=31 // pred_fallthru
        _
    $region32: #{_lambda_.22} parent=5 // pred_fallthru
      _
  $region6: #{_lambda_.22} parent=0 // loop_footer
    %s11 = sadd.s32 1, %s7
  $region7: #{_lambda_.22} parent=0 // loop_footer_branch
    %6 = sbr.rel target = $region3
  $region8: #{_lambda_.22} parent=0 // loop_exit
    _

// kernel: _lambda_.23
$region0: #{_lambda_.23}
  #allocation0 [shape = 'u32[]', space=smem, size = 0x4, offset = 0x4, fixed_abs, tag = 'smem constant byte address 0x4 - core index']
  #allocation1 [shape = 'u32[72,128]{1,0:T(1,128)}', space=vmem, size = 0x9000, scoped, tag = 'internal scratch']
  %s0 = inlined_call_operand.vmem [shape: bf16[16,128], index: 0, kind: input, shape index: {}]
  %s1 = inlined_call_operand.vmem [shape: bf16[128,128], index: 1, kind: input, shape index: {}]
  %s2 = inlined_call_operand.vmem [shape: f32[1,128], index: 2, kind: input, shape index: {}, may-alias: {2,5}]
  %s3 = inlined_call_operand.vmem [shape: bf16[16,128], index: 3, kind: input, shape index: {}]
  %s4 = inlined_call_operand.vmem [shape: f32[1,128], index: 4, kind: input, shape index: {}]
  %s5 = inlined_call_operand.vmem [shape: f32[1,128], index: 5, kind: input, shape index: {}, may-alias: {2,5}]
  %s6 = inlined_call_operand.vmem [shape: bf16[16,128], index: 6, kind: output, shape index: {}]
  %s7 = sld [smem:[#allocation0]]
  $region34: #{_lambda_.23} parent=0
    _
  %s9 = ssub.s32 1, %s7
  %s10 = scalar_select 0, %s9, %s7
  // Predicated region
  $region2: #{_lambda_.23} parent=0 // pred_check
    _
  $region3: #{_lambda_.23} parent=0 // pred_check_branch
    %12 = sbr.rel (0) target = $region5
  $region4: #{_lambda_.23} parent=0 // pred_region
    _
  $region5: #{_lambda_.23} parent=0 // pred_fallthru
    _
  // Predicated region
  $region6: #{_lambda_.23} parent=0 // pred_check
    _
  $region7: #{_lambda_.23} parent=0 // pred_check_branch
    %14 = sbr.rel (0) target = $region9
  $region8: #{_lambda_.23} parent=0 // pred_region
    _
  $region9: #{_lambda_.23} parent=0 // pred_fallthru
    _
  // Predicated region
  $region10: #{_lambda_.23} parent=0 // pred_check
    _
  $region11: #{_lambda_.23} parent=0 // pred_check_branch
    %16 = sbr.rel (0) target = $region13
  $region12: #{_lambda_.23} parent=0 // pred_region
    _
  $region13: #{_lambda_.23} parent=0 // pred_fallthru
    _
  // Predicated region
  $region14: #{_lambda_.23} parent=0 // pred_check
    _
  $region15: #{_lambda_.23} parent=0 // pred_check_branch
    %18 = sbr.rel (0) target = $region17
  $region16: #{_lambda_.23} parent=0 // pred_region
    _
  $region17: #{_lambda_.23} parent=0 // pred_fallthru
    _
  // Predicated region
  $region18: #{_lambda_.23} parent=0 // pred_check
    _
  $region19: #{_lambda_.23} parent=0 // pred_check_branch
    %20 = sbr.rel (0) target = $region21
  $region20: #{_lambda_.23} parent=0 // pred_region
    _
  $region21: #{_lambda_.23} parent=0 // pred_fallthru
    _
  // Predicated region
  $region22: #{_lambda_.23} parent=0 // pred_check
    _
  $region23: #{_lambda_.23} parent=0 // pred_check_branch
    %22 = sbr.rel (0) target = $region25
  $region24: #{_lambda_.23} parent=0 // pred_region
    _
  $region25: #{_lambda_.23} parent=0 // pred_fallthru
    _
  %v23 = vld [vmem:[%s0] sm:$0xf]
  %v24 = vld [vmem:[%s0 + $0x4] sm:$0xf]
  %v25 = vld [vmem:[%s1] sm:$0xf]
  %v26 = vld [vmem:[%s1 + $0x4] sm:$0xf]
  %v27 = vld [vmem:[%s1 + $0x8] sm:$0xf]
  %v28 = vld [vmem:[%s1 + $0xc] sm:$0xf]
  %v29 = vld [vmem:[%s1 + $0x10] sm:$0xf]
  %v30 = vld [vmem:[%s1 + $0x14] sm:$0xf]
  %v31 = vld [vmem:[%s1 + $0x18] sm:$0xf]
  %v32 = vld [vmem:[%s1 + $0x1c] sm:$0xf]
  %v33 = vld [vmem:[%s1 + $0x20] sm:$0xf]
  %v34 = vld [vmem:[%s1 + $0x24] sm:$0xf]
  %v35 = vld [vmem:[%s1 + $0x28] sm:$0xf]
  %v36 = vld [vmem:[%s1 + $0x2c] sm:$0xf]
  %v37 = vld [vmem:[%s1 + $0x30] sm:$0xf]
  %v38 = vld [vmem:[%s1 + $0x34] sm:$0xf]
  %v39 = vld [vmem:[%s1 + $0x38] sm:$0xf]
  %v40 = vld [vmem:[%s1 + $0x3c] sm:$0xf]
  %v41 = vld [vmem:[%s2] sm:$0x1]
  %v43 = vperm.slane %v41, 0
  %v47 = vunpack.c.l.b16 %v23
  %v48 = vunpack.c.l.b16 %v24
  %v49 = vpack.c.b16 %v48, %v47
  %v67 = vunpack.c.l.b16 %v25
  %v68 = vunpack.c.l.b16 %v26
  %v69 = vunpack.c.l.b16 %v27
  %v70 = vunpack.c.l.b16 %v28
  %v71 = vunpack.c.l.b16 %v29
  %v72 = vunpack.c.l.b16 %v30
  %v73 = vunpack.c.l.b16 %v31
  %v74 = vunpack.c.l.b16 %v32
  %v75 = vunpack.c.l.b16 %v33
  %v76 = vunpack.c.l.b16 %v34
  %v77 = vunpack.c.l.b16 %v35
  %v78 = vunpack.c.l.b16 %v36
  %v79 = vunpack.c.l.b16 %v37
  %v80 = vunpack.c.l.b16 %v38
  %v81 = vunpack.c.l.b16 %v39
  %v82 = vunpack.c.l.b16 %v40
  %v83 = vpack.c.b16 %v68, %v67
  %v84 = vpack.c.b16 %v70, %v69
  %v85 = vpack.c.b16 %v72, %v71
  %v86 = vpack.c.b16 %v74, %v73
  %v87 = vpack.c.b16 %v76, %v75
  %v88 = vpack.c.b16 %v78, %v77
  %v89 = vpack.c.b16 %v80, %v79
  %v90 = vpack.c.b16 %v82, %v81
  %99 = vmatpush.bf16.msra.mxu0 %v90
  %100 = vmatpush.bf16.msra.mxu0 %v89
  %101 = vmatpush.bf16.msra.mxu0 %v88
  %102 = vmatpush.bf16.msra.mxu0 %v87
  %103 = vmatpush.bf16.msra.mxu0 %v86
  %104 = vmatpush.bf16.msra.mxu0 %v85
  %105 = vmatpush.bf16.msra.mxu0 %v84
  %106 = vmatpush.bf16.msra.mxu0 %v83
  %107 = vmatmul.bf16.gmra.mxu0 %v49
  %v108 = vpop.f32.mrf.mxu0
  %v109 = vadd.f32 %v43, %v108
  %v110 = vpop.f32.mrf.mxu0
  %v111 = vadd.f32 %v43, %v110
  %112 = vdwg.mxu0
  %v113 = vld [vmem:[%s3] sm:$0xf]
  %v114 = vld [vmem:[%s3 + $0x4] sm:$0xf]
  %v115 = vunpack.c.l.bf16 %v113
  %v116 = vunpack.c.l.bf16 %v114
  %v117 = vadd.f32 %v109, %v115
  %v118 = vadd.f32 %v111, %v116
  %v119 = vlaneseq
  %v120 = vand.u32 %v119, 127
  %vm121 = vcmp.lt.s32.totalorder %v120, 8
  %v122 = vsel %vm121, %v117, 0.0
  %v123 = vsel %vm121, %v118, 0.0
  %124 = vadd.xlane.f32.xlu0 %v122
  %v125 = vpop.xlane.xlu0 %124
  %126 = vadd.xlane.f32.xlu0 %v123
  %v127 = vpop.xlane.xlu0 %126
  %v128 = vmul.f32 %v125, 0.125
  %v129 = vmul.f32 %v127, 0.125
  %v130 = vsub.f32 %v117, %v128
  %v131 = vsub.f32 %v118, %v129
  %v132 = vsel %vm121, %v130, 0.0
  %v133 = vsel %vm121, %v131, 0.0
  %v134 = vmul.f32 %v132, %v132
  %v135 = vmul.f32 %v133, %v133
  %136 = vadd.xlane.f32.xlu0 %v134
  %v137 = vpop.xlane.xlu0 %136
  %138 = vadd.xlane.f32.xlu0 %v135
  %v139 = vpop.xlane.xlu0 %138
  %v140 = vmul.f32 %v137, 0.125
  %v141 = vmul.f32 %v139, 0.125
  %v142 = vadd.f32 %v140, 1e-12
  %v143 = vadd.f32 %v141, 1e-12
  %v144 = vrsqrt.pop %v142
  %v145 = vmul.f32 %v144, %v142
  %v146 = vmul.f32 %v145, %v144
  %v147 = vmul.f32 0.5, %v146
  %v148 = vsub.f32 1.5, %v147
  %v149 = vmul.f32 %v144, %v148
  %vm150 = vweird.f32 %v142
  %vm151 = vweird.f32 %v144
  %vm152 = vmor %vm150, %vm151
  %v153 = vsel %vm152, %v144, %v149
  %v154 = vrsqrt.pop %v143
  %v155 = vmul.f32 %v154, %v143
  %v156 = vmul.f32 %v155, %v154
  %v157 = vmul.f32 0.5, %v156
  %v158 = vsub.f32 1.5, %v157
  %v159 = vmul.f32 %v154, %v158
  %vm160 = vweird.f32 %v143
  %vm161 = vweird.f32 %v154
  %vm162 = vmor %vm160, %vm161
  %v163 = vsel %vm162, %v154, %v159
  %v164 = vmul.f32 %v130, %v153
  %v165 = vmul.f32 %v131, %v163
  %v166 = vld [vmem:[%s4] sm:$0x1]
  %v168 = vperm.slane %v166, 0
  %v170 = vmul.f32 %v164, %v168
  %v171 = vmul.f32 %v165, %v168
  %v172 = vld [vmem:[%s5] sm:$0x1]
  %v174 = vperm.slane %v172, 0
  %v176 = vadd.f32 %v170, %v174
  %v177 = vadd.f32 %v171, %v174
  %v178 = vpack.c.bf16 %v176, %v176
  %v179 = vpack.c.bf16 %v177, %v177
  %180 = vst [vmem:[%s6] sm:$0xf] %v178
  %181 = vst [vmem:[%s6 + $0x4] sm:$0xf] %v179
  // Predicated region
  $region26: #{_lambda_.23} parent=0 // pred_check
    _
  $region27: #{_lambda_.23} parent=0 // pred_check_branch
    %183 = sbr.rel (0) target = $region29
  $region28: #{_lambda_.23} parent=0 // pred_region
    _
  $region29: #{_lambda_.23} parent=0 // pred_fallthru
    _
  // Predicated region
  $region30: #{_lambda_.23} parent=0 // pred_check
    _
  $region31: #{_lambda_.23} parent=0 // pred_check_branch
    %185 = sbr.rel (0) target = $region33
  $region32: #{_lambda_.23} parent=0 // pred_region
    _
  $region33: #{_lambda_.23} parent=0 // pred_fallthru
    _

// kernel: _lambda_.24
$region0: #{_lambda_.24}
  #allocation0 [shape = 'u32[]', space=smem, size = 0x4, offset = 0x4, fixed_abs, tag = 'smem constant byte address 0x4 - core index']
  #allocation1 [shape = 'u32[72,128]{1,0:T(1,128)}', space=vmem, size = 0x9000, scoped, tag = 'internal scratch']
  %s0 = inlined_call_operand.vmem [shape: bf16[16,128], index: 0, kind: input, shape index: {}]
  %s1 = inlined_call_operand.vmem [shape: bf16[128,128], index: 1, kind: input, shape index: {}]
  %s2 = inlined_call_operand.vmem [shape: f32[1,128], index: 2, kind: input, shape index: {}]
  %s3 = inlined_call_operand.vmem [shape: bf16[16,128], index: 3, kind: output, shape index: {}]
  %s4 = sld [smem:[#allocation0]]
  $region22: #{_lambda_.24} parent=0
    _
  %s6 = ssub.s32 1, %s4
  %s7 = scalar_select 0, %s6, %s4
  // Predicated region
  $region2: #{_lambda_.24} parent=0 // pred_check
    _
  $region3: #{_lambda_.24} parent=0 // pred_check_branch
    %9 = sbr.rel (0) target = $region5
  $region4: #{_lambda_.24} parent=0 // pred_region
    _
  $region5: #{_lambda_.24} parent=0 // pred_fallthru
    _
  // Predicated region
  $region6: #{_lambda_.24} parent=0 // pred_check
    _
  $region7: #{_lambda_.24} parent=0 // pred_check_branch
    %11 = sbr.rel (0) target = $region9
  $region8: #{_lambda_.24} parent=0 // pred_region
    _
  $region9: #{_lambda_.24} parent=0 // pred_fallthru
    _
  // Predicated region
  $region10: #{_lambda_.24} parent=0 // pred_check
    _
  $region11: #{_lambda_.24} parent=0 // pred_check_branch
    %13 = sbr.rel (0) target = $region13
  $region12: #{_lambda_.24} parent=0 // pred_region
    _
  $region13: #{_lambda_.24} parent=0 // pred_fallthru
    _
  %v14 = vld [vmem:[%s0] sm:$0xf]
  %v15 = vld [vmem:[%s0 + $0x4] sm:$0xf]
  %v16 = vld [vmem:[%s1] sm:$0xf]
  %v17 = vld [vmem:[%s1 + $0x4] sm:$0xf]
  %v18 = vld [vmem:[%s1 + $0x8] sm:$0xf]
  %v19 = vld [vmem:[%s1 + $0xc] sm:$0xf]
  %v20 = vld [vmem:[%s1 + $0x10] sm:$0xf]
  %v21 = vld [vmem:[%s1 + $0x14] sm:$0xf]
  %v22 = vld [vmem:[%s1 + $0x18] sm:$0xf]
  %v23 = vld [vmem:[%s1 + $0x1c] sm:$0xf]
  %v24 = vld [vmem:[%s1 + $0x20] sm:$0xf]
  %v25 = vld [vmem:[%s1 + $0x24] sm:$0xf]
  %v26 = vld [vmem:[%s1 + $0x28] sm:$0xf]
  %v27 = vld [vmem:[%s1 + $0x2c] sm:$0xf]
  %v28 = vld [vmem:[%s1 + $0x30] sm:$0xf]
  %v29 = vld [vmem:[%s1 + $0x34] sm:$0xf]
  %v30 = vld [vmem:[%s1 + $0x38] sm:$0xf]
  %v31 = vld [vmem:[%s1 + $0x3c] sm:$0xf]
  %v32 = vld [vmem:[%s2] sm:$0x1]
  %v34 = vperm.slane %v32, 0
  %v38 = vunpack.c.l.b16 %v14
  %v39 = vunpack.c.l.b16 %v15
  %v40 = vpack.c.b16 %v39, %v38
  %v58 = vunpack.c.l.b16 %v16
  %v59 = vunpack.c.l.b16 %v17
  %v60 = vunpack.c.l.b16 %v18
  %v61 = vunpack.c.l.b16 %v19
  %v62 = vunpack.c.l.b16 %v20
  %v63 = vunpack.c.l.b16 %v21
  %v64 = vunpack.c.l.b16 %v22
  %v65 = vunpack.c.l.b16 %v23
  %v66 = vunpack.c.l.b16 %v24
  %v67 = vunpack.c.l.b16 %v25
  %v68 = vunpack.c.l.b16 %v26
  %v69 = vunpack.c.l.b16 %v27
  %v70 = vunpack.c.l.b16 %v28
  %v71 = vunpack.c.l.b16 %v29
  %v72 = vunpack.c.l.b16 %v30
  %v73 = vunpack.c.l.b16 %v31
  %v74 = vpack.c.b16 %v59, %v58
  %v75 = vpack.c.b16 %v61, %v60
  %v76 = vpack.c.b16 %v63, %v62
  %v77 = vpack.c.b16 %v65, %v64
  %v78 = vpack.c.b16 %v67, %v66
  %v79 = vpack.c.b16 %v69, %v68
  %v80 = vpack.c.b16 %v71, %v70
  %v81 = vpack.c.b16 %v73, %v72
  %90 = vmatpush.bf16.msra.mxu0 %v81
  %91 = vmatpush.bf16.msra.mxu0 %v80
  %92 = vmatpush.bf16.msra.mxu0 %v79
  %93 = vmatpush.bf16.msra.mxu0 %v78
  %94 = vmatpush.bf16.msra.mxu0 %v77
  %95 = vmatpush.bf16.msra.mxu0 %v76
  %96 = vmatpush.bf16.msra.mxu0 %v75
  %97 = vmatpush.bf16.msra.mxu0 %v74
  %98 = vmatmul.bf16.gmra.mxu0 %v40
  %v99 = vpop.f32.mrf.mxu0
  %v100 = vadd.f32 %v34, %v99
  %v101 = vpop.f32.mrf.mxu0
  %v102 = vadd.f32 %v34, %v101
  %103 = vdwg.mxu0
  %v104 = vmul.f32 %v100, 0.5
  %v105 = vmul.f32 %v102, 0.5
  %v106 = vmul.f32 %v100, 0.044715
  %v107 = vmul.f32 %v102, 0.044715
  %v108 = vmul.f32 %v106, %v100
  %v109 = vmul.f32 %v107, %v102
  %v110 = vmul.f32 %v108, %v100
  %v111 = vmul.f32 %v109, %v102
  %v112 = vadd.f32 %v100, %v110
  %v113 = vadd.f32 %v102, %v111
  %v114 = vmul.f32 %v112, 0.7978846
  %v115 = vmul.f32 %v113, 0.7978846
  %v116 = vtanh.pop %v114
  %v117 = vtanh.pop %v115
  %v118 = vadd.f32 %v116, 1.0
  %v119 = vadd.f32 %v117, 1.0
  %v120 = vmul.f32 %v104, %v118
  %v121 = vmul.f32 %v105, %v119
  %v122 = vpack.c.bf16 %v120, %v120
  %v123 = vpack.c.bf16 %v121, %v121
  %124 = vst [vmem:[%s3] sm:$0xf] %v122
  %125 = vst [vmem:[%s3 + $0x4] sm:$0xf] %v123
  // Predicated region
  $region14: #{_lambda_.24} parent=0 // pred_check
    _
  $region15: #{_lambda_.24} parent=0 // pred_check_branch
    %127 = sbr.rel (0) target = $region17
  $region16: #{_lambda_.24} parent=0 // pred_region
    _
  $region17: #{_lambda_.24} parent=0 // pred_fallthru
    _
  // Predicated region
  $region18: #{_lambda_.24} parent=0 // pred_check
    _
  $region19: #{_lambda_.24} parent=0 // pred_check_branch
    %129 = sbr.rel (0) target = $region21
  $region20: #{_lambda_.24} parent=0 // pred_region
    _
  $region21: #{_lambda_.24} parent=0 // pred_fallthru
    _

// kernel: _lambda_.32
$region0: #{_lambda_.32}
  #allocation0 [shape = 'u32[]', space=smem, size = 0x4, offset = 0x4, fixed_abs, tag = 'smem constant byte address 0x4 - core index']
  #allocation1 [shape = 'u32[72,128]{1,0:T(1,128)}', space=vmem, size = 0x9000, scoped, tag = 'internal scratch']
  %s0 = inlined_call_operand.vmem [shape: bf16[2,8,24], index: 0, kind: input, shape index: {}]
  %s1 = inlined_call_operand.vmem [shape: bf16[2,8,8], index: 1, kind: output, shape index: {}]
  %s2 = sld [smem:[#allocation0]]
  $region37: #{_lambda_.32} parent=0
    _
  %s4 = ssub.s32 1, %s2
  %s5 = scalar_select 0, %s4, %s2
  loop: start=0, step=1, limit=4
  $region2: #{_lambda_.32} parent=0 // loop_pre_header
    _
  $region3: #{_lambda_.32} parent=0 // loop_header
    %s7 = sphi 0, %s11
    %p8 = scmp.ge.s32.totalorder %s7, 4
    %s17 = sphi 0, %s19
    %s20 = sphi 0, %s17
    %s21 = sphi 0, %s20
    %s37 = sphi 0, %s21
    %s43 = sphi 0, %s45
    %s46 = sphi 0, %s43
    %s47 = sphi 0, %s46
    %s63 = sphi 0, %s47
  $region4: #{_lambda_.32} parent=0 // loop_header_branch
    %10 = sbr.rel (%p8) target = $region8
  $region5: #{_lambda_.32} parent=0 // loop_body
    %s12 = ssub.s32 %s7, 1
    %s13 = ssub.s32 %s7, 2
    %s14 = sadd.s32 %s7, 1
    %s15 = ssub.s32 %s7, %s14
    %p16 = scmp.eq.s32.totalorder %s15, 0
    %s18 = sadd.s32 %s17, 1
    %s19 = scalar_select %p16, %s17, %s18
    %p22 = pneg %p16
    %p23 = scmp.eq.s32.totalorder %s7, 1
    %p24 = por %p22, %p23
    %p25 = scmp.ne.s32.totalorder %s17, %s20
    %p26 = scmp.eq.s32.totalorder %s7, 0
    %p27 = por %p25, %p26
    %p28 = scmp.ne.s32.totalorder %s17, %s20
    %p29 = scmp.eq.s32.totalorder %s12, 1
    %p30 = por %p28, %p29
    %p31 = scmp.ne.s32.totalorder %s20, %s21
    %p32 = scmp.eq.s32.totalorder %s12, 0
    %p33 = por %p31, %p32
    %p34 = scmp.ne.s32.totalorder %s20, %s21
    %p35 = scmp.eq.s32.totalorder %s13, 1
    %p36 = por %p34, %p35
    %p38 = scmp.ne.s32.totalorder %s21, %s37
    %p39 = scmp.eq.s32.totalorder %s13, 0
    %p40 = por %p38, %p39
    %s41 = ssub.s32 %s7, %s14
    %p42 = scmp.eq.s32.totalorder %s41, 0
    %s44 = sadd.s32 %s43, 1
    %s45 = scalar_select %p42, %s43, %s44
    %p48 = pneg %p42
    %p49 = scmp.eq.s32.totalorder %s7, 1
    %p50 = por %p48, %p49
    %p51 = scmp.ne.s32.totalorder %s43, %s46
    %p52 = scmp.eq.s32.totalorder %s7, 0
    %p53 = por %p51, %p52
    %p54 = scmp.ne.s32.totalorder %s43, %s46
    %p55 = scmp.eq.s32.totalorder %s12, 1
    %p56 = por %p54, %p55
    %p57 = scmp.ne.s32.totalorder %s46, %s47
    %p58 = scmp.eq.s32.totalorder %s12, 0
    %p59 = por %p57, %p58
    %p60 = scmp.ne.s32.totalorder %s46, %s47
    %p61 = scmp.eq.s32.totalorder %s13, 1
    %p62 = por %p60, %p61
    %p64 = scmp.ne.s32.totalorder %s47, %s63
    %p65 = scmp.eq.s32.totalorder %s13, 0
    %p66 = por %p64, %p65
    %p67 = scmp.le.s32.totalorder 1, %s7
    %p68 = scmp.lt.s32.totalorder %s7, 3
    %p69 = pnand %p67, %p68
    %p70 = pneg %p69
    // Predicated region
    $region9: #{_lambda_.32} parent=5 // pred_check
      _
    $region10: #{_lambda_.32} parent=5 // pred_check_branch
      %72 = sbr.rel (%p69) target = $region12
    $region11: #{_lambda_.32} parent=5 // pred_region
      %s73 = ssub.s32 %s7, 1
    $region12: #{_lambda_.32} parent=5 // pred_fallthru
      _
    %p74 = scmp.lt.s32.totalorder %s7, 2
    // Predicated region
    $region13: #{_lambda_.32} parent=5 // pred_check
      %p75 = pneg %p74
    $region14: #{_lambda_.32} parent=5 // pred_check_branch
      %77 = sbr.rel (%p75) target = $region16
    $region15: #{_lambda_.32} parent=5 // pred_region
      // Predicated region
      $region17: #{_lambda_.32} parent=15 // pred_check
        %p78 = pneg %p27
      $region18: #{_lambda_.32} parent=15 // pred_check_branch
        %80 = sbr.rel (%p78) target = $region20
      $region19: #{_lambda_.32} parent=15 // pred_region
        %p81 = scmp.lt.s32.totalorder %s7, 1
        %s82 = scalar_select %p81, %s7, 1
        %s83 = smul.addr %s82, 4
        %s84 = scalar_lea.vmem %s0, %s83
      $region20: #{_lambda_.32} parent=15 // pred_fallthru
        _
    $region16: #{_lambda_.32} parent=5 // pred_fallthru
      _
    %p85 = scmp.le.s32.totalorder 1, %s7
    %p86 = scmp.lt.s32.totalorder %s7, 3
    %p87 = pnand %p85, %p86
    %p88 = pneg %p87
    // Predicated region
    $region21: #{_lambda_.32} parent=5 // pred_check
      _
    $region22: #{_lambda_.32} parent=5 // pred_check_branch
      %90 = sbr.rel (%p87) target = $region24
    $region23: #{_lambda_.32} parent=5 // pred_region
      %s91 = ssub.s32 %s7, 1
      %p92 = scmp.lt.s32.totalorder %s12, 1
      %s93 = scalar_select %p92, %s12, 1
      %s94 = smul.addr %s93, 4
      %s95 = scalar_lea.vmem %s0, %s94
      %p96 = pneg %p33
      %p97 = pneg %p30
      %p98 = pneg %p59
      %p99 = pneg %p56
      %p100 = scmp.lt.s32.totalorder %s12, 1
      %s101 = scalar_select %p100, %s12, 1
      %s102 = smul.addr %s101, 4
      %s103 = scalar_lea.vmem %s1, %s102
      %p104 = scmp.lt.s32.totalorder %s12, 1
      %s105 = scalar_select %p104, %s12, 1
      %s106 = smul.addr %s105, 4
      %s107 = scalar_lea.vmem %s0, %s106
      %p108 = scmp.lt.s32.totalorder %s12, 1
      %s109 = scalar_select %p108, %s12, 1
      %s110 = smul.addr %s109, 4
      %s111 = scalar_lea.vmem %s1, %s110
      %v113 = vld [vmem:[%s107] sm:$0xf]
      %v115 = vunpack.c.l.b16 %v113
      %v116 = vpack.c.b16 %v115, %v115
      %117 = vrot.lane.b32.xlu0 %v116, 120
      %v118 = vpop.permute.xlu0 %117
      %vm119 = vcmask 15360
      %v121 = vsel %vm119, %v113, 0
      %v124 = vsel %vm119, %v118, 0
      %126 = vmatpush.bf16.xpose.msra.mxu0 0
      %127 = vmatpush.bf16.xpose.msra.mxu0 0
      %128 = vmatpush.bf16.xpose.msra.mxu0 0
      %129 = vmatpush.bf16.xpose.msra.mxu0 0
      %130 = vmatpush.bf16.xpose.msra.mxu0 0
      %131 = vmatpush.bf16.xpose.msra.mxu0 0
      %132 = vmatpush.bf16.xpose.msra.mxu0 0
      %133 = vmatpush.bf16.xpose.msra.mxu0 %v124
      %134 = vmatmul.bf16.gmra.mxu0 %v121
      %v135 = vpop.f32.mrf.mxu0
      %v136 = vadd.f32 0.0, %v135
      %v137 = vpop.f32.mrf.mxu0
      %138 = vdwg.mxu0
      %vm139 = vcmask 64512
      %v140 = vsel %vm139, %v136, -inf
      %141 = vmax.xlane.f32.xlu0 %v140
      %v142 = vpop.xlane.xlu0 %141
      %v143 = vsub.f32 %v136, %v142
      %v144 = vmul.f32 %v143, 1.442695
      %v145 = vpow.pop %v144
      %v146 = vsel %vm139, %v145, 0.0
      %147 = vadd.xlane.f32.xlu0 %v146
      %v148 = vpop.xlane.xlu0 %147
      %v149 = vpack.c.bf16 %v145, %v145
      %150 = vrot.lane.b32.xlu0 %v116, 112
      %v151 = vpop.permute.xlu0 %150
      %v153 = vsel %vm139, %v149, 0
      %vm155 = vcmask 1043456
      %v157 = vsel %vm155, %v151, 0
      %159 = vmatpush.bf16.msra.mxu0 0
      %160 = vmatpush.bf16.msra.mxu0 0
      %161 = vmatpush.bf16.msra.mxu0 0
      %162 = vmatpush.bf16.msra.mxu0 0
      %163 = vmatpush.bf16.msra.mxu0 0
      %164 = vmatpush.bf16.msra.mxu0 0
      %165 = vmatpush.bf16.msra.mxu0 0
      %166 = vmatpush.bf16.msra.mxu0 %v157
      %167 = vmatmul.bf16.gmra.mxu0 %v153
      %v168 = vpop.f32.mrf.mxu0
      %v169 = vadd.f32 0.0, %v168
      %v170 = vpop.f32.mrf.mxu0
      %171 = vdwg.mxu0
      %v172 = vrcp.pop %v148
      %v173 = vmul.f32 %v169, %v172
      %174 = vrot.lane.b32.xlu0 %v116, 126
      %v175 = vpop.permute.xlu0 %174
      %176 = vrot.lane.b32.xlu0 %v116, 118
      %v177 = vpop.permute.xlu0 %176
      %v179 = vsel %vm119, %v175, 0
      %v182 = vsel %vm119, %v177, 0
      %184 = vmatpush.bf16.xpose.msra.mxu0 0
      %185 = vmatpush.bf16.xpose.msra.mxu0 0
      %186 = vmatpush.bf16.xpose.msra.mxu0 0
      %187 = vmatpush.bf16.xpose.msra.mxu0 0
      %188 = vmatpush.bf16.xpose.msra.mxu0 0
      %189 = vmatpush.bf16.xpose.msra.mxu0 0
      %190 = vmatpush.bf16.xpose.msra.mxu0 0
      %191 = vmatpush.bf16.xpose.msra.mxu0 %v182
      %192 = vmatmul.bf16.gmra.mxu0 %v179
      %v193 = vpop.f32.mrf.mxu0
      %v194 = vadd.f32 0.0, %v193
      %v195 = vpop.f32.mrf.mxu0
      %196 = vdwg.mxu0
      %v197 = vsel %vm139, %v194, -inf
      %198 = vmax.xlane.f32.xlu0 %v197
      %v199 = vpop.xlane.xlu0 %198
      %v200 = vsub.f32 %v194, %v199
      %v201 = vmul.f32 %v200, 1.442695
      %v202 = vpow.pop %v201
      %v203 = vsel %vm139, %v202, 0.0
      %204 = vadd.xlane.f32.xlu0 %v203
      %v205 = vpop.xlane.xlu0 %204
      %v206 = vpack.c.bf16 %v202, %v202
      %207 = vrot.lane.b32.xlu0 %v116, 110
      %v208 = vpop.permute.xlu0 %207
      %v210 = vsel %vm139, %v206, 0
      %v213 = vsel %vm155, %v208, 0
      %215 = vmatpush.bf16.msra.mxu0 0
      %216 = vmatpush.bf16.msra.mxu0 0
      %217 = vmatpush.bf16.msra.mxu0 0
      %218 = vmatpush.bf16.msra.mxu0 0
      %219 = vmatpush.bf16.msra.mxu0 0
      %220 = vmatpush.bf16.msra.mxu0 0
      %221 = vmatpush.bf16.msra.mxu0 0
      %222 = vmatpush.bf16.msra.mxu0 %v213
      %223 = vmatmul.bf16.gmra.mxu0 %v210
      %v224 = vpop.f32.mrf.mxu0
      %v225 = vadd.f32 0.0, %v224
      %v226 = vpop.f32.mrf.mxu0
      %227 = vdwg.mxu0
      %v228 = vrcp.pop %v205
      %v229 = vmul.f32 %v225, %v228
      %230 = vrot.lane.b32.xlu0 %v116, 124
      %v231 = vpop.permute.xlu0 %230
      %232 = vrot.lane.b32.xlu0 %v116, 116
      %v233 = vpop.permute.xlu0 %232
      %v235 = vsel %vm119, %v231, 0
      %v238 = vsel %vm119, %v233, 0
      %240 = vmatpush.bf16.xpose.msra.mxu0 0
      %241 = vmatpush.bf16.xpose.msra.mxu0 0
      %242 = vmatpush.bf16.xpose.msra.mxu0 0
      %243 = vmatpush.bf16.xpose.msra.mxu0 0
      %244 = vmatpush.bf16.xpose.msra.mxu0 0
      %245 = vmatpush.bf16.xpose.msra.mxu0 0
      %246 = vmatpush.bf16.xpose.msra.mxu0 0
      %247 = vmatpush.bf16.xpose.msra.mxu0 %v238
      %248 = vmatmul.bf16.gmra.mxu0 %v235
      %v249 = vpop.f32.mrf.mxu0
      %v250 = vadd.f32 0.0, %v249
      %v251 = vpop.f32.mrf.mxu0
      %252 = vdwg.mxu0
      %v253 = vsel %vm139, %v250, -inf
      %254 = vmax.xlane.f32.xlu0 %v253
      %v255 = vpop.xlane.xlu0 %254
      %v256 = vsub.f32 %v250, %v255
      %v257 = vmul.f32 %v256, 1.442695
      %v258 = vpow.pop %v257
      %v259 = vsel %vm139, %v258, 0.0
      %260 = vadd.xlane.f32.xlu0 %v259
      %v261 = vpop.xlane.xlu0 %260
      %v262 = vpack.c.bf16 %v258, %v258
      %263 = vrot.lane.b32.xlu0 %v116, 108
      %v264 = vpop.permute.xlu0 %263
      %v266 = vsel %vm139, %v262, 0
      %v269 = vsel %vm155, %v264, 0
      %271 = vmatpush.bf16.msra.mxu0 0
      %272 = vmatpush.bf16.msra.mxu0 0
      %273 = vmatpush.bf16.msra.mxu0 0
      %274 = vmatpush.bf16.msra.mxu0 0
      %275 = vmatpush.bf16.msra.mxu0 0
      %276 = vmatpush.bf16.msra.mxu0 0
      %277 = vmatpush.bf16.msra.mxu0 0
      %278 = vmatpush.bf16.msra.mxu0 %v269
      %279 = vmatmul.bf16.gmra.mxu0 %v266
      %v280 = vpop.f32.mrf.mxu0
      %v281 = vadd.f32 0.0, %v280
      %v282 = vpop.f32.mrf.mxu0
      %283 = vdwg.mxu0
      %v284 = vrcp.pop %v261
      %v285 = vmul.f32 %v281, %v284
      %286 = vrot.lane.b32.xlu0 %v116, 122
      %v287 = vpop.permute.xlu0 %286
      %288 = vrot.lane.b32.xlu0 %v116, 114
      %v289 = vpop.permute.xlu0 %288
      %v291 = vsel %vm119, %v287, 0
      %v294 = vsel %vm119, %v289, 0
      %296 = vmatpush.bf16.xpose.msra.mxu0 0
      %297 = vmatpush.bf16.xpose.msra.mxu0 0
      %298 = vmatpush.bf16.xpose.msra.mxu0 0
      %299 = vmatpush.bf16.xpose.msra.mxu0 0
      %300 = vmatpush.bf16.xpose.msra.mxu0 0
      %301 = vmatpush.bf16.xpose.msra.mxu0 0
      %302 = vmatpush.bf16.xpose.msra.mxu0 0
      %303 = vmatpush.bf16.xpose.msra.mxu0 %v294
      %304 = vmatmul.bf16.gmra.mxu0 %v291
      %v305 = vpop.f32.mrf.mxu0
      %v306 = vadd.f32 0.0, %v305
      %v307 = vpop.f32.mrf.mxu0
      %308 = vdwg.mxu0
      %v309 = vsel %vm139, %v306, -inf
      %310 = vmax.xlane.f32.xlu0 %v309
      %v311 = vpop.xlane.xlu0 %310
      %v312 = vsub.f32 %v306, %v311
      %v313 = vmul.f32 %v312, 1.442695
      %v314 = vpow.pop %v313
      %v315 = vsel %vm139, %v314, 0.0
      %316 = vadd.xlane.f32.xlu0 %v315
      %v317 = vpop.xlane.xlu0 %316
      %v318 = vpack.c.bf16 %v314, %v314
      %319 = vrot.lane.b32.xlu0 %v116, 106
      %v320 = vpop.permute.xlu0 %319
      %v322 = vsel %vm139, %v318, 0
      %v325 = vsel %vm155, %v320, 0
      %327 = vmatpush.bf16.msra.mxu0 0
      %328 = vmatpush.bf16.msra.mxu0 0
      %329 = vmatpush.bf16.msra.mxu0 0
      %330 = vmatpush.bf16.msra.mxu0 0
      %331 = vmatpush.bf16.msra.mxu0 0
      %332 = vmatpush.bf16.msra.mxu0 0
      %333 = vmatpush.bf16.msra.mxu0 0
      %334 = vmatpush.bf16.msra.mxu0 %v325
      %335 = vmatmul.bf16.gmra.mxu0 %v322
      %v336 = vpop.f32.mrf.mxu0
      %v337 = vadd.f32 0.0, %v336
      %v338 = vpop.f32.mrf.mxu0
      %339 = vdwg.mxu0
      %v340 = vrcp.pop %v317
      %v341 = vmul.f32 %v337, %v340
      %343 = vrot.lane.b32.xlu0 %v229, 2
      %v344 = vpop.permute.xlu0 %343
      %347 = vrot.lane.b32.xlu0 %v285, 4
      %v348 = vpop.permute.xlu0 %347
      %351 = vrot.lane.b32.xlu0 %v341, 6
      %v352 = vpop.permute.xlu0 %351
      %v354 = vsel %vm119, %v173, %v344
      %vm355 = vcmask 31744
      %v356 = vsel %vm355, %v354, %v348
      %vm357 = vcmask 48128
      %v358 = vsel %vm357, %v356, %v352
      %v359 = vpack.c.bf16 %v358, %v358
      %vm360 = vcmask 60416
      %361 = vst.msk [vmem:[%s111] sm:$0xf] %vm360, %v359
      %p362 = scmp.lt.s32.totalorder %s12, 1
      %s363 = scalar_select %p362, %s12, 1
      %s364 = smul.addr %s363, 4
      %s365 = scalar_lea.vmem %s1, %s364
      // Predicated region
      $region25: #{_lambda_.32} parent=23 // pred_check
        %p366 = pneg %p56
      $region26: #{_lambda_.32} parent=23 // pred_check_branch
        %368 = sbr.rel (%p366) target = $region28
      $region27: #{_lambda_.32} parent=23 // pred_region
        _
      $region28: #{_lambda_.32} parent=23 // pred_fallthru
        _
    $region24: #{_lambda_.32} parent=5 // pred_fallthru
      _
    %p369 = scmp.le.s32.totalorder 2, %s7
    // Predicated region
    $region29: #{_lambda_.32} parent=5 // pred_check
      %p370 = pneg %p369
    $region30: #{_lambda_.32} parent=5 // pred_check_branch
      %372 = sbr.rel (%p370) target = $region32
    $region31: #{_lambda_.32} parent=5 // pred_region
      %s373 = ssub.s32 %s7, 2
      // Predicated region
      $region33: #{_lambda_.32} parent=31 // pred_check
        %p374 = pneg %p62
      $region34: #{_lambda_.32} parent=31 // pred_check_branch
        %376 = sbr.rel (%p374) target = $region36
      $region35: #{_lambda_.32} parent=31 // pred_region
        %p377 = scmp.lt.s32.totalorder %s13, 1
        %s378 = scalar_select %p377, %s13, 1
        %s379 = smul.addr %s378, 4
        %s380 = scalar_lea.vmem %s1, %s379
      $region36: #{_lambda_.32} parent=31 // pred_fallthru
        _
    $region32: #{_lambda_.32} parent=5 // pred_fallthru
      _
  $region6: #{_lambda_.32} parent=0 // loop_footer
    %s11 = sadd.s32 1, %s7
  $region7: #{_lambda_.32} parent=0 // loop_footer_branch
    %6 = sbr.rel target = $region3
  $region8: #{_lambda_.32} parent=0 // loop_exit
    _

// kernel: _lambda_.34
$region0: #{_lambda_.34}
  #allocation0 [shape = 'u32[]', space=smem, size = 0x4, offset = 0x4, fixed_abs, tag = 'smem constant byte address 0x4 - core index']
  #allocation1 [shape = 'u32[72,128]{1,0:T(1,128)}', space=vmem, size = 0x9000, scoped, tag = 'internal scratch']
  %s0 = inlined_call_operand.vmem [shape: bf16[2,2,2,4,4,1], index: 0, kind: input, shape index: {}]
  %s1 = inlined_call_operand.vmem [shape: bf16[9,4], index: 1, kind: input, shape index: {}]
  %s2 = inlined_call_operand.vmem [shape: f32[1,4], index: 2, kind: input, shape index: {}]
  %s3 = inlined_call_operand.vmem [shape: bf16[2,3,3,4], index: 3, kind: output, shape index: {}]
  %s4 = sld [smem:[#allocation0]]
  $region52: #{_lambda_.34} parent=0
    _
  %s6 = ssub.s32 1, %s4
  %s7 = scalar_select 0, %s6, %s4
  loop: start=0, step=1, limit=4
  $region2: #{_lambda_.34} parent=0 // loop_pre_header
    _
  $region3: #{_lambda_.34} parent=0 // loop_header
    %s9 = sphi 0, %s13
    %p10 = scmp.ge.s32.totalorder %s9, 4
    %s19 = sphi 0, %s21
    %s22 = sphi 0, %s19
    %s23 = sphi 0, %s22
    %s39 = sphi 0, %s23
    %s43 = sphi 0, %s43
    %s45 = sphi 0, %s43
    %s46 = sphi 0, %s45
    %s60 = sphi 0, %s46
    %s64 = sphi 0, %s64
    %s66 = sphi 0, %s64
    %s67 = sphi 0, %s66
    %s81 = sphi 0, %s67
    %s87 = sphi 0, %s89
    %s90 = sphi 0, %s87
    %s91 = sphi 0, %s90
    %s107 = sphi 0, %s91
  $region4: #{_lambda_.34} parent=0 // loop_header_branch
    %12 = sbr.rel (%p10) target = $region8
  $region5: #{_lambda_.34} parent=0 // loop_body
    %s14 = ssub.s32 %s9, 1
    %s15 = ssub.s32 %s9, 2
    %s16 = sadd.s32 %s9, 1
    %s17 = ssub.s32 %s9, %s16
    %p18 = scmp.eq.s32.totalorder %s17, 0
    %s20 = sadd.s32 %s19, 1
    %s21 = scalar_select %p18, %s19, %s20
    %p24 = pneg %p18
    %p25 = scmp.eq.s32.totalorder %s9, 1
    %p26 = por %p24, %p25
    %p27 = scmp.ne.s32.totalorder %s19, %s22
    %p28 = scmp.eq.s32.totalorder %s9, 0
    %p29 = por %p27, %p28
    %p30 = scmp.ne.s32.totalorder %s19, %s22
    %p31 = scmp.eq.s32.totalorder %s14, 1
    %p32 = por %p30, %p31
    %p33 = scmp.ne.s32.totalorder %s22, %s23
    %p34 = scmp.eq.s32.totalorder %s14, 0
    %p35 = por %p33, %p34
    %p36 = scmp.ne.s32.totalorder %s22, %s23
    %p37 = scmp.eq.s32.totalorder %s15, 1
    %p38 = por %p36, %p37
    %p40 = scmp.ne.s32.totalorder %s23, %s39
    %p41 = scmp.eq.s32.totalorder %s15, 0
    %p42 = por %p40, %p41
    %s44 = sadd.s32 %s43, 1
    %p47 = scmp.eq.s32.totalorder %s9, 1
    %p48 = scmp.ne.s32.totalorder %s43, %s45
    %p49 = scmp.eq.s32.totalorder %s9, 0
    %p50 = por %p48, %p49
    %p51 = scmp.ne.s32.totalorder %s43, %s45
    %p52 = scmp.eq.s32.totalorder %s14, 1
    %p53 = por %p51, %p52
    %p54 = scmp.ne.s32.totalorder %s45, %s46
    %p55 = scmp.eq.s32.totalorder %s14, 0
    %p56 = por %p54, %p55
    %p57 = scmp.ne.s32.totalorder %s45, %s46
    %p58 = scmp.eq.s32.totalorder %s15, 1
    %p59 = por %p57, %p58
    %p61 = scmp.ne.s32.totalorder %s46, %s60
    %p62 = scmp.eq.s32.totalorder %s15, 0
    %p63 = por %p61, %p62
    %s65 = sadd.s32 %s64, 1
    %p68 = scmp.eq.s32.totalorder %s9, 1
    %p69 = scmp.ne.s32.totalorder %s64, %s66
    %p70 = scmp.eq.s32.totalorder %s9, 0
    %p71 = por %p69, %p70
    %p72 = scmp.ne.s32.totalorder %s64, %s66
    %p73 = scmp.eq.s32.totalorder %s14, 1
    %p74 = por %p72, %p73
    %p75 = scmp.ne.s32.totalorder %s66, %s67
    %p76 = scmp.eq.s32.totalorder %s14, 0
    %p77 = por %p75, %p76
    %p78 = scmp.ne.s32.totalorder %s66, %s67
    %p79 = scmp.eq.s32.totalorder %s15, 1
    %p80 = por %p78, %p79
    %p82 = scmp.ne.s32.totalorder %s67, %s81
    %p83 = scmp.eq.s32.totalorder %s15, 0
    %p84 = por %p82, %p83
    %s85 = ssub.s32 %s9, %s16
    %p86 = scmp.eq.s32.totalorder %s85, 0
    %s88 = sadd.s32 %s87, 1
    %s89 = scalar_select %p86, %s87, %s88
    %p92 = pneg %p86
    %p93 = scmp.eq.s32.totalorder %s9, 1
    %p94 = por %p92, %p93
    %p95 = scmp.ne.s32.totalorder %s87, %s90
    %p96 = scmp.eq.s32.totalorder %s9, 0
    %p97 = por %p95, %p96
    %p98 = scmp.ne.s32.totalorder %s87, %s90
    %p99 = scmp.eq.s32.totalorder %s14, 1
    %p100 = por %p98, %p99
    %p101 = scmp.ne.s32.totalorder %s90, %s91
    %p102 = scmp.eq.s32.totalorder %s14, 0
    %p103 = por %p101, %p102
    %p104 = scmp.ne.s32.totalorder %s90, %s91
    %p105 = scmp.eq.s32.totalorder %s15, 1
    %p106 = por %p104, %p105
    %p108 = scmp.ne.s32.totalorder %s91, %s107
    %p109 = scmp.eq.s32.totalorder %s15, 0
    %p110 = por %p108, %p109
    %p111 = scmp.le.s32.totalorder 1, %s9
    %p112 = scmp.lt.s32.totalorder %s9, 3
    %p113 = pnand %p111, %p112
    %p114 = pneg %p113
    // Predicated region
    $region9: #{_lambda_.34} parent=5 // pred_check
      _
    $region10: #{_lambda_.34} parent=5 // pred_check_branch
      %116 = sbr.rel (%p113) target = $region12
    $region11: #{_lambda_.34} parent=5 // pred_region
      %s117 = ssub.s32 %s9, 1
      // Predicated region
      $region13: #{_lambda_.34} parent=11 // pred_check
        %p118 = pneg %p56
      $region14: #{_lambda_.34} parent=11 // pred_check_branch
        %120 = sbr.rel (%p118) target = $region16
      $region15: #{_lambda_.34} parent=11 // pred_region
        _
      $region16: #{_lambda_.34} parent=11 // pred_fallthru
        _
      // Predicated region
      $region17: #{_lambda_.34} parent=11 // pred_check
        %p121 = pneg %p77
      $region18: #{_lambda_.34} parent=11 // pred_check_branch
        %123 = sbr.rel (%p121) target = $region20
      $region19: #{_lambda_.34} parent=11 // pred_region
        _
      $region20: #{_lambda_.34} parent=11 // pred_fallthru
        _
    $region12: #{_lambda_.34} parent=5 // pred_fallthru
      _
    %p124 = scmp.lt.s32.totalorder %s9, 2
    // Predicated region
    $region21: #{_lambda_.34} parent=5 // pred_check
      %p125 = pneg %p124
    $region22: #{_lambda_.34} parent=5 // pred_check_branch
      %127 = sbr.rel (%p125) target = $region24
    $region23: #{_lambda_.34} parent=5 // pred_region
      // Predicated region
      $region25: #{_lambda_.34} parent=23 // pred_check
        %p128 = pneg %p29
      $region26: #{_lambda_.34} parent=23 // pred_check_branch
        %130 = sbr.rel (%p128) target = $region28
      $region27: #{_lambda_.34} parent=23 // pred_region
        %p131 = scmp.lt.s32.totalorder %s9, 1
        %s132 = scalar_select %p131, %s9, 1
        %s133 = smul.addr %s132, 16
        %s134 = smul.addr %s133, 2
        %s135 = scalar_lea.vmem %s0, %s134
      $region28: #{_lambda_.34} parent=23 // pred_fallthru
        _
    $region24: #{_lambda_.34} parent=5 // pred_fallthru
      _
    %p136 = scmp.le.s32.totalorder 1, %s9
    %p137 = scmp.lt.s32.totalorder %s9, 3
    %p138 = pnand %p136, %p137
    %p139 = pneg %p138
    // Predicated region
    $region29: #{_lambda_.34} parent=5 // pred_check
      _
    $region30: #{_lambda_.34} parent=5 // pred_check_branch
      %141 = sbr.rel (%p138) target = $region32
    $region31: #{_lambda_.34} parent=5 // pred_region
      %s142 = ssub.s32 %s9, 1
      %p143 = scmp.lt.s32.totalorder %s14, 1
      %s144 = scalar_select %p143, %s14, 1
      %s145 = smul.addr %s144, 16
      %s146 = smul.addr %s145, 2
      %s147 = scalar_lea.vmem %s0, %s146
      %p148 = pneg %p35
      %p149 = pneg %p32
      %p150 = pneg %p56
      %p151 = pneg %p53
      %p152 = pneg %p77
      %p153 = pneg %p74
      %p154 = pneg %p103
      %p155 = pneg %p100
      %p156 = scmp.lt.s32.totalorder %s14, 1
      %s157 = scalar_select %p156, %s14, 1
      %s158 = smul.addr %s157, 3
      %s159 = smul.addr %s158, 2
      %s160 = scalar_lea.vmem %s3, %s159
      %p161 = scmp.lt.s32.totalorder %s14, 1
      %s162 = scalar_select %p161, %s14, 1
      %s163 = smul.addr %s162, 16
      %s164 = smul.addr %s163, 2
      %s165 = scalar_lea.vmem %s0, %s164
      %p166 = scmp.lt.s32.totalorder %s14, 1
      %s167 = scalar_select %p166, %s14, 1
      %s168 = smul.addr %s167, 3
      %s169 = smul.addr %s168, 2
      %s170 = scalar_lea.vmem %s3, %s169
      %v172 = vld [vmem:[%s2] sm:$0x1]
      loop: start=0, step=1, limit=3
      $region33: #{_lambda_.34} parent=31 // loop_pre_header
        _
      $region34: #{_lambda_.34} parent=31 // loop_header
        %s174 = sphi 0, %s178
        %p175 = scmp.ge.s32.totalorder %s174, 3
      $region35: #{_lambda_.34} parent=31 // loop_header_branch
        %177 = sbr.rel (%p175) target = $region39
      $region36: #{_lambda_.34} parent=31 // loop_body
        %s179 = smul.addr %s174, 2
        %s180 = scalar_lea.vmem %s165, %s179
        %v181 = vld [vmem:[%s180] sm:$0x3]
        %s182 = sadd.s32 %s174, 4
        %s183 = smul.addr %s182, 2
        %s184 = scalar_lea.vmem %s165, %s183
        %v185 = vld [vmem:[%s184] sm:$0x3]
        %s186 = sadd.s32 %s174, 8
        %s187 = smul.addr %s186, 2
        %s188 = scalar_lea.vmem %s165, %s187
        %v189 = vld [vmem:[%s188] sm:$0x3]
        %s190 = sadd.s32 %s182, 8
        %s191 = smul.addr %s190, 2
        %s192 = scalar_lea.vmem %s165, %s191
        %v193 = vld [vmem:[%s192] sm:$0x3]
        %s194 = sadd.s32 %s174, 1
        %s195 = smul.addr %s194, 2
        %s196 = scalar_lea.vmem %s165, %s195
        %v197 = vld [vmem:[%s196] sm:$0x3]
        %s198 = sadd.s32 %s194, 4
        %s199 = smul.addr %s198, 2
        %s200 = scalar_lea.vmem %s165, %s199
        %v201 = vld [vmem:[%s200] sm:$0x3]
        %203 = vst [vmem:[#allocation1] ss:$4 sm:$0xff] %v185
        %v204 = vld.sshfl [vmem:[#allocation1] sm:$0xff pattern:$0x73625140]
        %206 = vrot.lane.b32.xlu0 %v204, 1
        %v207 = vpop.permute.xlu0 %206
        %209 = vst [vmem:[#allocation1] ss:$4 sm:$0xff] %v181
        %v210 = vld.sshfl [vmem:[#allocation1] sm:$0xff pattern:$0x73625140]
        %v211 = vshrl.u32 %v210, 16
        %v213 = vshll.u32 %v210, 16
        %v215 = vrot.slane %v213, 1
        %v216 = vor.u32 %v211, %v215
        %217 = vrot.lane.b32.xlu0 %v216, 2
        %v218 = vpop.permute.xlu0 %217
        %220 = vst [vmem:[#allocation1] ss:$4 sm:$0xff] %v189
        %v221 = vld.sshfl [vmem:[#allocation1] sm:$0xff pattern:$0x73625140]
        %223 = vrot.lane.b32.xlu0 %v221, 3
        %v224 = vpop.permute.xlu0 %223
        %226 = vst [vmem:[#allocation1] ss:$4 sm:$0xff] %v193
        %v227 = vld.sshfl [vmem:[#allocation1] sm:$0xff pattern:$0x73625140]
        %229 = vrot.lane.b32.xlu0 %v227, 4
        %v230 = vpop.permute.xlu0 %229
        %231 = vst [vmem:[#allocation1] ss:$4 sm:$0xff] %v189
        %v232 = vld.sshfl [vmem:[#allocation1] sm:$0xff pattern:$0x73625140]
        %v233 = vshrl.u32 %v232, 16
        %v235 = vshll.u32 %v232, 16
        %v237 = vrot.slane %v235, 1
        %v238 = vor.u32 %v233, %v237
        %239 = vrot.lane.b32.xlu0 %v238, 5
        %v240 = vpop.permute.xlu0 %239
        %242 = vst [vmem:[#allocation1] ss:$4 sm:$0xff] %v197
        %v243 = vld.sshfl [vmem:[#allocation1] sm:$0xff pattern:$0x73625140]
        %245 = vrot.lane.b32.xlu0 %v243, 6
        %v246 = vpop.permute.xlu0 %245
        %248 = vst [vmem:[#allocation1] ss:$4 sm:$0xff] %v201
        %v249 = vld.sshfl [vmem:[#allocation1] sm:$0xff pattern:$0x73625140]
        %251 = vrot.lane.b32.xlu0 %v249, 7
        %v252 = vpop.permute.xlu0 %251
        %253 = vst [vmem:[#allocation1] ss:$4 sm:$0xff] %v197
        %v254 = vld.sshfl [vmem:[#allocation1] sm:$0xff pattern:$0x73625140]
        %v255 = vshrl.u32 %v254, 16
        %v257 = vshll.u32 %v254, 16
        %v259 = vrot.slane %v257, 1
        %v260 = vor.u32 %v255, %v259
        %261 = vrot.lane.b32.xlu0 %v260, 8
        %v262 = vpop.permute.xlu0 %261
        %vm263 = vcmask 7168
        %v265 = vsel %vm263, %v181, %v207
        %vm266 = vcmask 15360
        %v268 = vsel %vm266, %v265, %v218
        %vm269 = vcmask 23552
        %v271 = vsel %vm269, %v268, %v224
        %vm272 = vcmask 31744
        %v274 = vsel %vm272, %v271, %v230
        %vm275 = vcmask 39936
        %v277 = vsel %vm275, %v274, %v240
        %vm278 = vcmask 48128
        %v280 = vsel %vm278, %v277, %v246
        %vm281 = vcmask 56320
        %v283 = vsel %vm281, %v280, %v252
        %vm284 = vcmask 64512
        %v286 = vsel %vm284, %v283, %v262
        %v287 = vld [vmem:[%s1] sm:$0xf]
        %v288 = vld [vmem:[%s1 + $0x4] sm:$0x1]
        %v290 = vperm.slane %v172, 0
        %v294 = vunpack.c.l.b16 %v287
        %v295 = vunpack.c.l.b16 %v288
        %v296 = vpack.c.b16 %v295, %v294
        %vm297 = vcmask 72704
        %v298 = vsel %vm297, %v286, 0
        %vm300 = vcmask 1043456
        %vm301 = vcmask 1044480
        %v302 = vsel %vm300, 4294967295, 65535
        %v303 = vsel %vm301, %v302, 0
        %v305 = vand.u32 %v296, %v303
        %307 = vmatpush.bf16.msra.mxu0 0
        %308 = vmatpush.bf16.msra.mxu0 0
        %309 = vmatpush.bf16.msra.mxu0 0
        %310 = vmatpush.bf16.msra.mxu0 0
        %311 = vmatpush.bf16.msra.mxu0 0
        %312 = vmatpush.bf16.msra.mxu0 0
        %313 = vmatpush.bf16.msra.mxu0 0
        %314 = vmatpush.bf16.msra.mxu0 %v305
        %315 = vmatmul.bf16.gmra.mxu0 %v298
        %v316 = vpop.f32.mrf.mxu0
        %v317 = vadd.f32 %v290, %v316
        %v318 = vpop.f32.mrf.mxu0
        %319 = vdwg.mxu0
        %v320 = vmax.f32 %v317, 0.0
        %v321 = vpack.c.bf16 %v320, %v320
        %s322 = smul.addr %s174, 2
        %s323 = scalar_lea.vmem %s170, %s322
        %vm324 = vcmask 25600
        %vm325 = vsmask.f32 1280
        %vm326 = vmand %vm324, %vm325
        %v327 = vld [vmem:[%s323] sm:$0x3]
        %v328 = vsel %vm326, %v321, %v327
        %329 = vst [vmem:[%s323] sm:$0x3] %v328
      $region37: #{_lambda_.34} parent=31 // loop_footer
        %s178 = sadd.s32 1, %s174
      $region38: #{_lambda_.34} parent=31 // loop_footer_branch
        %173 = sbr.rel target = $region34
      $region39: #{_lambda_.34} parent=31 // loop_exit
        _
      %p330 = scmp.lt.s32.totalorder %s14, 1
      %s331 = scalar_select %p330, %s14, 1
      %s332 = smul.addr %s331, 3
      %s333 = smul.addr %s332, 2
      %s334 = scalar_lea.vmem %s3, %s333
      // Predicated region
      $region40: #{_lambda_.34} parent=31 // pred_check
        %p335 = pneg %p100
      $region41: #{_lambda_.34} parent=31 // pred_check_branch
        %337 = sbr.rel (%p335) target = $region43
      $region42: #{_lambda_.34} parent=31 // pred_region
        _
      $region43: #{_lambda_.34} parent=31 // pred_fallthru
        _
    $region32: #{_lambda_.34} parent=5 // pred_fallthru
      _
    %p338 = scmp.le.s32.totalorder 2, %s9
    // Predicated region
    $region44: #{_lambda_.34} parent=5 // pred_check
      %p339 = pneg %p338
    $region45: #{_lambda_.34} parent=5 // pred_check_branch
      %341 = sbr.rel (%p339) target = $region47
    $region46: #{_lambda_.34} parent=5 // pred_region
      %s342 = ssub.s32 %s9, 2
      // Predicated region
      $region48: #{_lambda_.34} parent=46 // pred_check
        %p343 = pneg %p106
      $region49: #{_lambda_.34} parent=46 // pred_check_branch
        %345 = sbr.rel (%p343) target = $region51
      $region50: #{_lambda_.34} parent=46 // pred_region
        %p346 = scmp.lt.s32.totalorder %s15, 1
        %s347 = scalar_select %p346, %s15, 1
        %s348 = smul.addr %s347, 3
        %s349 = smul.addr %s348, 2
        %s350 = scalar_lea.vmem %s3, %s349
      $region51: #{_lambda_.34} parent=46 // pred_fallthru
        _
    $region47: #{_lambda_.34} parent=5 // pred_fallthru
      _
  $region6: #{_lambda_.34} parent=0 // loop_footer
    %s13 = sadd.s32 1, %s9
  $region7: #{_lambda_.34} parent=0 // loop_footer_branch
    %8 = sbr.rel target = $region3
  $region8: #{_lambda_.34} parent=0 // loop_exit
    _

// kernel: _lambda_.36
$region0: #{_lambda_.36}
  #allocation0 [shape = 'u32[]', space=smem, size = 0x4, offset = 0x4, fixed_abs, tag = 'smem constant byte address 0x4 - core index']
  #allocation1 [shape = 'u32[72,128]{1,0:T(1,128)}', space=vmem, size = 0x9000, scoped, tag = 'internal scratch']
  %s0 = inlined_call_operand.vmem [shape: bf16[2,2,2,4,4,1], index: 0, kind: input, shape index: {}]
  %s1 = inlined_call_operand.vmem [shape: bf16[1,4], index: 1, kind: input, shape index: {}]
  %s2 = inlined_call_operand.vmem [shape: f32[1,4], index: 2, kind: input, shape index: {}]
  %s3 = inlined_call_operand.vmem [shape: bf16[2,4,4,4], index: 3, kind: output, shape index: {}]
  %s4 = sld [smem:[#allocation0]]
  $region52: #{_lambda_.36} parent=0
    _
  %s6 = ssub.s32 1, %s4
  %s7 = scalar_select 0, %s6, %s4
  loop: start=0, step=1, limit=4
  $region2: #{_lambda_.36} parent=0 // loop_pre_header
    _
  $region3: #{_lambda_.36} parent=0 // loop_header
    %s9 = sphi 0, %s13
    %p10 = scmp.ge.s32.totalorder %s9, 4
    %s19 = sphi 0, %s21
    %s22 = sphi 0, %s19
    %s23 = sphi 0, %s22
    %s39 = sphi 0, %s23
    %s43 = sphi 0, %s43
    %s45 = sphi 0, %s43
    %s46 = sphi 0, %s45
    %s60 = sphi 0, %s46
    %s64 = sphi 0, %s64
    %s66 = sphi 0, %s64
    %s67 = sphi 0, %s66
    %s81 = sphi 0, %s67
    %s87 = sphi 0, %s89
    %s90 = sphi 0, %s87
    %s91 = sphi 0, %s90
    %s107 = sphi 0, %s91
  $region4: #{_lambda_.36} parent=0 // loop_header_branch
    %12 = sbr.rel (%p10) target = $region8
  $region5: #{_lambda_.36} parent=0 // loop_body
    %s14 = ssub.s32 %s9, 1
    %s15 = ssub.s32 %s9, 2
    %s16 = sadd.s32 %s9, 1
    %s17 = ssub.s32 %s9, %s16
    %p18 = scmp.eq.s32.totalorder %s17, 0
    %s20 = sadd.s32 %s19, 1
    %s21 = scalar_select %p18, %s19, %s20
    %p24 = pneg %p18
    %p25 = scmp.eq.s32.totalorder %s9, 1
    %p26 = por %p24, %p25
    %p27 = scmp.ne.s32.totalorder %s19, %s22
    %p28 = scmp.eq.s32.totalorder %s9, 0
    %p29 = por %p27, %p28
    %p30 = scmp.ne.s32.totalorder %s19, %s22
    %p31 = scmp.eq.s32.totalorder %s14, 1
    %p32 = por %p30, %p31
    %p33 = scmp.ne.s32.totalorder %s22, %s23
    %p34 = scmp.eq.s32.totalorder %s14, 0
    %p35 = por %p33, %p34
    %p36 = scmp.ne.s32.totalorder %s22, %s23
    %p37 = scmp.eq.s32.totalorder %s15, 1
    %p38 = por %p36, %p37
    %p40 = scmp.ne.s32.totalorder %s23, %s39
    %p41 = scmp.eq.s32.totalorder %s15, 0
    %p42 = por %p40, %p41
    %s44 = sadd.s32 %s43, 1
    %p47 = scmp.eq.s32.totalorder %s9, 1
    %p48 = scmp.ne.s32.totalorder %s43, %s45
    %p49 = scmp.eq.s32.totalorder %s9, 0
    %p50 = por %p48, %p49
    %p51 = scmp.ne.s32.totalorder %s43, %s45
    %p52 = scmp.eq.s32.totalorder %s14, 1
    %p53 = por %p51, %p52
    %p54 = scmp.ne.s32.totalorder %s45, %s46
    %p55 = scmp.eq.s32.totalorder %s14, 0
    %p56 = por %p54, %p55
    %p57 = scmp.ne.s32.totalorder %s45, %s46
    %p58 = scmp.eq.s32.totalorder %s15, 1
    %p59 = por %p57, %p58
    %p61 = scmp.ne.s32.totalorder %s46, %s60
    %p62 = scmp.eq.s32.totalorder %s15, 0
    %p63 = por %p61, %p62
    %s65 = sadd.s32 %s64, 1
    %p68 = scmp.eq.s32.totalorder %s9, 1
    %p69 = scmp.ne.s32.totalorder %s64, %s66
    %p70 = scmp.eq.s32.totalorder %s9, 0
    %p71 = por %p69, %p70
    %p72 = scmp.ne.s32.totalorder %s64, %s66
    %p73 = scmp.eq.s32.totalorder %s14, 1
    %p74 = por %p72, %p73
    %p75 = scmp.ne.s32.totalorder %s66, %s67
    %p76 = scmp.eq.s32.totalorder %s14, 0
    %p77 = por %p75, %p76
    %p78 = scmp.ne.s32.totalorder %s66, %s67
    %p79 = scmp.eq.s32.totalorder %s15, 1
    %p80 = por %p78, %p79
    %p82 = scmp.ne.s32.totalorder %s67, %s81
    %p83 = scmp.eq.s32.totalorder %s15, 0
    %p84 = por %p82, %p83
    %s85 = ssub.s32 %s9, %s16
    %p86 = scmp.eq.s32.totalorder %s85, 0
    %s88 = sadd.s32 %s87, 1
    %s89 = scalar_select %p86, %s87, %s88
    %p92 = pneg %p86
    %p93 = scmp.eq.s32.totalorder %s9, 1
    %p94 = por %p92, %p93
    %p95 = scmp.ne.s32.totalorder %s87, %s90
    %p96 = scmp.eq.s32.totalorder %s9, 0
    %p97 = por %p95, %p96
    %p98 = scmp.ne.s32.totalorder %s87, %s90
    %p99 = scmp.eq.s32.totalorder %s14, 1
    %p100 = por %p98, %p99
    %p101 = scmp.ne.s32.totalorder %s90, %s91
    %p102 = scmp.eq.s32.totalorder %s14, 0
    %p103 = por %p101, %p102
    %p104 = scmp.ne.s32.totalorder %s90, %s91
    %p105 = scmp.eq.s32.totalorder %s15, 1
    %p106 = por %p104, %p105
    %p108 = scmp.ne.s32.totalorder %s91, %s107
    %p109 = scmp.eq.s32.totalorder %s15, 0
    %p110 = por %p108, %p109
    %p111 = scmp.le.s32.totalorder 1, %s9
    %p112 = scmp.lt.s32.totalorder %s9, 3
    %p113 = pnand %p111, %p112
    %p114 = pneg %p113
    // Predicated region
    $region9: #{_lambda_.36} parent=5 // pred_check
      _
    $region10: #{_lambda_.36} parent=5 // pred_check_branch
      %116 = sbr.rel (%p113) target = $region12
    $region11: #{_lambda_.36} parent=5 // pred_region
      %s117 = ssub.s32 %s9, 1
      // Predicated region
      $region13: #{_lambda_.36} parent=11 // pred_check
        %p118 = pneg %p56
      $region14: #{_lambda_.36} parent=11 // pred_check_branch
        %120 = sbr.rel (%p118) target = $region16
      $region15: #{_lambda_.36} parent=11 // pred_region
        _
      $region16: #{_lambda_.36} parent=11 // pred_fallthru
        _
      // Predicated region
      $region17: #{_lambda_.36} parent=11 // pred_check
        %p121 = pneg %p77
      $region18: #{_lambda_.36} parent=11 // pred_check_branch
        %123 = sbr.rel (%p121) target = $region20
      $region19: #{_lambda_.36} parent=11 // pred_region
        _
      $region20: #{_lambda_.36} parent=11 // pred_fallthru
        _
    $region12: #{_lambda_.36} parent=5 // pred_fallthru
      _
    %p124 = scmp.lt.s32.totalorder %s9, 2
    // Predicated region
    $region21: #{_lambda_.36} parent=5 // pred_check
      %p125 = pneg %p124
    $region22: #{_lambda_.36} parent=5 // pred_check_branch
      %127 = sbr.rel (%p125) target = $region24
    $region23: #{_lambda_.36} parent=5 // pred_region
      // Predicated region
      $region25: #{_lambda_.36} parent=23 // pred_check
        %p128 = pneg %p29
      $region26: #{_lambda_.36} parent=23 // pred_check_branch
        %130 = sbr.rel (%p128) target = $region28
      $region27: #{_lambda_.36} parent=23 // pred_region
        %p131 = scmp.lt.s32.totalorder %s9, 1
        %s132 = scalar_select %p131, %s9, 1
        %s133 = smul.addr %s132, 16
        %s134 = smul.addr %s133, 2
        %s135 = scalar_lea.vmem %s0, %s134
      $region28: #{_lambda_.36} parent=23 // pred_fallthru
        _
    $region24: #{_lambda_.36} parent=5 // pred_fallthru
      _
    %p136 = scmp.le.s32.totalorder 1, %s9
    %p137 = scmp.lt.s32.totalorder %s9, 3
    %p138 = pnand %p136, %p137
    %p139 = pneg %p138
    // Predicated region
    $region29: #{_lambda_.36} parent=5 // pred_check
      _
    $region30: #{_lambda_.36} parent=5 // pred_check_branch
      %141 = sbr.rel (%p138) target = $region32
    $region31: #{_lambda_.36} parent=5 // pred_region
      %s142 = ssub.s32 %s9, 1
      %p143 = scmp.lt.s32.totalorder %s14, 1
      %s144 = scalar_select %p143, %s14, 1
      %s145 = smul.addr %s144, 16
      %s146 = smul.addr %s145, 2
      %s147 = scalar_lea.vmem %s0, %s146
      %p148 = pneg %p35
      %p149 = pneg %p32
      %p150 = pneg %p56
      %p151 = pneg %p53
      %p152 = pneg %p77
      %p153 = pneg %p74
      %p154 = pneg %p103
      %p155 = pneg %p100
      %p156 = scmp.lt.s32.totalorder %s14, 1
      %s157 = scalar_select %p156, %s14, 1
      %s158 = smul.addr %s157, 4
      %s159 = smul.addr %s158, 2
      %s160 = scalar_lea.vmem %s3, %s159
      %p161 = scmp.lt.s32.totalorder %s14, 1
      %s162 = scalar_select %p161, %s14, 1
      %s163 = smul.addr %s162, 16
      %s164 = smul.addr %s163, 2
      %s165 = scalar_lea.vmem %s0, %s164
      %p166 = scmp.lt.s32.totalorder %s14, 1
      %s167 = scalar_select %p166, %s14, 1
      %s168 = smul.addr %s167, 4
      %s169 = smul.addr %s168, 2
      %s170 = scalar_lea.vmem %s3, %s169
      %v172 = vld [vmem:[%s2] sm:$0x1]
      loop: start=0, step=1, limit=4
      $region33: #{_lambda_.36} parent=31 // loop_pre_header
        _
      $region34: #{_lambda_.36} parent=31 // loop_header
        %s174 = sphi 0, %s178
        %p175 = scmp.ge.s32.totalorder %s174, 4
      $region35: #{_lambda_.36} parent=31 // loop_header_branch
        %177 = sbr.rel (%p175) target = $region39
      $region36: #{_lambda_.36} parent=31 // loop_body
        %s179 = smul.addr %s174, 2
        %s180 = scalar_lea.vmem %s165, %s179
        %v181 = vld [vmem:[%s180] sm:$0x3]
        %v182 = vld [vmem:[%s1] sm:$0x1]
        %v184 = vperm.slane %v172, 0
        %vm186 = vcmask 7168
        %v188 = vsel %vm186, %v181, 0
        %vm190 = vcmask 1040384
        %v191 = vsel 0, 4294967295, 65535
        %v192 = vsel %vm190, %v191, 0
        %v194 = vand.u32 %v182, %v192
        %196 = vmatpush.bf16.msra.mxu0 0
        %197 = vmatpush.bf16.msra.mxu0 0
        %198 = vmatpush.bf16.msra.mxu0 0
        %199 = vmatpush.bf16.msra.mxu0 0
        %200 = vmatpush.bf16.msra.mxu0 0
        %201 = vmatpush.bf16.msra.mxu0 0
        %202 = vmatpush.bf16.msra.mxu0 0
        %203 = vmatpush.bf16.msra.mxu0 %v194
        %204 = vmatmul.bf16.gmra.mxu0 %v188
        %v205 = vpop.f32.mrf.mxu0
        %v206 = vadd.f32 %v184, %v205
        %v207 = vpop.f32.mrf.mxu0
        %208 = vdwg.mxu0
        %v209 = vpack.c.bf16 %v206, %v206
        %s210 = smul.addr %s174, 2
        %s211 = scalar_lea.vmem %s170, %s210
        %vm212 = vcmask 25600
        %213 = vst.msk [vmem:[%s211] sm:$0x3] %vm212, %v209
      $region37: #{_lambda_.36} parent=31 // loop_footer
        %s178 = sadd.s32 1, %s174
      $region38: #{_lambda_.36} parent=31 // loop_footer_branch
        %173 = sbr.rel target = $region34
      $region39: #{_lambda_.36} parent=31 // loop_exit
        _
      %p214 = scmp.lt.s32.totalorder %s14, 1
      %s215 = scalar_select %p214, %s14, 1
      %s216 = smul.addr %s215, 4
      %s217 = smul.addr %s216, 2
      %s218 = scalar_lea.vmem %s3, %s217
      // Predicated region
      $region40: #{_lambda_.36} parent=31 // pred_check
        %p219 = pneg %p100
      $region41: #{_lambda_.36} parent=31 // pred_check_branch
        %221 = sbr.rel (%p219) target = $region43
      $region42: #{_lambda_.36} parent=31 // pred_region
        _
      $region43: #{_lambda_.36} parent=31 // pred_fallthru
        _
    $region32: #{_lambda_.36} parent=5 // pred_fallthru
      _
    %p222 = scmp.le.s32.totalorder 2, %s9
    // Predicated region
    $region44: #{_lambda_.36} parent=5 // pred_check
      %p223 = pneg %p222
    $region45: #{_lambda_.36} parent=5 // pred_check_branch
      %225 = sbr.rel (%p223) target = $region47
    $region46: #{_lambda_.36} parent=5 // pred_region
      %s226 = ssub.s32 %s9, 2
      // Predicated region
      $region48: #{_lambda_.36} parent=46 // pred_check
        %p227 = pneg %p106
      $region49: #{_lambda_.36} parent=46 // pred_check_branch
        %229 = sbr.rel (%p227) target = $region51
      $region50: #{_lambda_.36} parent=46 // pred_region
        %p230 = scmp.lt.s32.totalorder %s15, 1
        %s231 = scalar_select %p230, %s15, 1
        %s232 = smul.addr %s231, 4
        %s233 = smul.addr %s232, 2
        %s234 = scalar_lea.vmem %s3, %s233
      $region51: #{_lambda_.36} parent=46 // pred_fallthru
        _
    $region47: #{_lambda_.36} parent=5 // pred_fallthru
      _
  $region6: #{_lambda_.36} parent=0 // loop_footer
    %s13 = sadd.s32 1, %s9
  $region7: #{_lambda_.36} parent=0 // loop_footer_branch
    %8 = sbr.rel target = $region3
  $region8: #{_lambda_.36} parent=0 // loop_exit
    _

// kernel: _lambda_.37
$region0: #{_lambda_.37}
  #allocation0 [shape = 'u32[]', space=smem, size = 0x4, offset = 0x4, fixed_abs, tag = 'smem constant byte address 0x4 - core index']
  #allocation1 [shape = 'u32[72,128]{1,0:T(1,128)}', space=vmem, size = 0x9000, scoped, tag = 'internal scratch']
  %s0 = inlined_call_operand.vmem [shape: bf16[2,1,1,4], index: 0, kind: input, shape index: {}]
  %s1 = inlined_call_operand.vmem [shape: bf16[2,4,4,4], index: 1, kind: input, shape index: {}]
  %s2 = inlined_call_operand.vmem [shape: bf16[2,4,4,4], index: 2, kind: output, shape index: {}]
  %s3 = sld [smem:[#allocation0]]
  $region41: #{_lambda_.37} parent=0
    _
  %s5 = ssub.s32 1, %s3
  %s6 = scalar_select 0, %s5, %s3
  loop: start=0, step=1, limit=4
  $region2: #{_lambda_.37} parent=0 // loop_pre_header
    _
  $region3: #{_lambda_.37} parent=0 // loop_header
    %s8 = sphi 0, %s12
    %p9 = scmp.ge.s32.totalorder %s8, 4
    %s18 = sphi 0, %s20
    %s21 = sphi 0, %s18
    %s22 = sphi 0, %s21
    %s38 = sphi 0, %s22
    %s44 = sphi 0, %s46
    %s47 = sphi 0, %s44
    %s48 = sphi 0, %s47
    %s64 = sphi 0, %s48
    %s70 = sphi 0, %s72
    %s73 = sphi 0, %s70
    %s74 = sphi 0, %s73
    %s90 = sphi 0, %s74
  $region4: #{_lambda_.37} parent=0 // loop_header_branch
    %11 = sbr.rel (%p9) target = $region8
  $region5: #{_lambda_.37} parent=0 // loop_body
    %s13 = ssub.s32 %s8, 1
    %s14 = ssub.s32 %s8, 2
    %s15 = sadd.s32 %s8, 1
    %s16 = ssub.s32 %s8, %s15
    %p17 = scmp.eq.s32.totalorder %s16, 0
    %s19 = sadd.s32 %s18, 1
    %s20 = scalar_select %p17, %s18, %s19
    %p23 = pneg %p17
    %p24 = scmp.eq.s32.totalorder %s8, 1
    %p25 = por %p23, %p24
    %p26 = scmp.ne.s32.totalorder %s18, %s21
    %p27 = scmp.eq.s32.totalorder %s8, 0
    %p28 = por %p26, %p27
    %p29 = scmp.ne.s32.totalorder %s18, %s21
    %p30 = scmp.eq.s32.totalorder %s13, 1
    %p31 = por %p29, %p30
    %p32 = scmp.ne.s32.totalorder %s21, %s22
    %p33 = scmp.eq.s32.totalorder %s13, 0
    %p34 = por %p32, %p33
    %p35 = scmp.ne.s32.totalorder %s21, %s22
    %p36 = scmp.eq.s32.totalorder %s14, 1
    %p37 = por %p35, %p36
    %p39 = scmp.ne.s32.totalorder %s22, %s38
    %p40 = scmp.eq.s32.totalorder %s14, 0
    %p41 = por %p39, %p40
    %s42 = ssub.s32 %s8, %s15
    %p43 = scmp.eq.s32.totalorder %s42, 0
    %s45 = sadd.s32 %s44, 1
    %s46 = scalar_select %p43, %s44, %s45
    %p49 = pneg %p43
    %p50 = scmp.eq.s32.totalorder %s8, 1
    %p51 = por %p49, %p50
    %p52 = scmp.ne.s32.totalorder %s44, %s47
    %p53 = scmp.eq.s32.totalorder %s8, 0
    %p54 = por %p52, %p53
    %p55 = scmp.ne.s32.totalorder %s44, %s47
    %p56 = scmp.eq.s32.totalorder %s13, 1
    %p57 = por %p55, %p56
    %p58 = scmp.ne.s32.totalorder %s47, %s48
    %p59 = scmp.eq.s32.totalorder %s13, 0
    %p60 = por %p58, %p59
    %p61 = scmp.ne.s32.totalorder %s47, %s48
    %p62 = scmp.eq.s32.totalorder %s14, 1
    %p63 = por %p61, %p62
    %p65 = scmp.ne.s32.totalorder %s48, %s64
    %p66 = scmp.eq.s32.totalorder %s14, 0
    %p67 = por %p65, %p66
    %s68 = ssub.s32 %s8, %s15
    %p69 = scmp.eq.s32.totalorder %s68, 0
    %s71 = sadd.s32 %s70, 1
    %s72 = scalar_select %p69, %s70, %s71
    %p75 = pneg %p69
    %p76 = scmp.eq.s32.totalorder %s8, 1
    %p77 = por %p75, %p76
    %p78 = scmp.ne.s32.totalorder %s70, %s73
    %p79 = scmp.eq.s32.totalorder %s8, 0
    %p80 = por %p78, %p79
    %p81 = scmp.ne.s32.totalorder %s70, %s73
    %p82 = scmp.eq.s32.totalorder %s13, 1
    %p83 = por %p81, %p82
    %p84 = scmp.ne.s32.totalorder %s73, %s74
    %p85 = scmp.eq.s32.totalorder %s13, 0
    %p86 = por %p84, %p85
    %p87 = scmp.ne.s32.totalorder %s73, %s74
    %p88 = scmp.eq.s32.totalorder %s14, 1
    %p89 = por %p87, %p88
    %p91 = scmp.ne.s32.totalorder %s74, %s90
    %p92 = scmp.eq.s32.totalorder %s14, 0
    %p93 = por %p91, %p92
    %p94 = scmp.le.s32.totalorder 1, %s8
    %p95 = scmp.lt.s32.totalorder %s8, 3
    %p96 = pnand %p94, %p95
    %p97 = pneg %p96
    // Predicated region
    $region9: #{_lambda_.37} parent=5 // pred_check
      _
    $region10: #{_lambda_.37} parent=5 // pred_check_branch
      %99 = sbr.rel (%p96) target = $region12
    $region11: #{_lambda_.37} parent=5 // pred_region
      %s100 = ssub.s32 %s8, 1
    $region12: #{_lambda_.37} parent=5 // pred_fallthru
      _
    %p101 = scmp.lt.s32.totalorder %s8, 2
    // Predicated region
    $region13: #{_lambda_.37} parent=5 // pred_check
      %p102 = pneg %p101
    $region14: #{_lambda_.37} parent=5 // pred_check_branch
      %104 = sbr.rel (%p102) target = $region16
    $region15: #{_lambda_.37} parent=5 // pred_region
      // Predicated region
      $region17: #{_lambda_.37} parent=15 // pred_check
        %p105 = pneg %p28
      $region18: #{_lambda_.37} parent=15 // pred_check_branch
        %107 = sbr.rel (%p105) target = $region20
      $region19: #{_lambda_.37} parent=15 // pred_region
        %p108 = scmp.lt.s32.totalorder %s8, 1
        %s109 = scalar_select %p108, %s8, 1
        %s110 = scalar_lea.vmem %s0, %s109
      $region20: #{_lambda_.37} parent=15 // pred_fallthru
        _
      // Predicated region
      $region21: #{_lambda_.37} parent=15 // pred_check
        %p111 = pneg %p54
      $region22: #{_lambda_.37} parent=15 // pred_check_branch
        %113 = sbr.rel (%p111) target = $region24
      $region23: #{_lambda_.37} parent=15 // pred_region
        %p114 = scmp.lt.s32.totalorder %s8, 1
        %s115 = scalar_select %p114, %s8, 1
        %s116 = smul.addr %s115, 4
        %s117 = smul.addr %s116, 2
        %s118 = scalar_lea.vmem %s1, %s117
      $region24: #{_lambda_.37} parent=15 // pred_fallthru
        _
    $region16: #{_lambda_.37} parent=5 // pred_fallthru
      _
    %p119 = scmp.le.s32.totalorder 1, %s8
    %p120 = scmp.lt.s32.totalorder %s8, 3
    %p121 = pnand %p119, %p120
    %p122 = pneg %p121
    // Predicated region
    $region25: #{_lambda_.37} parent=5 // pred_check
      _
    $region26: #{_lambda_.37} parent=5 // pred_check_branch
      %124 = sbr.rel (%p121) target = $region28
    $region27: #{_lambda_.37} parent=5 // pred_region
      %s125 = ssub.s32 %s8, 1
      %p126 = scmp.lt.s32.totalorder %s13, 1
      %s127 = scalar_select %p126, %s13, 1
      %s128 = scalar_lea.vmem %s0, %s127
      %p129 = pneg %p34
      %p130 = pneg %p31
      %p131 = scmp.lt.s32.totalorder %s13, 1
      %s132 = scalar_select %p131, %s13, 1
      %s133 = smul.addr %s132, 4
      %s134 = smul.addr %s133, 2
      %s135 = scalar_lea.vmem %s1, %s134
      %p136 = pneg %p60
      %p137 = pneg %p57
      %p138 = pneg %p86
      %p139 = pneg %p83
      %p140 = scmp.lt.s32.totalorder %s13, 1
      %s141 = scalar_select %p140, %s13, 1
      %s142 = smul.addr %s141, 4
      %s143 = smul.addr %s142, 2
      %s144 = scalar_lea.vmem %s2, %s143
      %p145 = scmp.lt.s32.totalorder %s13, 1
      %s146 = scalar_select %p145, %s13, 1
      %s147 = scalar_lea.vmem %s0, %s146
      %p148 = scmp.lt.s32.totalorder %s13, 1
      %s149 = scalar_select %p148, %s13, 1
      %s150 = smul.addr %s149, 4
      %s151 = smul.addr %s150, 2
      %s152 = scalar_lea.vmem %s1, %s151
      %p153 = scmp.lt.s32.totalorder %s13, 1
      %s154 = scalar_select %p153, %s13, 1
      %s155 = smul.addr %s154, 4
      %s156 = smul.addr %s155, 2
      %s157 = scalar_lea.vmem %s2, %s156
      %v158 = vld [vmem:[%s147] sm:$0x1]
      %v159 = vunpack.c.l.bf16 %v158
      %v160 = vperm.slane %v159, 0
      %v161 = vld [vmem:[%s152] sm:$0x3]
      %v162 = vld [vmem:[%s152 + $0x2] sm:$0x3]
      %v163 = vld [vmem:[%s152 + $0x4] sm:$0x3]
      %v164 = vld [vmem:[%s152 + $0x6] sm:$0x3]
      %v165 = vunpack.c.l.bf16 %v161
      %v166 = vunpack.c.l.bf16 %v162
      %v167 = vunpack.c.l.bf16 %v163
      %v168 = vunpack.c.l.bf16 %v164
      %v169 = vadd.f32 %v160, %v165
      %v170 = vadd.f32 %v160, %v166
      %v171 = vadd.f32 %v160, %v167
      %v172 = vadd.f32 %v160, %v168
      %v173 = vmax.f32 %v169, 0.0
      %v174 = vmax.f32 %v170, 0.0
      %v175 = vmax.f32 %v171, 0.0
      %v176 = vmax.f32 %v172, 0.0
      %v177 = vpack.c.bf16 %v173, %v173
      %v178 = vpack.c.bf16 %v174, %v174
      %v179 = vpack.c.bf16 %v175, %v175
      %v180 = vpack.c.bf16 %v176, %v176
      %vm181 = vcmask 25600
      %182 = vst.msk [vmem:[%s157] sm:$0x3] %vm181, %v177
      %183 = vst.msk [vmem:[%s157 + $0x2] sm:$0x3] %vm181, %v178
      %184 = vst.msk [vmem:[%s157 + $0x4] sm:$0x3] %vm181, %v179
      %185 = vst.msk [vmem:[%s157 + $0x6] sm:$0x3] %vm181, %v180
      %p186 = scmp.lt.s32.totalorder %s13, 1
      %s187 = scalar_select %p186, %s13, 1
      %s188 = smul.addr %s187, 4
      %s189 = smul.addr %s188, 2
      %s190 = scalar_lea.vmem %s2, %s189
      // Predicated region
      $region29: #{_lambda_.37} parent=27 // pred_check
        %p191 = pneg %p83
      $region30: #{_lambda_.37} parent=27 // pred_check_branch
        %193 = sbr.rel (%p191) target = $region32
      $region31: #{_lambda_.37} parent=27 // pred_region
        _
      $region32: #{_lambda_.37} parent=27 // pred_fallthru
        _
    $region28: #{_lambda_.37} parent=5 // pred_fallthru
      _
    %p194 = scmp.le.s32.totalorder 2, %s8
    // Predicated region
    $region33: #{_lambda_.37} parent=5 // pred_check
      %p195 = pneg %p194
    $region34: #{_lambda_.37} parent=5 // pred_check_branch
      %197 = sbr.rel (%p195) target = $region36
    $region35: #{_lambda_.37} parent=5 // pred_region
      %s198 = ssub.s32 %s8, 2
      // Predicated region
      $region37: #{_lambda_.37} parent=35 // pred_check
        %p199 = pneg %p89
      $region38: #{_lambda_.37} parent=35 // pred_check_branch
        %201 = sbr.rel (%p199) target = $region40
      $region39: #{_lambda_.37} parent=35 // pred_region
        %p202 = scmp.lt.s32.totalorder %s14, 1
        %s203 = scalar_select %p202, %s14, 1
        %s204 = smul.addr %s203, 4
        %s205 = smul.addr %s204, 2
        %s206 = scalar_lea.vmem %s2, %s205
      $region40: #{_lambda_.37} parent=35 // pred_fallthru
        _
    $region36: #{_lambda_.37} parent=5 // pred_fallthru
      _
  $region6: #{_lambda_.37} parent=0 // loop_footer
    %s12 = sadd.s32 1, %s8
  $region7: #{_lambda_.37} parent=0 // loop_footer_branch
    %7 = sbr.rel target = $region3
  $region8: #{_lambda_.37} parent=0 // loop_exit
    _

// kernel: _lambda_.35
$region0: #{_lambda_.35}
  #allocation0 [shape = 'u32[]', space=smem, size = 0x4, offset = 0x4, fixed_abs, tag = 'smem constant byte address 0x4 - core index']
  #allocation1 [shape = 'u32[72,128]{1,0:T(1,128)}', space=vmem, size = 0x9000, scoped, tag = 'internal scratch']
  %s0 = inlined_call_operand.vmem [shape: bf16[2,2,2,2,2,4], index: 0, kind: input, shape index: {}]
  %s1 = inlined_call_operand.vmem [shape: bf16[36,4], index: 1, kind: input, shape index: {}]
  %s2 = inlined_call_operand.vmem [shape: f32[1,4], index: 2, kind: input, shape index: {}]
  %s3 = inlined_call_operand.vmem [shape: bf16[2,1,1,4], index: 3, kind: output, shape index: {}]
  %s4 = sld [smem:[#allocation0]]
  $region45: #{_lambda_.35} parent=0
    _
  %s6 = ssub.s32 1, %s4
  %s7 = scalar_select 0, %s6, %s4
  loop: start=0, step=1, limit=4
  $region2: #{_lambda_.35} parent=0 // loop_pre_header
    _
  $region3: #{_lambda_.35} parent=0 // loop_header
    %s9 = sphi 0, %s13
    %p10 = scmp.ge.s32.totalorder %s9, 4
    %s19 = sphi 0, %s21
    %s22 = sphi 0, %s19
    %s23 = sphi 0, %s22
    %s39 = sphi 0, %s23
    %s43 = sphi 0, %s43
    %s45 = sphi 0, %s43
    %s46 = sphi 0, %s45
    %s60 = sphi 0, %s46
    %s64 = sphi 0, %s64
    %s66 = sphi 0, %s64
    %s67 = sphi 0, %s66
    %s81 = sphi 0, %s67
    %s87 = sphi 0, %s89
    %s90 = sphi 0, %s87
    %s91 = sphi 0, %s90
    %s107 = sphi 0, %s91
  $region4: #{_lambda_.35} parent=0 // loop_header_branch
    %12 = sbr.rel (%p10) target = $region8
  $region5: #{_lambda_.35} parent=0 // loop_body
    %s14 = ssub.s32 %s9, 1
    %s15 = ssub.s32 %s9, 2
    %s16 = sadd.s32 %s9, 1
    %s17 = ssub.s32 %s9, %s16
    %p18 = scmp.eq.s32.totalorder %s17, 0
    %s20 = sadd.s32 %s19, 1
    %s21 = scalar_select %p18, %s19, %s20
    %p24 = pneg %p18
    %p25 = scmp.eq.s32.totalorder %s9, 1
    %p26 = por %p24, %p25
    %p27 = scmp.ne.s32.totalorder %s19, %s22
    %p28 = scmp.eq.s32.totalorder %s9, 0
    %p29 = por %p27, %p28
    %p30 = scmp.ne.s32.totalorder %s19, %s22
    %p31 = scmp.eq.s32.totalorder %s14, 1
    %p32 = por %p30, %p31
    %p33 = scmp.ne.s32.totalorder %s22, %s23
    %p34 = scmp.eq.s32.totalorder %s14, 0
    %p35 = por %p33, %p34
    %p36 = scmp.ne.s32.totalorder %s22, %s23
    %p37 = scmp.eq.s32.totalorder %s15, 1
    %p38 = por %p36, %p37
    %p40 = scmp.ne.s32.totalorder %s23, %s39
    %p41 = scmp.eq.s32.totalorder %s15, 0
    %p42 = por %p40, %p41
    %s44 = sadd.s32 %s43, 1
    %p47 = scmp.eq.s32.totalorder %s9, 1
    %p48 = scmp.ne.s32.totalorder %s43, %s45
    %p49 = scmp.eq.s32.totalorder %s9, 0
    %p50 = por %p48, %p49
    %p51 = scmp.ne.s32.totalorder %s43, %s45
    %p52 = scmp.eq.s32.totalorder %s14, 1
    %p53 = por %p51, %p52
    %p54 = scmp.ne.s32.totalorder %s45, %s46
    %p55 = scmp.eq.s32.totalorder %s14, 0
    %p56 = por %p54, %p55
    %p57 = scmp.ne.s32.totalorder %s45, %s46
    %p58 = scmp.eq.s32.totalorder %s15, 1
    %p59 = por %p57, %p58
    %p61 = scmp.ne.s32.totalorder %s46, %s60
    %p62 = scmp.eq.s32.totalorder %s15, 0
    %p63 = por %p61, %p62
    %s65 = sadd.s32 %s64, 1
    %p68 = scmp.eq.s32.totalorder %s9, 1
    %p69 = scmp.ne.s32.totalorder %s64, %s66
    %p70 = scmp.eq.s32.totalorder %s9, 0
    %p71 = por %p69, %p70
    %p72 = scmp.ne.s32.totalorder %s64, %s66
    %p73 = scmp.eq.s32.totalorder %s14, 1
    %p74 = por %p72, %p73
    %p75 = scmp.ne.s32.totalorder %s66, %s67
    %p76 = scmp.eq.s32.totalorder %s14, 0
    %p77 = por %p75, %p76
    %p78 = scmp.ne.s32.totalorder %s66, %s67
    %p79 = scmp.eq.s32.totalorder %s15, 1
    %p80 = por %p78, %p79
    %p82 = scmp.ne.s32.totalorder %s67, %s81
    %p83 = scmp.eq.s32.totalorder %s15, 0
    %p84 = por %p82, %p83
    %s85 = ssub.s32 %s9, %s16
    %p86 = scmp.eq.s32.totalorder %s85, 0
    %s88 = sadd.s32 %s87, 1
    %s89 = scalar_select %p86, %s87, %s88
    %p92 = pneg %p86
    %p93 = scmp.eq.s32.totalorder %s9, 1
    %p94 = por %p92, %p93
    %p95 = scmp.ne.s32.totalorder %s87, %s90
    %p96 = scmp.eq.s32.totalorder %s9, 0
    %p97 = por %p95, %p96
    %p98 = scmp.ne.s32.totalorder %s87, %s90
    %p99 = scmp.eq.s32.totalorder %s14, 1
    %p100 = por %p98, %p99
    %p101 = scmp.ne.s32.totalorder %s90, %s91
    %p102 = scmp.eq.s32.totalorder %s14, 0
    %p103 = por %p101, %p102
    %p104 = scmp.ne.s32.totalorder %s90, %s91
    %p105 = scmp.eq.s32.totalorder %s15, 1
    %p106 = por %p104, %p105
    %p108 = scmp.ne.s32.totalorder %s91, %s107
    %p109 = scmp.eq.s32.totalorder %s15, 0
    %p110 = por %p108, %p109
    %p111 = scmp.le.s32.totalorder 1, %s9
    %p112 = scmp.lt.s32.totalorder %s9, 3
    %p113 = pnand %p111, %p112
    %p114 = pneg %p113
    // Predicated region
    $region9: #{_lambda_.35} parent=5 // pred_check
      _
    $region10: #{_lambda_.35} parent=5 // pred_check_branch
      %116 = sbr.rel (%p113) target = $region12
    $region11: #{_lambda_.35} parent=5 // pred_region
      %s117 = ssub.s32 %s9, 1
      // Predicated region
      $region13: #{_lambda_.35} parent=11 // pred_check
        %p118 = pneg %p56
      $region14: #{_lambda_.35} parent=11 // pred_check_branch
        %120 = sbr.rel (%p118) target = $region16
      $region15: #{_lambda_.35} parent=11 // pred_region
        _
      $region16: #{_lambda_.35} parent=11 // pred_fallthru
        _
      // Predicated region
      $region17: #{_lambda_.35} parent=11 // pred_check
        %p121 = pneg %p77
      $region18: #{_lambda_.35} parent=11 // pred_check_branch
        %123 = sbr.rel (%p121) target = $region20
      $region19: #{_lambda_.35} parent=11 // pred_region
        _
      $region20: #{_lambda_.35} parent=11 // pred_fallthru
        _
    $region12: #{_lambda_.35} parent=5 // pred_fallthru
      _
    %p124 = scmp.lt.s32.totalorder %s9, 2
    // Predicated region
    $region21: #{_lambda_.35} parent=5 // pred_check
      %p125 = pneg %p124
    $region22: #{_lambda_.35} parent=5 // pred_check_branch
      %127 = sbr.rel (%p125) target = $region24
    $region23: #{_lambda_.35} parent=5 // pred_region
      // Predicated region
      $region25: #{_lambda_.35} parent=23 // pred_check
        %p128 = pneg %p29
      $region26: #{_lambda_.35} parent=23 // pred_check_branch
        %130 = sbr.rel (%p128) target = $region28
      $region27: #{_lambda_.35} parent=23 // pred_region
        %p131 = scmp.lt.s32.totalorder %s9, 1
        %s132 = scalar_select %p131, %s9, 1
        %s133 = smul.addr %s132, 8
        %s134 = scalar_lea.vmem %s0, %s133
      $region28: #{_lambda_.35} parent=23 // pred_fallthru
        _
    $region24: #{_lambda_.35} parent=5 // pred_fallthru
      _
    %p135 = scmp.le.s32.totalorder 1, %s9
    %p136 = scmp.lt.s32.totalorder %s9, 3
    %p137 = pnand %p135, %p136
    %p138 = pneg %p137
    // Predicated region
    $region29: #{_lambda_.35} parent=5 // pred_check
      _
    $region30: #{_lambda_.35} parent=5 // pred_check_branch
      %140 = sbr.rel (%p137) target = $region32
    $region31: #{_lambda_.35} parent=5 // pred_region
      %s141 = ssub.s32 %s9, 1
      %p142 = scmp.lt.s32.totalorder %s14, 1
      %s143 = scalar_select %p142, %s14, 1
      %s144 = smul.addr %s143, 8
      %s145 = scalar_lea.vmem %s0, %s144
      %p146 = pneg %p35
      %p147 = pneg %p32
      %p148 = pneg %p56
      %p149 = pneg %p53
      %p150 = pneg %p77
      %p151 = pneg %p74
      %p152 = pneg %p103
      %p153 = pneg %p100
      %p154 = scmp.lt.s32.totalorder %s14, 1
      %s155 = scalar_select %p154, %s14, 1
      %s156 = scalar_lea.vmem %s3, %s155
      %p157 = scmp.lt.s32.totalorder %s14, 1
      %s158 = scalar_select %p157, %s14, 1
      %s159 = smul.addr %s158, 8
      %s160 = scalar_lea.vmem %s0, %s159
      %p161 = scmp.lt.s32.totalorder %s14, 1
      %s162 = scalar_select %p161, %s14, 1
      %s163 = scalar_lea.vmem %s3, %s162
      %v165 = vld [vmem:[%s2] sm:$0x1]
      %v166 = vld [vmem:[%s160] sm:$0x1]
      %s167 = scalar_lea.vmem %s160, 2
      %v168 = vld [vmem:[%s167] sm:$0x1]
      %s169 = scalar_lea.vmem %s160, 4
      %v170 = vld [vmem:[%s169] sm:$0x1]
      %s171 = scalar_lea.vmem %s160, 6
      %v172 = vld [vmem:[%s171] sm:$0x1]
      %s173 = scalar_lea.vmem %s160, 1
      %v174 = vld [vmem:[%s173] sm:$0x1]
      %s175 = scalar_lea.vmem %s160, 3
      %v176 = vld [vmem:[%s175] sm:$0x1]
      %178 = vst [vmem:[#allocation1] ss:$9 sm:$0xff] %v168
      %v179 = vld [vmem:[#allocation1] sm:$0xff]
      %181 = vrot.lane.b32.xlu0 %v179, 4
      %v182 = vpop.permute.xlu0 %181
      %184 = vst [vmem:[#allocation1] ss:$9 sm:$0xff] %v166
      %v185 = vld [vmem:[#allocation1] sm:$0xff]
      %v186 = vshrl.u32 %v185, 16
      %188 = vrot.lane.b32.xlu0 %v186, 8
      %v189 = vpop.permute.xlu0 %188
      %191 = vst [vmem:[#allocation1] ss:$9 sm:$0xff] %v170
      %v192 = vld [vmem:[#allocation1] sm:$0xff]
      %194 = vrot.lane.b32.xlu0 %v192, 12
      %v195 = vpop.permute.xlu0 %194
      %197 = vst [vmem:[#allocation1] ss:$9 sm:$0xff] %v172
      %v198 = vld [vmem:[#allocation1] sm:$0xff]
      %200 = vrot.lane.b32.xlu0 %v198, 16
      %v201 = vpop.permute.xlu0 %200
      %202 = vst [vmem:[#allocation1] ss:$9 sm:$0xff] %v170
      %v203 = vld [vmem:[#allocation1] sm:$0xff]
      %v204 = vshrl.u32 %v203, 16
      %206 = vrot.lane.b32.xlu0 %v204, 20
      %v207 = vpop.permute.xlu0 %206
      %209 = vst [vmem:[#allocation1] ss:$9 sm:$0xff] %v174
      %v210 = vld [vmem:[#allocation1] sm:$0xff]
      %212 = vrot.lane.b32.xlu0 %v210, 24
      %v213 = vpop.permute.xlu0 %212
      %215 = vst [vmem:[#allocation1] ss:$9 sm:$0xff] %v176
      %v216 = vld [vmem:[#allocation1] sm:$0xff]
      %218 = vrot.lane.b32.xlu0 %v216, 28
      %v219 = vpop.permute.xlu0 %218
      %220 = vst [vmem:[#allocation1] ss:$9 sm:$0xff] %v174
      %v221 = vld [vmem:[#allocation1] sm:$0xff]
      %v222 = vshrl.u32 %v221, 16
      %224 = vrot.lane.b32.xlu0 %v222, 32
      %v225 = vpop.permute.xlu0 %224
      %vm226 = vcmask 31744
      %v228 = vsel %vm226, %v166, %v182
      %vm229 = vcmask 64512
      %v231 = vsel %vm229, %v228, %v189
      %vm232 = vcmask 97280
      %v234 = vsel %vm232, %v231, %v195
      %vm235 = vcmask 130048
      %v237 = vsel %vm235, %v234, %v201
      %vm238 = vcmask 162816
      %v240 = vsel %vm238, %v237, %v207
      %vm241 = vcmask 195584
      %v243 = vsel %vm241, %v240, %v213
      %vm244 = vcmask 228352
      %v246 = vsel %vm244, %v243, %v219
      %vm247 = vcmask 261120
      %v249 = vsel %vm247, %v246, %v225
      %v250 = vld [vmem:[%s1] sm:$0xf]
      %v251 = vld [vmem:[%s1 + $0x4] sm:$0xf]
      %v252 = vld [vmem:[%s1 + $0x8] sm:$0xf]
      %v253 = vld [vmem:[%s1 + $0xc] sm:$0xf]
      %v254 = vld [vmem:[%s1 + $0x10] sm:$0x3]
      %v260 = vunpack.c.l.b16 %v250
      %v261 = vunpack.c.l.b16 %v251
      %v262 = vunpack.c.l.b16 %v252
      %v263 = vunpack.c.l.b16 %v253
      %v264 = vunpack.c.l.b16 %v254
      %v265 = vpack.c.b16 %v261, %v260
      %v266 = vpack.c.b16 %v263, %v262
      %v267 = vpack.c.b16 %v264, %v264
      %vm270 = vcmask 293888
      %v271 = vsel %vm270, %v249, 0
      %vm273 = vcmask 1041408
      %v275 = vsel %vm273, %v267, 0
      %277 = vmatpush.bf16.msra.mxu0 0
      %278 = vmatpush.bf16.msra.mxu0 0
      %279 = vmatpush.bf16.msra.mxu0 0
      %280 = vmatpush.bf16.msra.mxu0 0
      %281 = vmatpush.bf16.msra.mxu0 0
      %282 = vmatpush.bf16.msra.mxu0 %v275
      %283 = vmatpush.bf16.msra.mxu0 %v266
      %284 = vmatpush.bf16.msra.mxu0 %v265
      %285 = vmatmul.bf16.gmra.mxu0 %v271
      %v286 = vpop.f32.mrf.mxu0
      %v287 = vadd.f32 %v165, %v286
      %v288 = vpop.f32.mrf.mxu0
      %289 = vdwg.mxu0
      %v290 = vmax.f32 %v287, 0.0
      %v291 = vpack.c.bf16 %v290, %v290
      %vm292 = vcmask 24576
      %vm293 = vsmask.f32 256
      %vm294 = vmand %vm292, %vm293
      %v295 = vld [vmem:[%s163] sm:$0x1]
      %v296 = vsel %vm294, %v291, %v295
      %297 = vst [vmem:[%s163] sm:$0x1] %v296
      %p298 = scmp.lt.s32.totalorder %s14, 1
      %s299 = scalar_select %p298, %s14, 1
      %s300 = scalar_lea.vmem %s3, %s299
      // Predicated region
      $region33: #{_lambda_.35} parent=31 // pred_check
        %p301 = pneg %p100
      $region34: #{_lambda_.35} parent=31 // pred_check_branch
        %303 = sbr.rel (%p301) target = $region36
      $region35: #{_lambda_.35} parent=31 // pred_region
        _
      $region36: #{_lambda_.35} parent=31 // pred_fallthru
        _
    $region32: #{_lambda_.35} parent=5 // pred_fallthru
      _
    %p304 = scmp.le.s32.totalorder 2, %s9
    // Predicated region
    $region37: #{_lambda_.35} parent=5 // pred_check
      %p305 = pneg %p304
    $region38: #{_lambda_.35} parent=5 // pred_check_branch
      %307 = sbr.rel (%p305) target = $region40
    $region39: #{_lambda_.35} parent=5 // pred_region
      %s308 = ssub.s32 %s9, 2
      // Predicated region
      $region41: #{_lambda_.35} parent=39 // pred_check
        %p309 = pneg %p106
      $region42: #{_lambda_.35} parent=39 // pred_check_branch
        %311 = sbr.rel (%p309) target = $region44
      $region43: #{_lambda_.35} parent=39 // pred_region
        %p312 = scmp.lt.s32.totalorder %s15, 1
        %s313 = scalar_select %p312, %s15, 1
        %s314 = scalar_lea.vmem %s3, %s313
      $region44: #{_lambda_.35} parent=39 // pred_fallthru
        _
    $region40: #{_lambda_.35} parent=5 // pred_fallthru
      _
  $region6: #{_lambda_.35} parent=0 // loop_footer
    %s13 = sadd.s32 1, %s9
  $region7: #{_lambda_.35} parent=0 // loop_footer_branch
    %8 = sbr.rel target = $region3
  $region8: #{_lambda_.35} parent=0 // loop_exit
    _

// kernel: _lambda_.38
$region0: #{_lambda_.38}
  #allocation0 [shape = 'u32[]', space=smem, size = 0x4, offset = 0x4, fixed_abs, tag = 'smem constant byte address 0x4 - core index']
  #allocation1 [shape = 'u32[72,128]{1,0:T(1,128)}', space=vmem, size = 0x9000, scoped, tag = 'internal scratch']
  %s0 = inlined_call_operand.vmem [shape: bf16[8,128], index: 0, kind: input, shape index: {}]
  %s1 = inlined_call_operand.hbm [shape: bf16[128,512], index: 1, kind: input, shape index: {}]
  %s2 = inlined_call_operand.vmem [shape: f32[1,512], index: 2, kind: input, shape index: {}]
  %s3 = inlined_call_operand.vmem [shape: bf16[8,512], index: 3, kind: output, shape index: {}]
  %s4 = sld [smem:[#allocation0]]
  $region26: #{_lambda_.38} parent=0
    _
  %s6 = ssub.s32 1, %s4
  %s7 = scalar_select 0, %s6, %s4
  $region1: #{_lambda_.38} parent=0
    #allocation2 [shape = 'u8[131072]{0}', space=vmem, size = 0x20000, scoped, tag = 'input window, operand 1, single buffered']
    #allocation3 [shape = 's32[1]{0}', space=sflag, size = 0x4, scoped, tag = 'scoped memory for _lambda_.38']
    %8 = vsyncpa [#allocation3], 0
    // Predicated region
    $region2: #{_lambda_.38} parent=1 // pred_check
      _
    $region3: #{_lambda_.38} parent=1 // pred_check_branch
      %10 = sbr.rel (0) target = $region5
    $region4: #{_lambda_.38} parent=1 // pred_region
      _
    $region5: #{_lambda_.38} parent=1 // pred_fallthru
      _
    // Predicated region
    $region6: #{_lambda_.38} parent=1 // pred_check
      _
    $region7: #{_lambda_.38} parent=1 // pred_check_branch
      %12 = sbr.rel (0) target = $region9
    $region8: #{_lambda_.38} parent=1 // pred_region
      %14 = vsyncadd [#allocation3], 0
      %s15 = sshll.u32 %s1, 4
      %s16 = int_to_ptr.hbm [resolvable:$true] %s15
      %s17 = sshll.u32 [#allocation2], 4
      %s18 = int_to_ptr.vmem [resolvable:$true] %s17
      %23 = dma.hbm_to_vmem [thread:$0]  %s16, 4096, %s18, [#allocation3], 256, 256, 16
    $region9: #{_lambda_.38} parent=1 // pred_fallthru
      _
    // Predicated region
    $region10: #{_lambda_.38} parent=1 // pred_check
      _
    $region11: #{_lambda_.38} parent=1 // pred_check_branch
      %25 = sbr.rel (0) target = $region13
    $region12: #{_lambda_.38} parent=1 // pred_region
      _
    $region13: #{_lambda_.38} parent=1 // pred_fallthru
      _
    // Predicated region
    $region14: #{_lambda_.38} parent=1 // pred_check
      _
    $region15: #{_lambda_.38} parent=1 // pred_check_branch
      %27 = sbr.rel (0) target = $region17
    $region16: #{_lambda_.38} parent=1 // pred_region
      %29 = dma.done [#allocation3], 4096
    $region17: #{_lambda_.38} parent=1 // pred_fallthru
      _
    %v30 = vld [vmem:[%s0] sm:$0xf]
    %v31 = vld [vmem:[#allocation2] sm:$0xff]
    %v32 = vld [vmem:[#allocation2 + $0x8] sm:$0xff]
    %v33 = vld [vmem:[#allocation2 + $0x10] sm:$0xff]
    %v34 = vld [vmem:[#allocation2 + $0x18] sm:$0xff]
    %v35 = vld [vmem:[#allocation2 + $0x20] sm:$0xff]
    %v36 = vld [vmem:[#allocation2 + $0x28] sm:$0xff]
    %v37 = vld [vmem:[#allocation2 + $0x30] sm:$0xff]
    %v38 = vld [vmem:[#allocation2 + $0x38] sm:$0xff]
    %v39 = vld [vmem:[#allocation2 + $0x40] sm:$0xff]
    %v40 = vld [vmem:[#allocation2 + $0x48] sm:$0xff]
    %v41 = vld [vmem:[#allocation2 + $0x50] sm:$0xff]
    %v42 = vld [vmem:[#allocation2 + $0x58] sm:$0xff]
    %v43 = vld [vmem:[#allocation2 + $0x60] sm:$0xff]
    %v44 = vld [vmem:[#allocation2 + $0x68] sm:$0xff]
    %v45 = vld [vmem:[#allocation2 + $0x70] sm:$0xff]
    %v46 = vld [vmem:[#allocation2 + $0x78] sm:$0xff]
    %v47 = vld [vmem:[#allocation2 + $0x80] sm:$0xff]
    %v48 = vld [vmem:[#allocation2 + $0x88] sm:$0xff]
    %v49 = vld [vmem:[#allocation2 + $0x90] sm:$0xff]
    %v50 = vld [vmem:[#allocation2 + $0x98] sm:$0xff]
    %v51 = vld [vmem:[#allocation2 + $0xa0] sm:$0xff]
    %v52 = vld [vmem:[#allocation2 + $0xa8] sm:$0xff]
    %v53 = vld [vmem:[#allocation2 + $0xb0] sm:$0xff]
    %v54 = vld [vmem:[#allocation2 + $0xb8] sm:$0xff]
    %v55 = vld [vmem:[#allocation2 + $0xc0] sm:$0xff]
    %v56 = vld [vmem:[#allocation2 + $0xc8] sm:$0xff]
    %v57 = vld [vmem:[#allocation2 + $0xd0] sm:$0xff]
    %v58 = vld [vmem:[#allocation2 + $0xd8] sm:$0xff]
    %v59 = vld [vmem:[#allocation2 + $0xe0] sm:$0xff]
    %v60 = vld [vmem:[#allocation2 + $0xe8] sm:$0xff]
    %v61 = vld [vmem:[#allocation2 + $0xf0] sm:$0xff]
    %v62 = vld [vmem:[#allocation2 + $0xf8] sm:$0xff]
    %v63 = vld [vmem:[%s2] sm:$0xf]
    %v65 = vperm.slane %v63, 0
    %v66 = vperm.slane %v63, 1
    %v67 = vperm.slane %v63, 2
    %v68 = vperm.slane %v63, 3
    %v105 = vunpack.c.l.b16 %v31
    %v106 = vunpack.c.h.b16 %v31
    %v107 = vunpack.c.l.b16 %v32
    %v108 = vunpack.c.h.b16 %v32
    %v109 = vunpack.c.l.b16 %v33
    %v110 = vunpack.c.h.b16 %v33
    %v111 = vunpack.c.l.b16 %v34
    %v112 = vunpack.c.h.b16 %v34
    %v113 = vunpack.c.l.b16 %v35
    %v114 = vunpack.c.h.b16 %v35
    %v115 = vunpack.c.l.b16 %v36
    %v116 = vunpack.c.h.b16 %v36
    %v117 = vunpack.c.l.b16 %v37
    %v118 = vunpack.c.h.b16 %v37
    %v119 = vunpack.c.l.b16 %v38
    %v120 = vunpack.c.h.b16 %v38
    %v121 = vunpack.c.l.b16 %v39
    %v122 = vunpack.c.h.b16 %v39
    %v123 = vunpack.c.l.b16 %v40
    %v124 = vunpack.c.h.b16 %v40
    %v125 = vunpack.c.l.b16 %v41
    %v126 = vunpack.c.h.b16 %v41
    %v127 = vunpack.c.l.b16 %v42
    %v128 = vunpack.c.h.b16 %v42
    %v129 = vunpack.c.l.b16 %v43
    %v130 = vunpack.c.h.b16 %v43
    %v131 = vunpack.c.l.b16 %v44
    %v132 = vunpack.c.h.b16 %v44
    %v133 = vunpack.c.l.b16 %v45
    %v134 = vunpack.c.h.b16 %v45
    %v135 = vunpack.c.l.b16 %v46
    %v136 = vunpack.c.h.b16 %v46
    %v137 = vunpack.c.l.b16 %v47
    %v138 = vunpack.c.h.b16 %v47
    %v139 = vunpack.c.l.b16 %v48
    %v140 = vunpack.c.h.b16 %v48
    %v141 = vunpack.c.l.b16 %v49
    %v142 = vunpack.c.h.b16 %v49
    %v143 = vunpack.c.l.b16 %v50
    %v144 = vunpack.c.h.b16 %v50
    %v145 = vunpack.c.l.b16 %v51
    %v146 = vunpack.c.h.b16 %v51
    %v147 = vunpack.c.l.b16 %v52
    %v148 = vunpack.c.h.b16 %v52
    %v149 = vunpack.c.l.b16 %v53
    %v150 = vunpack.c.h.b16 %v53
    %v151 = vunpack.c.l.b16 %v54
    %v152 = vunpack.c.h.b16 %v54
    %v153 = vunpack.c.l.b16 %v55
    %v154 = vunpack.c.h.b16 %v55
    %v155 = vunpack.c.l.b16 %v56
    %v156 = vunpack.c.h.b16 %v56
    %v157 = vunpack.c.l.b16 %v57
    %v158 = vunpack.c.h.b16 %v57
    %v159 = vunpack.c.l.b16 %v58
    %v160 = vunpack.c.h.b16 %v58
    %v161 = vunpack.c.l.b16 %v59
    %v162 = vunpack.c.h.b16 %v59
    %v163 = vunpack.c.l.b16 %v60
    %v164 = vunpack.c.h.b16 %v60
    %v165 = vunpack.c.l.b16 %v61
    %v166 = vunpack.c.h.b16 %v61
    %v167 = vunpack.c.l.b16 %v62
    %v168 = vunpack.c.h.b16 %v62
    %v169 = vpack.c.b16 %v109, %v105
    %v170 = vpack.c.b16 %v110, %v106
    %v171 = vpack.c.b16 %v111, %v107
    %v172 = vpack.c.b16 %v112, %v108
    %v173 = vpack.c.b16 %v117, %v113
    %v174 = vpack.c.b16 %v118, %v114
    %v175 = vpack.c.b16 %v119, %v115
    %v176 = vpack.c.b16 %v120, %v116
    %v177 = vpack.c.b16 %v125, %v121
    %v178 = vpack.c.b16 %v126, %v122
    %v179 = vpack.c.b16 %v127, %v123
    %v180 = vpack.c.b16 %v128, %v124
    %v181 = vpack.c.b16 %v133, %v129
    %v182 = vpack.c.b16 %v134, %v130
    %v183 = vpack.c.b16 %v135, %v131
    %v184 = vpack.c.b16 %v136, %v132
    %v185 = vpack.c.b16 %v141, %v137
    %v186 = vpack.c.b16 %v142, %v138
    %v187 = vpack.c.b16 %v143, %v139
    %v188 = vpack.c.b16 %v144, %v140
    %v189 = vpack.c.b16 %v149, %v145
    %v190 = vpack.c.b16 %v150, %v146
    %v191 = vpack.c.b16 %v151, %v147
    %v192 = vpack.c.b16 %v152, %v148
    %v193 = vpack.c.b16 %v157, %v153
    %v194 = vpack.c.b16 %v158, %v154
    %v195 = vpack.c.b16 %v159, %v155
    %v196 = vpack.c.b16 %v160, %v156
    %v197 = vpack.c.b16 %v165, %v161
    %v198 = vpack.c.b16 %v166, %v162
    %v199 = vpack.c.b16 %v167, %v163
    %v200 = vpack.c.b16 %v168, %v164
    %233 = vmatpush.bf16.msra.mxu0 %v197
    %234 = vmatpush.bf16.msra.mxu0 %v193
    %235 = vmatpush.bf16.msra.mxu0 %v189
    %236 = vmatpush.bf16.msra.mxu0 %v185
    %237 = vmatpush.bf16.msra.mxu0 %v181
    %238 = vmatpush.bf16.msra.mxu0 %v177
    %239 = vmatpush.bf16.msra.mxu0 %v173
    %240 = vmatpush.bf16.msra.mxu0 %v169
    %241 = vmatmul.bf16.gmra.mxu0 %v30
    %v242 = vpop.f32.mrf.mxu0
    %v243 = vadd.f32 %v65, %v242
    %v244 = vpop.f32.mrf.mxu0
    %245 = vdwg.mxu0
    %246 = vmatpush.bf16.msra.mxu0 %v198
    %247 = vmatpush.bf16.msra.mxu0 %v194
    %248 = vmatpush.bf16.msra.mxu0 %v190
    %249 = vmatpush.bf16.msra.mxu0 %v186
    %250 = vmatpush.bf16.msra.mxu0 %v182
    %251 = vmatpush.bf16.msra.mxu0 %v178
    %252 = vmatpush.bf16.msra.mxu0 %v174
    %253 = vmatpush.bf16.msra.mxu0 %v170
    %254 = vmatmul.bf16.gmra.mxu0 %v30
    %v255 = vpop.f32.mrf.mxu0
    %v256 = vadd.f32 %v66, %v255
    %v257 = vpop.f32.mrf.mxu0
    %258 = vdwg.mxu0
    %259 = vmatpush.bf16.msra.mxu0 %v199
    %260 = vmatpush.bf16.msra.mxu0 %v195
    %261 = vmatpush.bf16.msra.mxu0 %v191
    %262 = vmatpush.bf16.msra.mxu0 %v187
    %263 = vmatpush.bf16.msra.mxu0 %v183
    %264 = vmatpush.bf16.msra.mxu0 %v179
    %265 = vmatpush.bf16.msra.mxu0 %v175
    %266 = vmatpush.bf16.msra.mxu0 %v171
    %267 = vmatmul.bf16.gmra.mxu0 %v30
    %v268 = vpop.f32.mrf.mxu0
    %v269 = vadd.f32 %v67, %v268
    %v270 = vpop.f32.mrf.mxu0
    %271 = vdwg.mxu0
    %272 = vmatpush.bf16.msra.mxu0 %v200
    %273 = vmatpush.bf16.msra.mxu0 %v196
    %274 = vmatpush.bf16.msra.mxu0 %v192
    %275 = vmatpush.bf16.msra.mxu0 %v188
    %276 = vmatpush.bf16.msra.mxu0 %v184
    %277 = vmatpush.bf16.msra.mxu0 %v180
    %278 = vmatpush.bf16.msra.mxu0 %v176
    %279 = vmatpush.bf16.msra.mxu0 %v172
    %280 = vmatmul.bf16.gmra.mxu0 %v30
    %v281 = vpop.f32.mrf.mxu0
    %v282 = vadd.f32 %v68, %v281
    %v283 = vpop.f32.mrf.mxu0
    %284 = vdwg.mxu0
    %v285 = vmax.f32 %v243, 0.0
    %v286 = vmax.f32 %v256, 0.0
    %v287 = vmax.f32 %v269, 0.0
    %v288 = vmax.f32 %v282, 0.0
    %v289 = vpack.c.bf16 %v286, %v285
    %v290 = vpack.c.bf16 %v288, %v287
    %291 = vst [vmem:[%s3] sm:$0xff] %v289
    %292 = vst [vmem:[%s3 + $0x8] sm:$0xff] %v290
    // Predicated region
    $region18: #{_lambda_.38} parent=1 // pred_check
      _
    $region19: #{_lambda_.38} parent=1 // pred_check_branch
      %294 = sbr.rel (0) target = $region21
    $region20: #{_lambda_.38} parent=1 // pred_region
      _
    $region21: #{_lambda_.38} parent=1 // pred_fallthru
      _
    // Predicated region
    $region22: #{_lambda_.38} parent=1 // pred_check
      _
    $region23: #{_lambda_.38} parent=1 // pred_check_branch
      %296 = sbr.rel (0) target = $region25
    $region24: #{_lambda_.38} parent=1 // pred_region
      _
    $region25: #{_lambda_.38} parent=1 // pred_fallthru
      _
    %297 = vsyncpa [#allocation3], 1

// kernel: _lambda_.39
$region0: #{_lambda_.39}
  #allocation0 [shape = 'u32[]', space=smem, size = 0x4, offset = 0x4, fixed_abs, tag = 'smem constant byte address 0x4 - core index']
  #allocation1 [shape = 'u32[72,128]{1,0:T(1,128)}', space=vmem, size = 0x9000, scoped, tag = 'internal scratch']
  %s0 = inlined_call_operand.vmem [shape: bf16[8,512], index: 0, kind: input, shape index: {}]
  %s1 = inlined_call_operand.vmem [shape: bf16[512,128], index: 1, kind: input, shape index: {}]
  %s2 = inlined_call_operand.vmem [shape: f32[1,128], index: 2, kind: input, shape index: {}]
  %s3 = inlined_call_operand.vmem [shape: f32[8,128], index: 3, kind: output, shape index: {}]
  %s4 = sld [smem:[#allocation0]]
  $region22: #{_lambda_.39} parent=0
    _
  %s6 = ssub.s32 1, %s4
  %s7 = scalar_select 0, %s6, %s4
  // Predicated region
  $region2: #{_lambda_.39} parent=0 // pred_check
    _
  $region3: #{_lambda_.39} parent=0 // pred_check_branch
    %9 = sbr.rel (0) target = $region5
  $region4: #{_lambda_.39} parent=0 // pred_region
    _
  $region5: #{_lambda_.39} parent=0 // pred_fallthru
    _
  // Predicated region
  $region6: #{_lambda_.39} parent=0 // pred_check
    _
  $region7: #{_lambda_.39} parent=0 // pred_check_branch
    %11 = sbr.rel (0) target = $region9
  $region8: #{_lambda_.39} parent=0 // pred_region
    _
  $region9: #{_lambda_.39} parent=0 // pred_fallthru
    _
  // Predicated region
  $region10: #{_lambda_.39} parent=0 // pred_check
    _
  $region11: #{_lambda_.39} parent=0 // pred_check_branch
    %13 = sbr.rel (0) target = $region13
  $region12: #{_lambda_.39} parent=0 // pred_region
    _
  $region13: #{_lambda_.39} parent=0 // pred_fallthru
    _
  %v14 = vld [vmem:[%s0] sm:$0xff]
  %v15 = vld [vmem:[%s0 + $0x8] sm:$0xff]
  %v16 = vld [vmem:[%s1] sm:$0xf]
  %v17 = vld [vmem:[%s1 + $0x4] sm:$0xf]
  %v18 = vld [vmem:[%s1 + $0x8] sm:$0xf]
  %v19 = vld [vmem:[%s1 + $0xc] sm:$0xf]
  %v20 = vld [vmem:[%s1 + $0x10] sm:$0xf]
  %v21 = vld [vmem:[%s1 + $0x14] sm:$0xf]
  %v22 = vld [vmem:[%s1 + $0x18] sm:$0xf]
  %v23 = vld [vmem:[%s1 + $0x1c] sm:$0xf]
  %v24 = vld [vmem:[%s1 + $0x20] sm:$0xf]
  %v25 = vld [vmem:[%s1 + $0x24] sm:$0xf]
  %v26 = vld [vmem:[%s1 + $0x28] sm:$0xf]
  %v27 = vld [vmem:[%s1 + $0x2c] sm:$0xf]
  %v28 = vld [vmem:[%s1 + $0x30] sm:$0xf]
  %v29 = vld [vmem:[%s1 + $0x34] sm:$0xf]
  %v30 = vld [vmem:[%s1 + $0x38] sm:$0xf]
  %v31 = vld [vmem:[%s1 + $0x3c] sm:$0xf]
  %v32 = vld [vmem:[%s1 + $0x40] sm:$0xf]
  %v33 = vld [vmem:[%s1 + $0x44] sm:$0xf]
  %v34 = vld [vmem:[%s1 + $0x48] sm:$0xf]
  %v35 = vld [vmem:[%s1 + $0x4c] sm:$0xf]
  %v36 = vld [vmem:[%s1 + $0x50] sm:$0xf]
  %v37 = vld [vmem:[%s1 + $0x54] sm:$0xf]
  %v38 = vld [vmem:[%s1 + $0x58] sm:$0xf]
  %v39 = vld [vmem:[%s1 + $0x5c] sm:$0xf]
  %v40 = vld [vmem:[%s1 + $0x60] sm:$0xf]
  %v41 = vld [vmem:[%s1 + $0x64] sm:$0xf]
  %v42 = vld [vmem:[%s1 + $0x68] sm:$0xf]
  %v43 = vld [vmem:[%s1 + $0x6c] sm:$0xf]
  %v44 = vld [vmem:[%s1 + $0x70] sm:$0xf]
  %v45 = vld [vmem:[%s1 + $0x74] sm:$0xf]
  %v46 = vld [vmem:[%s1 + $0x78] sm:$0xf]
  %v47 = vld [vmem:[%s1 + $0x7c] sm:$0xf]
  %v48 = vld [vmem:[%s1 + $0x80] sm:$0xf]
  %v49 = vld [vmem:[%s1 + $0x84] sm:$0xf]
  %v50 = vld [vmem:[%s1 + $0x88] sm:$0xf]
  %v51 = vld [vmem:[%s1 + $0x8c] sm:$0xf]
  %v52 = vld [vmem:[%s1 + $0x90] sm:$0xf]
  %v53 = vld [vmem:[%s1 + $0x94] sm:$0xf]
  %v54 = vld [vmem:[%s1 + $0x98] sm:$0xf]
  %v55 = vld [vmem:[%s1 + $0x9c] sm:$0xf]
  %v56 = vld [vmem:[%s1 + $0xa0] sm:$0xf]
  %v57 = vld [vmem:[%s1 + $0xa4] sm:$0xf]
  %v58 = vld [vmem:[%s1 + $0xa8] sm:$0xf]
  %v59 = vld [vmem:[%s1 + $0xac] sm:$0xf]
  %v60 = vld [vmem:[%s1 + $0xb0] sm:$0xf]
  %v61 = vld [vmem:[%s1 + $0xb4] sm:$0xf]
  %v62 = vld [vmem:[%s1 + $0xb8] sm:$0xf]
  %v63 = vld [vmem:[%s1 + $0xbc] sm:$0xf]
  %v64 = vld [vmem:[%s1 + $0xc0] sm:$0xf]
  %v65 = vld [vmem:[%s1 + $0xc4] sm:$0xf]
  %v66 = vld [vmem:[%s1 + $0xc8] sm:$0xf]
  %v67 = vld [vmem:[%s1 + $0xcc] sm:$0xf]
  %v68 = vld [vmem:[%s1 + $0xd0] sm:$0xf]
  %v69 = vld [vmem:[%s1 + $0xd4] sm:$0xf]
  %v70 = vld [vmem:[%s1 + $0xd8] sm:$0xf]
  %v71 = vld [vmem:[%s1 + $0xdc] sm:$0xf]
  %v72 = vld [vmem:[%s1 + $0xe0] sm:$0xf]
  %v73 = vld [vmem:[%s1 + $0xe4] sm:$0xf]
  %v74 = vld [vmem:[%s1 + $0xe8] sm:$0xf]
  %v75 = vld [vmem:[%s1 + $0xec] sm:$0xf]
  %v76 = vld [vmem:[%s1 + $0xf0] sm:$0xf]
  %v77 = vld [vmem:[%s1 + $0xf4] sm:$0xf]
  %v78 = vld [vmem:[%s1 + $0xf8] sm:$0xf]
  %v79 = vld [vmem:[%s1 + $0xfc] sm:$0xf]
  %v80 = vld [vmem:[%s2] sm:$0x1]
  %v82 = vperm.slane %v80, 0
  %v86 = vunpack.c.l.b16 %v14
  %v87 = vunpack.c.h.b16 %v14
  %v88 = vunpack.c.l.b16 %v15
  %v89 = vunpack.c.h.b16 %v15
  %v90 = vpack.c.b16 %v86, %v86
  %v91 = vpack.c.b16 %v87, %v87
  %v92 = vpack.c.b16 %v88, %v88
  %v93 = vpack.c.b16 %v89, %v89
  %v162 = vunpack.c.l.b16 %v16
  %v163 = vunpack.c.l.b16 %v17
  %v164 = vunpack.c.l.b16 %v18
  %v165 = vunpack.c.l.b16 %v19
  %v166 = vunpack.c.l.b16 %v20
  %v167 = vunpack.c.l.b16 %v21
  %v168 = vunpack.c.l.b16 %v22
  %v169 = vunpack.c.l.b16 %v23
  %v170 = vunpack.c.l.b16 %v24
  %v171 = vunpack.c.l.b16 %v25
  %v172 = vunpack.c.l.b16 %v26
  %v173 = vunpack.c.l.b16 %v27
  %v174 = vunpack.c.l.b16 %v28
  %v175 = vunpack.c.l.b16 %v29
  %v176 = vunpack.c.l.b16 %v30
  %v177 = vunpack.c.l.b16 %v31
  %v178 = vunpack.c.l.b16 %v32
  %v179 = vunpack.c.l.b16 %v33
  %v180 = vunpack.c.l.b16 %v34
  %v181 = vunpack.c.l.b16 %v35
  %v182 = vunpack.c.l.b16 %v36
  %v183 = vunpack.c.l.b16 %v37
  %v184 = vunpack.c.l.b16 %v38
  %v185 = vunpack.c.l.b16 %v39
  %v186 = vunpack.c.l.b16 %v40
  %v187 = vunpack.c.l.b16 %v41
  %v188 = vunpack.c.l.b16 %v42
  %v189 = vunpack.c.l.b16 %v43
  %v190 = vunpack.c.l.b16 %v44
  %v191 = vunpack.c.l.b16 %v45
  %v192 = vunpack.c.l.b16 %v46
  %v193 = vunpack.c.l.b16 %v47
  %v194 = vunpack.c.l.b16 %v48
  %v195 = vunpack.c.l.b16 %v49
  %v196 = vunpack.c.l.b16 %v50
  %v197 = vunpack.c.l.b16 %v51
  %v198 = vunpack.c.l.b16 %v52
  %v199 = vunpack.c.l.b16 %v53
  %v200 = vunpack.c.l.b16 %v54
  %v201 = vunpack.c.l.b16 %v55
  %v202 = vunpack.c.l.b16 %v56
  %v203 = vunpack.c.l.b16 %v57
  %v204 = vunpack.c.l.b16 %v58
  %v205 = vunpack.c.l.b16 %v59
  %v206 = vunpack.c.l.b16 %v60
  %v207 = vunpack.c.l.b16 %v61
  %v208 = vunpack.c.l.b16 %v62
  %v209 = vunpack.c.l.b16 %v63
  %v210 = vunpack.c.l.b16 %v64
  %v211 = vunpack.c.l.b16 %v65
  %v212 = vunpack.c.l.b16 %v66
  %v213 = vunpack.c.l.b16 %v67
  %v214 = vunpack.c.l.b16 %v68
  %v215 = vunpack.c.l.b16 %v69
  %v216 = vunpack.c.l.b16 %v70
  %v217 = vunpack.c.l.b16 %v71
  %v218 = vunpack.c.l.b16 %v72
  %v219 = vunpack.c.l.b16 %v73
  %v220 = vunpack.c.l.b16 %v74
  %v221 = vunpack.c.l.b16 %v75
  %v222 = vunpack.c.l.b16 %v76
  %v223 = vunpack.c.l.b16 %v77
  %v224 = vunpack.c.l.b16 %v78
  %v225 = vunpack.c.l.b16 %v79
  %v226 = vpack.c.b16 %v163, %v162
  %v227 = vpack.c.b16 %v165, %v164
  %v228 = vpack.c.b16 %v167, %v166
  %v229 = vpack.c.b16 %v169, %v168
  %v230 = vpack.c.b16 %v171, %v170
  %v231 = vpack.c.b16 %v173, %v172
  %v232 = vpack.c.b16 %v175, %v174
  %v233 = vpack.c.b16 %v177, %v176
  %v234 = vpack.c.b16 %v179, %v178
  %v235 = vpack.c.b16 %v181, %v180
  %v236 = vpack.c.b16 %v183, %v182
  %v237 = vpack.c.b16 %v185, %v184
  %v238 = vpack.c.b16 %v187, %v186
  %v239 = vpack.c.b16 %v189, %v188
  %v240 = vpack.c.b16 %v191, %v190
  %v241 = vpack.c.b16 %v193, %v192
  %v242 = vpack.c.b16 %v195, %v194
  %v243 = vpack.c.b16 %v197, %v196
  %v244 = vpack.c.b16 %v199, %v198
  %v245 = vpack.c.b16 %v201, %v200
  %v246 = vpack.c.b16 %v203, %v202
  %v247 = vpack.c.b16 %v205, %v204
  %v248 = vpack.c.b16 %v207, %v206
  %v249 = vpack.c.b16 %v209, %v208
  %v250 = vpack.c.b16 %v211, %v210
  %v251 = vpack.c.b16 %v213, %v212
  %v252 = vpack.c.b16 %v215, %v214
  %v253 = vpack.c.b16 %v217, %v216
  %v254 = vpack.c.b16 %v219, %v218
  %v255 = vpack.c.b16 %v221, %v220
  %v256 = vpack.c.b16 %v223, %v222
  %v257 = vpack.c.b16 %v225, %v224
  %290 = vmatpush.bf16.msra.mxu0 %v233
  %291 = vmatpush.bf16.msra.mxu0 %v232
  %292 = vmatpush.bf16.msra.mxu0 %v231
  %293 = vmatpush.bf16.msra.mxu0 %v230
  %294 = vmatpush.bf16.msra.mxu0 %v229
  %295 = vmatpush.bf16.msra.mxu0 %v228
  %296 = vmatpush.bf16.msra.mxu0 %v227
  %297 = vmatpush.bf16.msra.mxu0 %v226
  %298 = vmatmul.bf16.gmra.mxu0 %v90
  %v299 = vpop.f32.mrf.mxu0
  %v300 = vadd.f32 %v82, %v299
  %v301 = vpop.f32.mrf.mxu0
  %302 = vdwg.mxu0
  %303 = vmatpush.bf16.msra.mxu0 %v241
  %304 = vmatpush.bf16.msra.mxu0 %v240
  %305 = vmatpush.bf16.msra.mxu0 %v239
  %306 = vmatpush.bf16.msra.mxu0 %v238
  %307 = vmatpush.bf16.msra.mxu0 %v237
  %308 = vmatpush.bf16.msra.mxu0 %v236
  %309 = vmatpush.bf16.msra.mxu0 %v235
  %310 = vmatpush.bf16.msra.mxu0 %v234
  %311 = vmatmul.bf16.gmra.mxu0 %v91
  %v312 = vpop.f32.mrf.mxu0
  %v313 = vadd.f32 %v300, %v312
  %v314 = vpop.f32.mrf.mxu0
  %315 = vdwg.mxu0
  %316 = vmatpush.bf16.msra.mxu0 %v249
  %317 = vmatpush.bf16.msra.mxu0 %v248
  %318 = vmatpush.bf16.msra.mxu0 %v247
  %319 = vmatpush.bf16.msra.mxu0 %v246
  %320 = vmatpush.bf16.msra.mxu0 %v245
  %321 = vmatpush.bf16.msra.mxu0 %v244
  %322 = vmatpush.bf16.msra.mxu0 %v243
  %323 = vmatpush.bf16.msra.mxu0 %v242
  %324 = vmatmul.bf16.gmra.mxu0 %v92
  %v325 = vpop.f32.mrf.mxu0
  %v326 = vadd.f32 %v313, %v325
  %v327 = vpop.f32.mrf.mxu0
  %328 = vdwg.mxu0
  %329 = vmatpush.bf16.msra.mxu0 %v257
  %330 = vmatpush.bf16.msra.mxu0 %v256
  %331 = vmatpush.bf16.msra.mxu0 %v255
  %332 = vmatpush.bf16.msra.mxu0 %v254
  %333 = vmatpush.bf16.msra.mxu0 %v253
  %334 = vmatpush.bf16.msra.mxu0 %v252
  %335 = vmatpush.bf16.msra.mxu0 %v251
  %336 = vmatpush.bf16.msra.mxu0 %v250
  %337 = vmatmul.bf16.gmra.mxu0 %v93
  %v338 = vpop.f32.mrf.mxu0
  %v339 = vadd.f32 %v326, %v338
  %v340 = vpop.f32.mrf.mxu0
  %341 = vdwg.mxu0
  %342 = vst [vmem:[%s3] sm:$0xff] %v339
  // Predicated region
  $region14: #{_lambda_.39} parent=0 // pred_check
    _
  $region15: #{_lambda_.39} parent=0 // pred_check_branch
    %344 = sbr.rel (0) target = $region17
  $region16: #{_lambda_.39} parent=0 // pred_region
    _
  $region17: #{_lambda_.39} parent=0 // pred_fallthru
    _
  // Predicated region
  $region18: #{_lambda_.39} parent=0 // pred_check
    _
  $region19: #{_lambda_.39} parent=0 // pred_check_branch
    %346 = sbr.rel (0) target = $region21
  $region20: #{_lambda_.39} parent=0 // pred_region
    _
  $region21: #{_lambda_.39} parent=0 // pred_fallthru
    _

</llo_original>
